<compile_context>
chip_gen: v7x
topology: tpu7x:2x2x1
jax: 0.10.0
libtpu: 0.0.40
codegen_flags: <defaults>
</compile_context>

<pallas_src>
import jax
import jax.numpy as jnp
from jax import lax
from jax.experimental import pallas as pl
from jax.experimental.pallas import tpu as pltpu

LANE = 128


def _round_up(x, m):
    return (x + m - 1) // m * m


def prepare_conv_weight(w_oihw):
    """PyTorch Conv2d weight (Cout, Cin, kh, kw) -> folded, zero-padded (Kpad, Cout_pad) bf16.

    K order is (dy, dx, cin); K is zero-padded to a multiple of 128 lanes and Cout is padded
    up to a multiple of 128 (lane-dense MXU feed and output stores).  Hoisted out of the
    forward path: run once at weight-load time.  Returns (w_folded, kernel_size, out_channels).
    """
    cout, cin, kh, kw = w_oihw.shape
    assert kh == kw and kh % 2 == 1, "odd square kernel expected"
    K = kh * kw * cin
    Kpad = _round_up(K, LANE)
    cout_pad = _round_up(cout, LANE)
    w_k = jnp.transpose(w_oihw, (2, 3, 1, 0)).reshape(K, cout).astype(jnp.bfloat16)
    w_folded = jnp.zeros((Kpad, cout_pad), jnp.bfloat16).at[:K, :cout].set(w_k)
    return w_folded, kh, cout


def _make_conv_block_kernel(NB, H, W, Cin, kh, kw, pad, Kpad, cout_tile, negative_slope):
    Hp, Wp = H + 2 * pad, W + 2 * pad
    K = kh * kw * Cin
    M = NB * H * W

    def kernel(x_ref, w_ref, o_ref, xpad_ref, imcol_ref):
        # x_ref:     (NB, H, W, Cin)     input dtype, one batch tile
        # w_ref:     (Kpad, Ct)          bf16 folded weights for this cout tile
        # o_ref:     (NB, H, W, Ct)
        # xpad_ref:  (NB, Hp, Wp, Cin)   bf16 VMEM scratch, zero-padded input (halo in-kernel)
        # imcol_ref: (NB, H, W, Kpad)    bf16 VMEM scratch, full (dy,dx,cin) im2col
        j = pl.program_id(1)

        # Stage the zero-padded input and the full im2col once per batch tile; reused for
        # every cout tile.  Correctness requires the cout grid axis to remain the innermost,
        # sequential ("arbitrary") axis so j > 0 steps see the staged buffers.
        @pl.when(j == 0)
        def _stage():
            xpad_ref[...] = jnp.zeros_like(xpad_ref)
            xpad_ref[:, pad:pad + H, pad:pad + W, :] = x_ref[...].astype(jnp.bfloat16)
            if Kpad > K:
                # zero the K-padding lanes exactly once (weight rows there are zero too,
                # but uninitialized VMEM could hold NaNs -> must not feed them to the MXU)
                imcol_ref[...] = jnp.zeros_like(imcol_ref)
            for dy in range(kh):
                for dx in range(kw):
                    k0 = (dy * kw + dx) * Cin
                    imcol_ref[:, :, :, k0:k0 + Cin] = xpad_ref[:, dy:dy + H, dx:dx + W, :]

        # One MXU matmul per (batch tile, cout tile): (M, Kpad) x (Kpad, Ct), f32 accumulation.
        patch = imcol_ref[...].reshape(M, Kpad)
        y = jnp.dot(patch, w_ref[...], preferred_element_type=jnp.float32)
        y = jnp.maximum(y, negative_slope * y)                       # LeakyReLU(0.2)
        o_ref[...] = y.reshape(NB, H, W, cout_tile).astype(o_ref.dtype)

    return kernel


def conv_block_forward_nhwc(x_nhwc, w_folded, *, ksize, cout, cout_tile=None,
                            batch_tile=None, negative_slope=0.2, out_dtype=None):
    """conv_block.forward on NHWC activations (fast path, no layout transposes).

    x_nhwc:   (N, H, W, Cin)
    w_folded: (Kpad, Cout_pad) bf16 from prepare_conv_weight().
    """
    N, H, W, Cin = x_nhwc.shape
    kh = kw = ksize
    pad = (kh - 1) // 2   # 'same' padding (padding=1 for kernel_size=3, as in the module)
    # TODO(synk): non-'same' padding, even kernels, stride != 1 and bias=True not implemented.
    K = kh * kw * Cin
    Kpad, cout_pad = w_folded.shape
    assert Kpad == _round_up(K, LANE), "weight K dim does not match x channels / kernel size"
    assert cout_pad == _round_up(cout, LANE)

    if out_dtype is None:
        out_dtype = x_nhwc.dtype
    # TODO(synk): for a full ESRGAN stack, pass out_dtype=jnp.bfloat16 and keep the stack in
    # bf16 to halve activation HBM writeback (these layers are memory-bound on v5e/v6e).

    if cout_tile is None:
        # 256 fills the 256-wide v6e/v7x MXU; on v5e (128x128 MXU) pass cout_tile=128.
        cout_tile = 256 if cout_pad % 256 == 0 else (128 if cout_pad % 128 == 0 else cout_pad)
    assert cout_pad % cout_tile == 0
    assert cout_tile == cout_pad or cout_tile % LANE == 0, "cout tile must be lane-aligned"
    n_ct = cout_pad // cout_tile

    if batch_tile is None:
        # Fold batch into the matmul M dim until M >= 256 rows (fills the MXU M dimension and
        # amortizes per-grid-step overhead).  On v7x (2 TensorCores) prefer keeping the
        # parallel batch axis at extent >= 2 by passing batch_tile explicitly.
        batch_tile = 1
        while batch_tile < N and batch_tile * H * W < 256 and N % (batch_tile * 2) == 0:
            batch_tile *= 2
    assert N % batch_tile == 0
    n_bt = N // batch_tile

    Hp, Wp = H + 2 * pad, W + 2 * pad
    kernel = _make_conv_block_kernel(batch_tile, H, W, Cin, kh, kw, pad, Kpad,
                                     cout_tile, negative_slope)

    # VMEM budget: scratch + double-buffered blocks; set the scoped limit explicitly.
    x_bytes = batch_tile * H * W * Cin * x_nhwc.dtype.itemsize
    w_bytes = Kpad * cout_tile * 2
    o_bytes = batch_tile * H * W * cout_tile * jnp.dtype(out_dtype).itemsize
    scratch_bytes = batch_tile * Hp * Wp * Cin * 2 + batch_tile * H * W * Kpad * 2
    est = scratch_bytes + 2 * (x_bytes + w_bytes + o_bytes)
    assert est <= (48 << 20), "tile too large for v7x's 64 MiB VMEM"
    # TODO(synk): add H-row tiling (with halo rows) for large feature maps instead of whole images.
    vmem_limit = min(max(2 * est + (8 << 20), 32 << 20), 56 << 20)

    out = pl.pallas_call(
        kernel,
        out_shape=jax.ShapeDtypeStruct((N, H, W, cout_pad), out_dtype),
        grid=(n_bt, n_ct),
        in_specs=[
            pl.BlockSpec((batch_tile, H, W, Cin), lambda n, j: (n, 0, 0, 0)),
            pl.BlockSpec((Kpad, cout_tile), lambda n, j: (0, j)),
        ],
        out_specs=pl.BlockSpec((batch_tile, H, W, cout_tile), lambda n, j: (n, 0, 0, j)),
        scratch_shapes=[
            pltpu.VMEM((batch_tile, Hp, Wp, Cin), jnp.bfloat16),   # zero-padded input (bf16)
            pltpu.VMEM((batch_tile, H, W, Kpad), jnp.bfloat16),    # full im2col, staged once per batch tile
        ],
        compiler_params=pltpu.CompilerParams(
            # batch axis feeds megacore / both v7x TCs; cout axis must stay the innermost
            # sequential ("arbitrary") axis so the j==0 staging is valid for all j > 0.
            dimension_semantics=("parallel", "arbitrary"),
            vmem_limit_bytes=vmem_limit,
        ),
    )(x_nhwc, w_folded)

    if cout_pad != cout:
        out = out[..., :cout]
    return out


def conv_block_forward_nchw(x_nchw, w_folded, *, ksize, cout, cout_tile=None,
                            batch_tile=None, negative_slope=0.2, out_dtype=None):
    """Drop-in PyTorch-layout wrapper.  For a full stack keep activations NHWC and call
    conv_block_forward_nhwc directly -- these transposes are full HBM round trips."""
    x_nhwc = jnp.transpose(x_nchw, (0, 2, 3, 1))
    y = conv_block_forward_nhwc(x_nhwc, w_folded, ksize=ksize, cout=cout,
                                cout_tile=cout_tile, batch_tile=batch_tile,
                                negative_slope=negative_slope, out_dtype=out_dtype)
    return jnp.transpose(y, (0, 3, 1, 2))


# ---------------- pure-JAX reference (matching precision: bf16 in, f32 acc) -------------
def conv_block_ref_nhwc(x_nhwc, w_oihw, *, negative_slope=0.2):
    k = w_oihw.shape[2]
    pad = (k - 1) // 2
    w_hwio = jnp.transpose(w_oihw, (2, 3, 1, 0))
    y = lax.conv_general_dilated(
        x_nhwc.astype(jnp.bfloat16), w_hwio.astype(jnp.bfloat16),
        window_strides=(1, 1), padding=[(pad, pad), (pad, pad)],
        dimension_numbers=("NHWC", "HWIO", "NHWC"),
        preferred_element_type=jnp.float32)
    return jnp.maximum(y, negative_slope * y)


if __name__ == "__main__":
    key = jax.random.PRNGKey(0)
    k1, k2, k3, k4 = jax.random.split(key, 4)

    static_names = ("ksize", "cout", "cout_tile", "batch_tile", "negative_slope", "out_dtype")
    fwd = jax.jit(conv_block_forward_nhwc, static_argnames=static_names)
    fwd_nchw = jax.jit(conv_block_forward_nchw, static_argnames=static_names)

    # Config 1: conv_block(32 -> 256, kernel_size=3, padding=1), NHWC, batch 2 x 16x16.
    # cout_tile=256 (single weight block), K padded 288 -> 384, grid (2, 1).
    N, Cin, H, W, Cout = 2, 32, 16, 16, 256
    x = jax.random.normal(k1, (N, H, W, Cin), jnp.float32)
    w = jax.random.normal(k2, (Cout, Cin, 3, 3), jnp.float32) * 0.05
    wf, ks, co = prepare_conv_weight(w)                 # weight prep hoisted out of forward
    out = jax.block_until_ready(fwd(x, wf, ksize=ks, cout=co))
    ref = jax.block_until_ready(conv_block_ref_nhwc(x, w))
    assert out.shape == (N, H, W, Cout), out.shape
    err = float(jnp.max(jnp.abs(out - ref)))
    assert jnp.allclose(out, ref, atol=1e-2, rtol=1e-2), f"config1 mismatch vs reference: {err}"

    # Config 2: conv_block(64 -> 64, kernel_size=3, padding=1) on 2 x 8x8 images.
    # Batch folded into M (M=128), Cout padded to 128 lanes in-kernel, sliced outside; grid (1,1).
    N2, Cin2, H2, W2, Cout2 = 2, 64, 8, 8, 64
    x2 = jax.random.normal(k3, (N2, H2, W2, Cin2), jnp.float32)
    w2 = jax.random.normal(k4, (Cout2, Cin2, 3, 3), jnp.float32) * 0.05
    wf2, ks2, co2 = prepare_conv_weight(w2)
    out2 = jax.block_until_ready(fwd(x2, wf2, ksize=ks2, cout=co2))
    ref2 = jax.block_until_ready(conv_block_ref_nhwc(x2, w2))
    assert out2.shape == (N2, H2, W2, Cout2), out2.shape
    err2 = float(jnp.max(jnp.abs(out2 - ref2)))
    assert jnp.allclose(out2, ref2, atol=1e-2, rtol=1e-2), f"config2 mismatch vs reference: {err2}"

    # PyTorch NCHW drop-in wrapper (parity check only; NOT the fast path).
    x_nchw = jnp.transpose(x, (0, 3, 1, 2))
    out_nchw = jax.block_until_ready(fwd_nchw(x_nchw, wf, ksize=ks, cout=co))
    ref_nchw = jnp.transpose(ref, (0, 3, 1, 2))
    assert out_nchw.shape == (N, Cout, H, W)
    assert jnp.allclose(out_nchw, ref_nchw, atol=1e-2, rtol=1e-2), "nchw wrapper mismatch"

    print("KERNEL_OK")
</pallas_src>

<mosaic_0001>
module attributes {stable_mosaic.version = 11 : i64} {
  func.func @kernel(%arg0: i32, %arg1: i32, %arg2: memref<1x16x16x32xf32, #tpu.memory_space<vmem>>, %arg3: memref<384x256xbf16, #tpu.memory_space<vmem>>, %arg4: memref<1x16x16x256xf32, #tpu.memory_space<vmem>>, %arg5: memref<1x18x18x32xbf16, #tpu.memory_space<vmem>>, %arg6: memref<1x16x16x384xbf16, #tpu.memory_space<vmem>>) attributes {dimension_semantics = [#tpu.dimension_semantics<parallel>, #tpu.dimension_semantics<arbitrary>], iteration_bounds = array<i64: 2, 1>, scalar_prefetch = 0 : i64, scratch_operands = 2 : i64, tpu.core_type = #tpu.core_type<tc>, window_params = [{transform_indices = @transform_0, window_bounds = array<i64: 1, 16, 16, 32>}, {transform_indices = @transform_1, window_bounds = array<i64: 384, 256>}, {transform_indices = @transform_2, window_bounds = array<i64: 1, 16, 16, 256>}]} {
    %c0_i32 = arith.constant 0 : i32
    %0 = arith.cmpi eq, %arg1, %c0_i32 : i32
    %1 = arith.extui %0 : i1 to i32
    %c0_i32_0 = arith.constant 0 : i32
    %2 = arith.cmpi ne, %1, %c0_i32_0 : i32
    scf.if %2 {
      %cst_11 = arith.constant 0.000000e+00 : bf16
      %12 = vector.broadcast %cst_11 : bf16 to vector<1x18x18x32xbf16>
      %c0_12 = arith.constant 0 : index
      %c0_13 = arith.constant 0 : index
      %c0_14 = arith.constant 0 : index
      %c0_15 = arith.constant 0 : index
      %13 = vector.load %arg5[%c0_12, %c0_13, %c0_14, %c0_15] : memref<1x18x18x32xbf16, #tpu.memory_space<vmem>>, vector<1x18x18x32xbf16>
      tpu.vector_store %arg5[%c0_12, %c0_13, %c0_14, %c0_15], %12 {strides = array<i32>} : memref<1x18x18x32xbf16, #tpu.memory_space<vmem>>, vector<1x18x18x32xbf16>,
      %c0_16 = arith.constant 0 : index
      %c0_17 = arith.constant 0 : index
      %c0_18 = arith.constant 0 : index
      %c0_19 = arith.constant 0 : index
      %14 = vector.load %arg2[%c0_16, %c0_17, %c0_18, %c0_19] : memref<1x16x16x32xf32, #tpu.memory_space<vmem>>, vector<1x16x16x32xf32>
      %15 = arith.truncf %14 : vector<1x16x16x32xf32> to vector<1x16x16x32xbf16>
      %c0_20 = arith.constant 0 : index
      %c1 = arith.constant 1 : index
      %c1_21 = arith.constant 1 : index
      %c0_22 = arith.constant 0 : index
      %16 = vector.load %arg5[%c0_20, %c1, %c1_21, %c0_22] : memref<1x18x18x32xbf16, #tpu.memory_space<vmem>>, vector<1x16x16x32xbf16>
      tpu.vector_store %arg5[%c0_20, %c1, %c1_21, %c0_22], %15 {strides = array<i32>} : memref<1x18x18x32xbf16, #tpu.memory_space<vmem>>, vector<1x16x16x32xbf16>,
      %cst_23 = arith.constant 0.000000e+00 : bf16
      %17 = vector.broadcast %cst_23 : bf16 to vector<1x16x16x384xbf16>
      %c0_24 = arith.constant 0 : index
      %c0_25 = arith.constant 0 : index
      %c0_26 = arith.constant 0 : index
      %c0_27 = arith.constant 0 : index
      %18 = vector.load %arg6[%c0_24, %c0_25, %c0_26, %c0_27] : memref<1x16x16x384xbf16, #tpu.memory_space<vmem>>, vector<1x16x16x384xbf16>
      tpu.vector_store %arg6[%c0_24, %c0_25, %c0_26, %c0_27], %17 {strides = array<i32>} : memref<1x16x16x384xbf16, #tpu.memory_space<vmem>>, vector<1x16x16x384xbf16>,
      %c0_28 = arith.constant 0 : index
      %c0_29 = arith.constant 0 : index
      %c0_30 = arith.constant 0 : index
      %c0_31 = arith.constant 0 : index
      %19 = vector.load %arg5[%c0_28, %c0_29, %c0_30, %c0_31] : memref<1x18x18x32xbf16, #tpu.memory_space<vmem>>, vector<1x16x16x32xbf16>
      %c0_32 = arith.constant 0 : index
      %c0_33 = arith.constant 0 : index
      %c0_34 = arith.constant 0 : index
      %c0_35 = arith.constant 0 : index
      %20 = vector.load %arg6[%c0_32, %c0_33, %c0_34, %c0_35] : memref<1x16x16x384xbf16, #tpu.memory_space<vmem>>, vector<1x16x16x32xbf16>
      tpu.vector_store %arg6[%c0_32, %c0_33, %c0_34, %c0_35], %19 {strides = array<i32>} : memref<1x16x16x384xbf16, #tpu.memory_space<vmem>>, vector<1x16x16x32xbf16>,
      %c0_36 = arith.constant 0 : index
      %c0_37 = arith.constant 0 : index
      %c1_38 = arith.constant 1 : index
      %c0_39 = arith.constant 0 : index
      %21 = vector.load %arg5[%c0_36, %c0_37, %c1_38, %c0_39] : memref<1x18x18x32xbf16, #tpu.memory_space<vmem>>, vector<1x16x16x32xbf16>
      %c0_40 = arith.constant 0 : index
      %c0_41 = arith.constant 0 : index
      %c0_42 = arith.constant 0 : index
      %c32 = arith.constant 32 : index
      %22 = vector.load %arg6[%c0_40, %c0_41, %c0_42, %c32] : memref<1x16x16x384xbf16, #tpu.memory_space<vmem>>, vector<1x16x16x32xbf16>
      tpu.vector_store %arg6[%c0_40, %c0_41, %c0_42, %c32], %21 {strides = array<i32>} : memref<1x16x16x384xbf16, #tpu.memory_space<vmem>>, vector<1x16x16x32xbf16>,
      %c0_43 = arith.constant 0 : index
      %c0_44 = arith.constant 0 : index
      %c2 = arith.constant 2 : index
      %c0_45 = arith.constant 0 : index
      %23 = vector.load %arg5[%c0_43, %c0_44, %c2, %c0_45] : memref<1x18x18x32xbf16, #tpu.memory_space<vmem>>, vector<1x16x16x32xbf16>
      %c0_46 = arith.constant 0 : index
      %c0_47 = arith.constant 0 : index
      %c0_48 = arith.constant 0 : index
      %c64 = arith.constant 64 : index
      %24 = vector.load %arg6[%c0_46, %c0_47, %c0_48, %c64] : memref<1x16x16x384xbf16, #tpu.memory_space<vmem>>, vector<1x16x16x32xbf16>
      tpu.vector_store %arg6[%c0_46, %c0_47, %c0_48, %c64], %23 {strides = array<i32>} : memref<1x16x16x384xbf16, #tpu.memory_space<vmem>>, vector<1x16x16x32xbf16>,
      %c0_49 = arith.constant 0 : index
      %c1_50 = arith.constant 1 : index
      %c0_51 = arith.constant 0 : index
      %c0_52 = arith.constant 0 : index
      %25 = vector.load %arg5[%c0_49, %c1_50, %c0_51, %c0_52] : memref<1x18x18x32xbf16, #tpu.memory_space<vmem>>, vector<1x16x16x32xbf16>
      %c0_53 = arith.constant 0 : index
      %c0_54 = arith.constant 0 : index
      %c0_55 = arith.constant 0 : index
      %c96 = arith.constant 96 : index
      %26 = vector.load %arg6[%c0_53, %c0_54, %c0_55, %c96] : memref<1x16x16x384xbf16, #tpu.memory_space<vmem>>, vector<1x16x16x32xbf16>
      tpu.vector_store %arg6[%c0_53, %c0_54, %c0_55, %c96], %25 {strides = array<i32>} : memref<1x16x16x384xbf16, #tpu.memory_space<vmem>>, vector<1x16x16x32xbf16>,
      %c0_56 = arith.constant 0 : index
      %c1_57 = arith.constant 1 : index
      %c1_58 = arith.constant 1 : index
      %c0_59 = arith.constant 0 : index
      %27 = vector.load %arg5[%c0_56, %c1_57, %c1_58, %c0_59] : memref<1x18x18x32xbf16, #tpu.memory_space<vmem>>, vector<1x16x16x32xbf16>
      %c0_60 = arith.constant 0 : index
      %c0_61 = arith.constant 0 : index
      %c0_62 = arith.constant 0 : index
      %c128 = arith.constant 128 : index
      %28 = vector.load %arg6[%c0_60, %c0_61, %c0_62, %c128] : memref<1x16x16x384xbf16, #tpu.memory_space<vmem>>, vector<1x16x16x32xbf16>
      tpu.vector_store %arg6[%c0_60, %c0_61, %c0_62, %c128], %27 {strides = array<i32>} : memref<1x16x16x384xbf16, #tpu.memory_space<vmem>>, vector<1x16x16x32xbf16>,
      %c0_63 = arith.constant 0 : index
      %c1_64 = arith.constant 1 : index
      %c2_65 = arith.constant 2 : index
      %c0_66 = arith.constant 0 : index
      %29 = vector.load %arg5[%c0_63, %c1_64, %c2_65, %c0_66] : memref<1x18x18x32xbf16, #tpu.memory_space<vmem>>, vector<1x16x16x32xbf16>
      %c0_67 = arith.constant 0 : index
      %c0_68 = arith.constant 0 : index
      %c0_69 = arith.constant 0 : index
      %c160 = arith.constant 160 : index
      %30 = vector.load %arg6[%c0_67, %c0_68, %c0_69, %c160] : memref<1x16x16x384xbf16, #tpu.memory_space<vmem>>, vector<1x16x16x32xbf16>
      tpu.vector_store %arg6[%c0_67, %c0_68, %c0_69, %c160], %29 {strides = array<i32>} : memref<1x16x16x384xbf16, #tpu.memory_space<vmem>>, vector<1x16x16x32xbf16>,
      %c0_70 = arith.constant 0 : index
      %c2_71 = arith.constant 2 : index
      %c0_72 = arith.constant 0 : index
      %c0_73 = arith.constant 0 : index
      %31 = vector.load %arg5[%c0_70, %c2_71, %c0_72, %c0_73] : memref<1x18x18x32xbf16, #tpu.memory_space<vmem>>, vector<1x16x16x32xbf16>
      %c0_74 = arith.constant 0 : index
      %c0_75 = arith.constant 0 : index
      %c0_76 = arith.constant 0 : index
      %c192 = arith.constant 192 : index
      %32 = vector.load %arg6[%c0_74, %c0_75, %c0_76, %c192] : memref<1x16x16x384xbf16, #tpu.memory_space<vmem>>, vector<1x16x16x32xbf16>
      tpu.vector_store %arg6[%c0_74, %c0_75, %c0_76, %c192], %31 {strides = array<i32>} : memref<1x16x16x384xbf16, #tpu.memory_space<vmem>>, vector<1x16x16x32xbf16>,
      %c0_77 = arith.constant 0 : index
      %c2_78 = arith.constant 2 : index
      %c1_79 = arith.constant 1 : index
      %c0_80 = arith.constant 0 : index
      %33 = vector.load %arg5[%c0_77, %c2_78, %c1_79, %c0_80] : memref<1x18x18x32xbf16, #tpu.memory_space<vmem>>, vector<1x16x16x32xbf16>
      %c0_81 = arith.constant 0 : index
      %c0_82 = arith.constant 0 : index
      %c0_83 = arith.constant 0 : index
      %c224 = arith.constant 224 : index
      %34 = vector.load %arg6[%c0_81, %c0_82, %c0_83, %c224] : memref<1x16x16x384xbf16, #tpu.memory_space<vmem>>, vector<1x16x16x32xbf16>
      tpu.vector_store %arg6[%c0_81, %c0_82, %c0_83, %c224], %33 {strides = array<i32>} : memref<1x16x16x384xbf16, #tpu.memory_space<vmem>>, vector<1x16x16x32xbf16>,
      %c0_84 = arith.constant 0 : index
      %c2_85 = arith.constant 2 : index
      %c2_86 = arith.constant 2 : index
      %c0_87 = arith.constant 0 : index
      %35 = vector.load %arg5[%c0_84, %c2_85, %c2_86, %c0_87] : memref<1x18x18x32xbf16, #tpu.memory_space<vmem>>, vector<1x16x16x32xbf16>
      %c0_88 = arith.constant 0 : index
      %c0_89 = arith.constant 0 : index
      %c0_90 = arith.constant 0 : index
      %c256 = arith.constant 256 : index
      %36 = vector.load %arg6[%c0_88, %c0_89, %c0_90, %c256] : memref<1x16x16x384xbf16, #tpu.memory_space<vmem>>, vector<1x16x16x32xbf16>
      tpu.vector_store %arg6[%c0_88, %c0_89, %c0_90, %c256], %35 {strides = array<i32>} : memref<1x16x16x384xbf16, #tpu.memory_space<vmem>>, vector<1x16x16x32xbf16>,
    } else {
    }
    %c0 = arith.constant 0 : index
    %c0_1 = arith.constant 0 : index
    %c0_2 = arith.constant 0 : index
    %c0_3 = arith.constant 0 : index
    %3 = vector.load %arg6[%c0, %c0_1, %c0_2, %c0_3] : memref<1x16x16x384xbf16, #tpu.memory_space<vmem>>, vector<1x16x16x384xbf16>
    %4 = vector.shape_cast %3 : vector<1x16x16x384xbf16> to vector<256x384xbf16>
    %c0_4 = arith.constant 0 : index
    %c0_5 = arith.constant 0 : index
    %5 = vector.load %arg3[%c0_4, %c0_5] : memref<384x256xbf16, #tpu.memory_space<vmem>>, vector<384x256xbf16>
    %cst = arith.constant dense<0.000000e+00> : vector<256x256xf32>
    %6 = tpu.matmul %4, %5, %cst {dimension_numbers = #tpu.dot_dimension_numbers<[1], [0], [0], [1], [0, 0, 1, 1], [], []>} : vector<256x384xbf16>, vector<384x256xbf16>, vector<256x256xf32> -> vector<256x256xf32>
    %cst_6 = arith.constant 2.000000e-01 : f32
    %7 = vector.broadcast %cst_6 : f32 to vector<256x256xf32>
    %8 = arith.mulf %7, %6 : vector<256x256xf32>
    %9 = arith.maximumf %6, %8 : vector<256x256xf32>
    %10 = vector.shape_cast %9 : vector<256x256xf32> to vector<1x16x16x256xf32>
    %c0_7 = arith.constant 0 : index
    %c0_8 = arith.constant 0 : index
    %c0_9 = arith.constant 0 : index
    %c0_10 = arith.constant 0 : index
    %11 = vector.load %arg4[%c0_7, %c0_8, %c0_9, %c0_10] : memref<1x16x16x256xf32, #tpu.memory_space<vmem>>, vector<1x16x16x256xf32>
    tpu.vector_store %arg4[%c0_7, %c0_8, %c0_9, %c0_10], %10 {strides = array<i32>} : memref<1x16x16x256xf32, #tpu.memory_space<vmem>>, vector<1x16x16x256xf32>,
    return
  }
  func.func @transform_0(%arg0: i32, %arg1: i32) -> (i32, i32, i32, i32) {
    %c0_i32 = arith.constant 0 : i32
    %c0_i32_0 = arith.constant 0 : i32
    %c0_i32_1 = arith.constant 0 : i32
    %c0_i32_2 = arith.constant 0 : i32
    return %arg0, %c0_i32, %c0_i32_0, %c0_i32_1 : i32, i32, i32, i32
  }
  func.func @transform_1(%arg0: i32, %arg1: i32) -> (i32, i32) {
    %c0_i32 = arith.constant 0 : i32
    %c0_i32_0 = arith.constant 0 : i32
    return %c0_i32, %arg1 : i32, i32
  }
  func.func @transform_2(%arg0: i32, %arg1: i32) -> (i32, i32, i32, i32) {
    %c0_i32 = arith.constant 0 : i32
    %c0_i32_0 = arith.constant 0 : i32
    %c0_i32_1 = arith.constant 0 : i32
    return %arg0, %c0_i32, %c0_i32_0, %arg1 : i32, i32, i32, i32
  }
}

</mosaic_0001>

<llo_original>
// kernel: conv_block_forward_nhwc.1
$region0: #{conv_block_forward_nhwc.1}
  #allocation0 [shape = 'u32[]', space=smem, size = 0x4, offset = 0x4, fixed_abs, tag = 'smem constant byte address 0x4 - core index']
  #allocation1 [shape = 'u32[144,128]{1,0:T(1,128)}', space=vmem, size = 0x12000, scoped, tag = 'internal scratch']
  #allocation2 [shape = 'bf16[1,18,18,32]{3,2,1,0:T(8,128)(2,1)}', space=vmem, size = 0x1b000, scoped, tag = 'scratch operand']
  #allocation3 [shape = 'bf16[1,16,16,384]{3,2,1,0:T(16,128)(2,1)}', space=vmem, size = 0x30000, scoped, tag = 'scratch operand']
  %s0 = inlined_call_operand.hbm [shape: f32[2,16,16,32], index: 0, kind: input, shape index: {}]
  %s1 = inlined_call_operand.hbm [shape: bf16[384,256], index: 1, kind: input, shape index: {}]
  %s2 = inlined_call_operand.hbm [shape: f32[2,16,16,256], index: 2, kind: output, shape index: {}]
  %s3 = sld [smem:[#allocation0]]
  $region53: #{conv_block_forward_nhwc.1} parent=0
    _
  %s5 = ssub.s32 1, %s3
  %s6 = scalar_select 0, %s5, %s3
  $region1: #{conv_block_forward_nhwc.1} parent=0
    #allocation4 [shape = 'u8[262144]{0}', space=vmem, size = 0x40000, scoped, tag = 'input window, operand 0']
    #allocation5 [shape = 's32[2]{0}', space=sflag, size = 0x8, scoped, tag = 'scoped memory for conv_block_forward_nhwc.1']
    #allocation6 [shape = 's32[2]{0}', space=sflag, size = 0x8, scoped, tag = 'scoped memory for conv_block_forward_nhwc.1']
    #allocation7 [shape = 'u8[196608]{0}', space=vmem, size = 0x30000, scoped, tag = 'input window, operand 1, single buffered']
    #allocation8 [shape = 's32[1]{0}', space=sflag, size = 0x4, scoped, tag = 'scoped memory for conv_block_forward_nhwc.1']
    #allocation9 [shape = 'u8[524288]{0}', space=vmem, size = 0x80000, scoped, tag = 'output window, operand 0']
    %7 = vsyncpa [#allocation5], 0
    %s8 = scalar_lea.sflag [#allocation5], 1
    %9 = vsyncpa %s8, 0
    %10 = vsyncpa [#allocation8], 0
    %11 = vsyncpa [#allocation6], 0
    %s12 = scalar_lea.sflag [#allocation6], 1
    %13 = vsyncpa %s12, 0
    loop: start=0, step=1, limit=4
    $region2: #{conv_block_forward_nhwc.1} parent=1 // loop_pre_header
      _
    $region3: #{conv_block_forward_nhwc.1} parent=1 // loop_header
      %s15 = sphi 0, %s19
      %p16 = scmp.ge.s32.totalorder %s15, 4
      %s22 = sphi 0, %s34
      %s23 = sphi 0, %s30
      %s24 = sphi 0, %s22
      %s25 = sphi 0, %s23
      %s26 = sphi 0, %s24
      %s27 = sphi 0, %s25
      %s37 = sphi 0, %s39
      %s40 = sphi 0, %s37
      %s41 = sphi 0, %s40
      %s57 = sphi 0, %s41
      %s63 = sphi 0, %s65
      %s66 = sphi 0, %s63
      %s67 = sphi 0, %s66
      %s83 = sphi 0, %s67
      %s91 = sphi 0, %s93
      %s94 = sphi 0, %s91
      %s95 = sphi 0, %s94
      %s111 = sphi 0, %s95
    $region4: #{conv_block_forward_nhwc.1} parent=1 // loop_header_branch
      %18 = sbr.rel (%p16) target = $region8
    $region5: #{conv_block_forward_nhwc.1} parent=1 // loop_body
      %s20 = ssub.s32 %s15, 1
      %s21 = ssub.s32 %s15, 2
      %s28 = sadd.s32 1, %s23
      %p29 = scmp.ge.s32.totalorder %s28, 1
      %s30 = scalar_select %p29, 0, %s28
      %s31 = sadd.s32 1, %s22
      %s32 = scalar_select %p29, %s31, %s22
      %p33 = scmp.ge.s32.totalorder %s32, 2
      %s34 = scalar_select %p33, 0, %s32
      %s35 = ssub.s32 %s22, %s34
      %p36 = scmp.eq.s32.totalorder %s35, 0
      %s38 = sadd.s32 %s37, 1
      %s39 = scalar_select %p36, %s37, %s38
      %p42 = pneg %p36
      %p43 = scmp.eq.s32.totalorder %s15, 1
      %p44 = por %p42, %p43
      %p45 = scmp.ne.s32.totalorder %s37, %s40
      %p46 = scmp.eq.s32.totalorder %s15, 0
      %p47 = por %p45, %p46
      %p48 = scmp.ne.s32.totalorder %s37, %s40
      %p49 = scmp.eq.s32.totalorder %s20, 1
      %p50 = por %p48, %p49
      %p51 = scmp.ne.s32.totalorder %s40, %s41
      %p52 = scmp.eq.s32.totalorder %s20, 0
      %p53 = por %p51, %p52
      %p54 = scmp.ne.s32.totalorder %s40, %s41
      %p55 = scmp.eq.s32.totalorder %s21, 1
      %p56 = por %p54, %p55
      %p58 = scmp.ne.s32.totalorder %s41, %s57
      %p59 = scmp.eq.s32.totalorder %s21, 0
      %p60 = por %p58, %p59
      %s61 = ssub.s32 %s23, %s30
      %p62 = scmp.eq.s32.totalorder %s61, 0
      %s64 = sadd.s32 %s63, 1
      %s65 = scalar_select %p62, %s63, %s64
      %p68 = pneg %p62
      %p69 = scmp.eq.s32.totalorder %s15, 1
      %p70 = por %p68, %p69
      %p71 = scmp.ne.s32.totalorder %s63, %s66
      %p72 = scmp.eq.s32.totalorder %s15, 0
      %p73 = por %p71, %p72
      %p74 = scmp.ne.s32.totalorder %s63, %s66
      %p75 = scmp.eq.s32.totalorder %s20, 1
      %p76 = por %p74, %p75
      %p77 = scmp.ne.s32.totalorder %s66, %s67
      %p78 = scmp.eq.s32.totalorder %s20, 0
      %p79 = por %p77, %p78
      %p80 = scmp.ne.s32.totalorder %s66, %s67
      %p81 = scmp.eq.s32.totalorder %s21, 1
      %p82 = por %p80, %p81
      %p84 = scmp.ne.s32.totalorder %s67, %s83
      %p85 = scmp.eq.s32.totalorder %s21, 0
      %p86 = por %p84, %p85
      %s87 = ssub.s32 %s22, %s34
      %s88 = ssub.s32 %s23, %s30
      %s89 = sor.u32 %s87, %s88
      %p90 = scmp.eq.s32.totalorder %s89, 0
      %s92 = sadd.s32 %s91, 1
      %s93 = scalar_select %p90, %s91, %s92
      %p96 = pneg %p90
      %p97 = scmp.eq.s32.totalorder %s15, 1
      %p98 = por %p96, %p97
      %p99 = scmp.ne.s32.totalorder %s91, %s94
      %p100 = scmp.eq.s32.totalorder %s15, 0
      %p101 = por %p99, %p100
      %p102 = scmp.ne.s32.totalorder %s91, %s94
      %p103 = scmp.eq.s32.totalorder %s20, 1
      %p104 = por %p102, %p103
      %p105 = scmp.ne.s32.totalorder %s94, %s95
      %p106 = scmp.eq.s32.totalorder %s20, 0
      %p107 = por %p105, %p106
      %p108 = scmp.ne.s32.totalorder %s94, %s95
      %p109 = scmp.eq.s32.totalorder %s21, 1
      %p110 = por %p108, %p109
      %p112 = scmp.ne.s32.totalorder %s95, %s111
      %p113 = scmp.eq.s32.totalorder %s21, 0
      %p114 = por %p112, %p113
      %p115 = scmp.le.s32.totalorder 1, %s15
      %p116 = scmp.lt.s32.totalorder %s15, 3
      %p117 = pnand %p115, %p116
      %p118 = pneg %p117
      // Predicated region
      $region9: #{conv_block_forward_nhwc.1} parent=5 // pred_check
        _
      $region10: #{conv_block_forward_nhwc.1} parent=5 // pred_check_branch
        %120 = sbr.rel (%p117) target = $region12
      $region11: #{conv_block_forward_nhwc.1} parent=5 // pred_region
        %s121 = ssub.s32 %s15, 1
        // Predicated region
        $region13: #{conv_block_forward_nhwc.1} parent=11 // pred_check
          %p122 = pneg %p79
        $region14: #{conv_block_forward_nhwc.1} parent=11 // pred_check_branch
          %124 = sbr.rel (%p122) target = $region16
        $region15: #{conv_block_forward_nhwc.1} parent=11 // pred_region
          %s125 = smul.u32 2, %s25
          %s127 = ssub.s32 6144, 6144
          %128 = vsyncadd [#allocation8], %s127
          %s129 = smul.addr %s125, 64
          %s130 = scalar_lea.hbm %s1, %s129
          %s131 = sshll.u32 [#allocation7], 4
          %s132 = int_to_ptr.vmem [resolvable:$true] %s131
          %137 = dma.hbm_to_vmem [thread:$0]  %s130, 6144, %s132, [#allocation8], 128, 128, 8
        $region16: #{conv_block_forward_nhwc.1} parent=11 // pred_fallthru
          _
      $region12: #{conv_block_forward_nhwc.1} parent=5 // pred_fallthru
        _
      %p138 = scmp.lt.s32.totalorder %s15, 2
      // Predicated region
      $region17: #{conv_block_forward_nhwc.1} parent=5 // pred_check
        %p139 = pneg %p138
      $region18: #{conv_block_forward_nhwc.1} parent=5 // pred_check_branch
        %141 = sbr.rel (%p139) target = $region20
      $region19: #{conv_block_forward_nhwc.1} parent=5 // pred_region
        // Predicated region
        $region21: #{conv_block_forward_nhwc.1} parent=19 // pred_check
          %p142 = pneg %p47
        $region22: #{conv_block_forward_nhwc.1} parent=19 // pred_check_branch
          %144 = sbr.rel (%p142) target = $region24
        $region23: #{conv_block_forward_nhwc.1} parent=19 // pred_region
          %s145 = sand.u32 %s37, 1
          %s146 = scalar_lea.sflag [#allocation5], %s145
          %s147 = sand.u32 %s37, 1
          %s148 = smul.addr %s147, 256
          %s149 = scalar_lea.vmem [#allocation4], %s148
          %s151 = ssub.s32 4096, 4096
          %152 = vsyncadd %s146, %s151
          %s153 = smul.addr %s22, 32
          %s154 = smul.addr %s153, 128
          %s155 = scalar_lea.hbm %s0, %s154
          %s156 = sshll.u32 %s149, 4
          %s157 = int_to_ptr.vmem [resolvable:$true] %s156
          %162 = dma.hbm_to_vmem [thread:$0]  %s155, 4096, %s157, %s146, 128, 128, 8
        $region24: #{conv_block_forward_nhwc.1} parent=19 // pred_fallthru
          _
      $region20: #{conv_block_forward_nhwc.1} parent=5 // pred_fallthru
        _
      %p163 = scmp.le.s32.totalorder 1, %s15
      %p164 = scmp.lt.s32.totalorder %s15, 3
      %p165 = pnand %p163, %p164
      %p166 = pneg %p165
      // Predicated region
      $region25: #{conv_block_forward_nhwc.1} parent=5 // pred_check
        _
      $region26: #{conv_block_forward_nhwc.1} parent=5 // pred_check_branch
        %168 = sbr.rel (%p165) target = $region28
      $region27: #{conv_block_forward_nhwc.1} parent=5 // pred_region
        %s169 = ssub.s32 %s15, 1
        %s170 = sand.u32 %s40, 1
        %s171 = scalar_lea.sflag [#allocation5], %s170
        %s172 = sand.u32 %s40, 1
        %s173 = smul.addr %s172, 256
        %s174 = scalar_lea.vmem [#allocation4], %s173
        // Predicated region
        $region29: #{conv_block_forward_nhwc.1} parent=27 // pred_check
          %p175 = pneg %p53
        $region30: #{conv_block_forward_nhwc.1} parent=27 // pred_check_branch
          %177 = sbr.rel (%p175) target = $region32
        $region31: #{conv_block_forward_nhwc.1} parent=27 // pred_region
          %178 = dma.done %s171, 4096
        $region32: #{conv_block_forward_nhwc.1} parent=27 // pred_fallthru
          _
        // Predicated region
        $region33: #{conv_block_forward_nhwc.1} parent=27 // pred_check
          %p179 = pneg %p79
        $region34: #{conv_block_forward_nhwc.1} parent=27 // pred_check_branch
          %181 = sbr.rel (%p179) target = $region36
        $region35: #{conv_block_forward_nhwc.1} parent=27 // pred_region
          %182 = dma.done [#allocation8], 6144
        $region36: #{conv_block_forward_nhwc.1} parent=27 // pred_fallthru
          _
        %s183 = sand.u32 %s40, 1
        %s184 = scalar_lea.sflag [#allocation5], %s183
        %s185 = sand.u32 %s40, 1
        %s186 = smul.addr %s185, 256
        %s187 = scalar_lea.vmem [#allocation4], %s186
        %p188 = pneg %p53
        %p189 = pneg %p50
        %p190 = pneg %p79
        %p191 = pneg %p76
        %p192 = pneg %p107
        %p193 = pneg %p104
        %s194 = sand.u32 %s94, 1
        %s195 = scalar_lea.sflag [#allocation6], %s194
        %s196 = sand.u32 %s94, 1
        %s197 = smul.addr %s196, 512
        %s198 = scalar_lea.vmem [#allocation9], %s197
        %s199 = smul.u32 2, %s25
        %s200 = smul.u32 2, %s25
        %p202 = scmp.eq.s32.totalorder %s25, 0
        // Predicated region
        $region37: #{conv_block_forward_nhwc.1} parent=27 // pred_check
          %p203 = pneg %p202
        $region38: #{conv_block_forward_nhwc.1} parent=27 // pred_check_branch
          %205 = sbr.rel (%p203) target = $region40
        $region39: #{conv_block_forward_nhwc.1} parent=27 // pred_region
          %vm206 = vcmask 257024
          %207 = vst.msk [vmem:[#allocation2] sm:$0xf] %vm206, 0
          %208 = vst.msk [vmem:[#allocation2 + $0x4] sm:$0xf] %vm206, 0
          %vm209 = vcmask 253952
          %210 = vst.msk [vmem:[#allocation2 + $0x8] sm:$0x1] %vm209, 0
          %211 = vst.msk [vmem:[#allocation2 + $0xc] sm:$0xf] %vm206, 0
          %212 = vst.msk [vmem:[#allocation2 + $0x10] sm:$0xf] %vm206, 0
          %213 = vst.msk [vmem:[#allocation2 + $0x14] sm:$0x1] %vm209, 0
          %214 = vst.msk [vmem:[#allocation2 + $0x18] sm:$0xf] %vm206, 0
          %215 = vst.msk [vmem:[#allocation2 + $0x1c] sm:$0xf] %vm206, 0
          %216 = vst.msk [vmem:[#allocation2 + $0x20] sm:$0x1] %vm209, 0
          %217 = vst.msk [vmem:[#allocation2 + $0x24] sm:$0xf] %vm206, 0
          %218 = vst.msk [vmem:[#allocation2 + $0x28] sm:$0xf] %vm206, 0
          %219 = vst.msk [vmem:[#allocation2 + $0x2c] sm:$0x1] %vm209, 0
          %220 = vst.msk [vmem:[#allocation2 + $0x30] sm:$0xf] %vm206, 0
          %221 = vst.msk [vmem:[#allocation2 + $0x34] sm:$0xf] %vm206, 0
          %222 = vst.msk [vmem:[#allocation2 + $0x38] sm:$0x1] %vm209, 0
          %223 = vst.msk [vmem:[#allocation2 + $0x3c] sm:$0xf] %vm206, 0
          %224 = vst.msk [vmem:[#allocation2 + $0x40] sm:$0xf] %vm206, 0
          %225 = vst.msk [vmem:[#allocation2 + $0x44] sm:$0x1] %vm209, 0
          %226 = vst.msk [vmem:[#allocation2 + $0x48] sm:$0xf] %vm206, 0
          %227 = vst.msk [vmem:[#allocation2 + $0x4c] sm:$0xf] %vm206, 0
          %228 = vst.msk [vmem:[#allocation2 + $0x50] sm:$0x1] %vm209, 0
          %229 = vst.msk [vmem:[#allocation2 + $0x54] sm:$0xf] %vm206, 0
          %230 = vst.msk [vmem:[#allocation2 + $0x58] sm:$0xf] %vm206, 0
          %231 = vst.msk [vmem:[#allocation2 + $0x5c] sm:$0x1] %vm209, 0
          %232 = vst.msk [vmem:[#allocation2 + $0x60] sm:$0xf] %vm206, 0
          %233 = vst.msk [vmem:[#allocation2 + $0x64] sm:$0xf] %vm206, 0
          %234 = vst.msk [vmem:[#allocation2 + $0x68] sm:$0x1] %vm209, 0
          %235 = vst.msk [vmem:[#allocation2 + $0x6c] sm:$0xf] %vm206, 0
          %236 = vst.msk [vmem:[#allocation2 + $0x70] sm:$0xf] %vm206, 0
          %237 = vst.msk [vmem:[#allocation2 + $0x74] sm:$0x1] %vm209, 0
          %238 = vst.msk [vmem:[#allocation2 + $0x78] sm:$0xf] %vm206, 0
          %239 = vst.msk [vmem:[#allocation2 + $0x7c] sm:$0xf] %vm206, 0
          %240 = vst.msk [vmem:[#allocation2 + $0x80] sm:$0x1] %vm209, 0
          %241 = vst.msk [vmem:[#allocation2 + $0x84] sm:$0xf] %vm206, 0
          %242 = vst.msk [vmem:[#allocation2 + $0x88] sm:$0xf] %vm206, 0
          %243 = vst.msk [vmem:[#allocation2 + $0x8c] sm:$0x1] %vm209, 0
          %244 = vst.msk [vmem:[#allocation2 + $0x90] sm:$0xf] %vm206, 0
          %245 = vst.msk [vmem:[#allocation2 + $0x94] sm:$0xf] %vm206, 0
          %246 = vst.msk [vmem:[#allocation2 + $0x98] sm:$0x1] %vm209, 0
          %247 = vst.msk [vmem:[#allocation2 + $0x9c] sm:$0xf] %vm206, 0
          %248 = vst.msk [vmem:[#allocation2 + $0xa0] sm:$0xf] %vm206, 0
          %249 = vst.msk [vmem:[#allocation2 + $0xa4] sm:$0x1] %vm209, 0
          %250 = vst.msk [vmem:[#allocation2 + $0xa8] sm:$0xf] %vm206, 0
          %251 = vst.msk [vmem:[#allocation2 + $0xac] sm:$0xf] %vm206, 0
          %252 = vst.msk [vmem:[#allocation2 + $0xb0] sm:$0x1] %vm209, 0
          %253 = vst.msk [vmem:[#allocation2 + $0xb4] sm:$0xf] %vm206, 0
          %254 = vst.msk [vmem:[#allocation2 + $0xb8] sm:$0xf] %vm206, 0
          %255 = vst.msk [vmem:[#allocation2 + $0xbc] sm:$0x1] %vm209, 0
          %256 = vst.msk [vmem:[#allocation2 + $0xc0] sm:$0xf] %vm206, 0
          %257 = vst.msk [vmem:[#allocation2 + $0xc4] sm:$0xf] %vm206, 0
          %258 = vst.msk [vmem:[#allocation2 + $0xc8] sm:$0x1] %vm209, 0
          %259 = vst.msk [vmem:[#allocation2 + $0xcc] sm:$0xf] %vm206, 0
          %260 = vst.msk [vmem:[#allocation2 + $0xd0] sm:$0xf] %vm206, 0
          %261 = vst.msk [vmem:[#allocation2 + $0xd4] sm:$0x1] %vm209, 0
          %v262 = vld [vmem:[%s174] sm:$0xff]
          %v263 = vld [vmem:[%s174 + $0x8] sm:$0xff]
          %v264 = vld [vmem:[%s174 + $0x10] sm:$0xff]
          %v265 = vld [vmem:[%s174 + $0x18] sm:$0xff]
          %v266 = vld [vmem:[%s174 + $0x20] sm:$0xff]
          %v267 = vld [vmem:[%s174 + $0x28] sm:$0xff]
          %v268 = vld [vmem:[%s174 + $0x30] sm:$0xff]
          %v269 = vld [vmem:[%s174 + $0x38] sm:$0xff]
          %v270 = vld [vmem:[%s174 + $0x40] sm:$0xff]
          %v271 = vld [vmem:[%s174 + $0x48] sm:$0xff]
          %v272 = vld [vmem:[%s174 + $0x50] sm:$0xff]
          %v273 = vld [vmem:[%s174 + $0x58] sm:$0xff]
          %v274 = vld [vmem:[%s174 + $0x60] sm:$0xff]
          %v275 = vld [vmem:[%s174 + $0x68] sm:$0xff]
          %v276 = vld [vmem:[%s174 + $0x70] sm:$0xff]
          %v277 = vld [vmem:[%s174 + $0x78] sm:$0xff]
          %v278 = vld [vmem:[%s174 + $0x80] sm:$0xff]
          %v279 = vld [vmem:[%s174 + $0x88] sm:$0xff]
          %v280 = vld [vmem:[%s174 + $0x90] sm:$0xff]
          %v281 = vld [vmem:[%s174 + $0x98] sm:$0xff]
          %v282 = vld [vmem:[%s174 + $0xa0] sm:$0xff]
          %v283 = vld [vmem:[%s174 + $0xa8] sm:$0xff]
          %v284 = vld [vmem:[%s174 + $0xb0] sm:$0xff]
          %v285 = vld [vmem:[%s174 + $0xb8] sm:$0xff]
          %v286 = vld [vmem:[%s174 + $0xc0] sm:$0xff]
          %v287 = vld [vmem:[%s174 + $0xc8] sm:$0xff]
          %v288 = vld [vmem:[%s174 + $0xd0] sm:$0xff]
          %v289 = vld [vmem:[%s174 + $0xd8] sm:$0xff]
          %v290 = vld [vmem:[%s174 + $0xe0] sm:$0xff]
          %v291 = vld [vmem:[%s174 + $0xe8] sm:$0xff]
          %v292 = vld [vmem:[%s174 + $0xf0] sm:$0xff]
          %v293 = vld [vmem:[%s174 + $0xf8] sm:$0xff]
          %v294 = vpack.c.bf16 %v263, %v262
          %v295 = vpack.c.bf16 %v265, %v264
          %v296 = vpack.c.bf16 %v267, %v266
          %v297 = vpack.c.bf16 %v269, %v268
          %v298 = vpack.c.bf16 %v271, %v270
          %v299 = vpack.c.bf16 %v273, %v272
          %v300 = vpack.c.bf16 %v275, %v274
          %v301 = vpack.c.bf16 %v277, %v276
          %v302 = vpack.c.bf16 %v279, %v278
          %v303 = vpack.c.bf16 %v281, %v280
          %v304 = vpack.c.bf16 %v283, %v282
          %v305 = vpack.c.bf16 %v285, %v284
          %v306 = vpack.c.bf16 %v287, %v286
          %v307 = vpack.c.bf16 %v289, %v288
          %v308 = vpack.c.bf16 %v291, %v290
          %v309 = vpack.c.bf16 %v293, %v292
          %v326 = vunpack.c.l.b16 %v294
          %v327 = vunpack.c.h.b16 %v294
          %v328 = vunpack.c.l.b16 %v295
          %v329 = vunpack.c.h.b16 %v295
          %v330 = vunpack.c.l.b16 %v296
          %v331 = vunpack.c.h.b16 %v296
          %v332 = vunpack.c.l.b16 %v297
          %v333 = vunpack.c.h.b16 %v297
          %v334 = vunpack.c.l.b16 %v298
          %v335 = vunpack.c.h.b16 %v298
          %v336 = vunpack.c.l.b16 %v299
          %v337 = vunpack.c.h.b16 %v299
          %v338 = vunpack.c.l.b16 %v300
          %v339 = vunpack.c.h.b16 %v300
          %v340 = vunpack.c.l.b16 %v301
          %v341 = vunpack.c.h.b16 %v301
          %v342 = vunpack.c.l.b16 %v302
          %v343 = vunpack.c.h.b16 %v302
          %v344 = vunpack.c.l.b16 %v303
          %v345 = vunpack.c.h.b16 %v303
          %v346 = vunpack.c.l.b16 %v304
          %v347 = vunpack.c.h.b16 %v304
          %v348 = vunpack.c.l.b16 %v305
          %v349 = vunpack.c.h.b16 %v305
          %v350 = vunpack.c.l.b16 %v306
          %v351 = vunpack.c.h.b16 %v306
          %v352 = vunpack.c.l.b16 %v307
          %v353 = vunpack.c.h.b16 %v307
          %v354 = vunpack.c.l.b16 %v308
          %v355 = vunpack.c.h.b16 %v308
          %v356 = vunpack.c.l.b16 %v309
          %v357 = vunpack.c.h.b16 %v309
          %v358 = vpack.c.b16 %v326, %v326
          %v359 = vpack.c.b16 %v327, %v327
          %v360 = vpack.c.b16 %v328, %v328
          %v361 = vpack.c.b16 %v329, %v329
          %v362 = vpack.c.b16 %v330, %v330
          %v363 = vpack.c.b16 %v331, %v331
          %v364 = vpack.c.b16 %v332, %v332
          %v365 = vpack.c.b16 %v333, %v333
          %v366 = vpack.c.b16 %v334, %v334
          %v367 = vpack.c.b16 %v335, %v335
          %v368 = vpack.c.b16 %v336, %v336
          %v369 = vpack.c.b16 %v337, %v337
          %v370 = vpack.c.b16 %v338, %v338
          %v371 = vpack.c.b16 %v339, %v339
          %v372 = vpack.c.b16 %v340, %v340
          %v373 = vpack.c.b16 %v341, %v341
          %v374 = vpack.c.b16 %v342, %v342
          %v375 = vpack.c.b16 %v343, %v343
          %v376 = vpack.c.b16 %v344, %v344
          %v377 = vpack.c.b16 %v345, %v345
          %v378 = vpack.c.b16 %v346, %v346
          %v379 = vpack.c.b16 %v347, %v347
          %v380 = vpack.c.b16 %v348, %v348
          %v381 = vpack.c.b16 %v349, %v349
          %v382 = vpack.c.b16 %v350, %v350
          %v383 = vpack.c.b16 %v351, %v351
          %v384 = vpack.c.b16 %v352, %v352
          %v385 = vpack.c.b16 %v353, %v353
          %v386 = vpack.c.b16 %v354, %v354
          %v387 = vpack.c.b16 %v355, %v355
          %v388 = vpack.c.b16 %v356, %v356
          %v389 = vpack.c.b16 %v357, %v357
          %vm390 = vsmask.f32 256
          %vm391 = vsmask.f32 4368
          %vm392 = vmor %vm390, %vm391
          %v394 = vshrl.u32 %v358, 16
          %v396 = vrot.slane %v394, 7
          %v397 = vshll.u32 %v358, 16
          %v399 = vor.u32 %v396, %v397
          %v400 = vrot.slane %v396, 4
          %v402 = vshrl.u32 %v359, 16
          %v404 = vrot.slane %v402, 7
          %v405 = vshll.u32 %v359, 16
          %v407 = vor.u32 %v404, %v405
          %v408 = vsel %vm392, %v400, %v407
          %v409 = vrot.slane %v404, 4
          %v411 = vshrl.u32 %v360, 16
          %v413 = vrot.slane %v411, 7
          %v414 = vshll.u32 %v360, 16
          %v416 = vor.u32 %v413, %v414
          %v417 = vrot.slane %v413, 4
          %v419 = vshrl.u32 %v361, 16
          %v421 = vrot.slane %v419, 7
          %v422 = vshll.u32 %v361, 16
          %v424 = vor.u32 %v421, %v422
          %v425 = vsel %vm392, %v417, %v424
          %v426 = vrot.slane %v421, 4
          %v428 = vshrl.u32 %v362, 16
          %v430 = vrot.slane %v428, 7
          %v431 = vshll.u32 %v362, 16
          %v433 = vor.u32 %v430, %v431
          %v434 = vrot.slane %v430, 4
          %v436 = vshrl.u32 %v363, 16
          %v438 = vrot.slane %v436, 7
          %v439 = vshll.u32 %v363, 16
          %v441 = vor.u32 %v438, %v439
          %v442 = vsel %vm392, %v434, %v441
          %v443 = vrot.slane %v438, 4
          %v445 = vshrl.u32 %v364, 16
          %v447 = vrot.slane %v445, 7
          %v448 = vshll.u32 %v364, 16
          %v450 = vor.u32 %v447, %v448
          %v451 = vrot.slane %v447, 4
          %v453 = vshrl.u32 %v365, 16
          %v455 = vrot.slane %v453, 7
          %v456 = vshll.u32 %v365, 16
          %v458 = vor.u32 %v455, %v456
          %v459 = vsel %vm392, %v451, %v458
          %v460 = vrot.slane %v455, 4
          %v462 = vshrl.u32 %v366, 16
          %v464 = vrot.slane %v462, 7
          %v465 = vshll.u32 %v366, 16
          %v467 = vor.u32 %v464, %v465
          %v468 = vrot.slane %v464, 4
          %v470 = vshrl.u32 %v367, 16
          %v472 = vrot.slane %v470, 7
          %v473 = vshll.u32 %v367, 16
          %v475 = vor.u32 %v472, %v473
          %v476 = vsel %vm392, %v468, %v475
          %v477 = vrot.slane %v472, 4
          %v479 = vshrl.u32 %v368, 16
          %v481 = vrot.slane %v479, 7
          %v482 = vshll.u32 %v368, 16
          %v484 = vor.u32 %v481, %v482
          %v485 = vrot.slane %v481, 4
          %v487 = vshrl.u32 %v369, 16
          %v489 = vrot.slane %v487, 7
          %v490 = vshll.u32 %v369, 16
          %v492 = vor.u32 %v489, %v490
          %v493 = vsel %vm392, %v485, %v492
          %v494 = vrot.slane %v489, 4
          %v496 = vshrl.u32 %v370, 16
          %v498 = vrot.slane %v496, 7
          %v499 = vshll.u32 %v370, 16
          %v501 = vor.u32 %v498, %v499
          %v502 = vrot.slane %v498, 4
          %v504 = vshrl.u32 %v371, 16
          %v506 = vrot.slane %v504, 7
          %v507 = vshll.u32 %v371, 16
          %v509 = vor.u32 %v506, %v507
          %v510 = vsel %vm392, %v502, %v509
          %v511 = vrot.slane %v506, 4
          %v513 = vshrl.u32 %v372, 16
          %v515 = vrot.slane %v513, 7
          %v516 = vshll.u32 %v372, 16
          %v518 = vor.u32 %v515, %v516
          %v519 = vrot.slane %v515, 4
          %v521 = vshrl.u32 %v373, 16
          %v523 = vrot.slane %v521, 7
          %v524 = vshll.u32 %v373, 16
          %v526 = vor.u32 %v523, %v524
          %v527 = vsel %vm392, %v519, %v526
          %v528 = vrot.slane %v523, 4
          %v530 = vshrl.u32 %v374, 16
          %v532 = vrot.slane %v530, 7
          %v533 = vshll.u32 %v374, 16
          %v535 = vor.u32 %v532, %v533
          %v536 = vrot.slane %v532, 4
          %v538 = vshrl.u32 %v375, 16
          %v540 = vrot.slane %v538, 7
          %v541 = vshll.u32 %v375, 16
          %v543 = vor.u32 %v540, %v541
          %v544 = vsel %vm392, %v536, %v543
          %v545 = vrot.slane %v540, 4
          %v547 = vshrl.u32 %v376, 16
          %v549 = vrot.slane %v547, 7
          %v550 = vshll.u32 %v376, 16
          %v552 = vor.u32 %v549, %v550
          %v553 = vrot.slane %v549, 4
          %v555 = vshrl.u32 %v377, 16
          %v557 = vrot.slane %v555, 7
          %v558 = vshll.u32 %v377, 16
          %v560 = vor.u32 %v557, %v558
          %v561 = vsel %vm392, %v553, %v560
          %v562 = vrot.slane %v557, 4
          %v564 = vshrl.u32 %v378, 16
          %v566 = vrot.slane %v564, 7
          %v567 = vshll.u32 %v378, 16
          %v569 = vor.u32 %v566, %v567
          %v570 = vrot.slane %v566, 4
          %v572 = vshrl.u32 %v379, 16
          %v574 = vrot.slane %v572, 7
          %v575 = vshll.u32 %v379, 16
          %v577 = vor.u32 %v574, %v575
          %v578 = vsel %vm392, %v570, %v577
          %v579 = vrot.slane %v574, 4
          %v581 = vshrl.u32 %v380, 16
          %v583 = vrot.slane %v581, 7
          %v584 = vshll.u32 %v380, 16
          %v586 = vor.u32 %v583, %v584
          %v587 = vrot.slane %v583, 4
          %v589 = vshrl.u32 %v381, 16
          %v591 = vrot.slane %v589, 7
          %v592 = vshll.u32 %v381, 16
          %v594 = vor.u32 %v591, %v592
          %v595 = vsel %vm392, %v587, %v594
          %v596 = vrot.slane %v591, 4
          %v598 = vshrl.u32 %v382, 16
          %v600 = vrot.slane %v598, 7
          %v601 = vshll.u32 %v382, 16
          %v603 = vor.u32 %v600, %v601
          %v604 = vrot.slane %v600, 4
          %v606 = vshrl.u32 %v383, 16
          %v608 = vrot.slane %v606, 7
          %v609 = vshll.u32 %v383, 16
          %v611 = vor.u32 %v608, %v609
          %v612 = vsel %vm392, %v604, %v611
          %v613 = vrot.slane %v608, 4
          %v615 = vshrl.u32 %v384, 16
          %v617 = vrot.slane %v615, 7
          %v618 = vshll.u32 %v384, 16
          %v620 = vor.u32 %v617, %v618
          %v621 = vrot.slane %v617, 4
          %v623 = vshrl.u32 %v385, 16
          %v625 = vrot.slane %v623, 7
          %v626 = vshll.u32 %v385, 16
          %v628 = vor.u32 %v625, %v626
          %v629 = vsel %vm392, %v621, %v628
          %v630 = vrot.slane %v625, 4
          %v632 = vshrl.u32 %v386, 16
          %v634 = vrot.slane %v632, 7
          %v635 = vshll.u32 %v386, 16
          %v637 = vor.u32 %v634, %v635
          %v638 = vrot.slane %v634, 4
          %v640 = vshrl.u32 %v387, 16
          %v642 = vrot.slane %v640, 7
          %v643 = vshll.u32 %v387, 16
          %v645 = vor.u32 %v642, %v643
          %v646 = vsel %vm392, %v638, %v645
          %v647 = vrot.slane %v642, 4
          %v649 = vshrl.u32 %v388, 16
          %v651 = vrot.slane %v649, 7
          %v652 = vshll.u32 %v388, 16
          %v654 = vor.u32 %v651, %v652
          %v655 = vrot.slane %v651, 4
          %v657 = vshrl.u32 %v389, 16
          %v659 = vrot.slane %v657, 7
          %v660 = vshll.u32 %v389, 16
          %v662 = vor.u32 %v659, %v660
          %v663 = vsel %vm392, %v655, %v662
          %v664 = vrot.slane %v659, 4
          %s713 = scalar_lea.vmem [#allocation2], 12
          %vm714 = vcmask 257024
          %vm715 = vsmask.f32 7938
          %vm716 = vmand %vm714, %vm715
          %v717 = vld [vmem:[%s713] sm:$0xf]
          %v718 = vsel %vm716, %v399, %v717
          %719 = vst [vmem:[%s713] sm:$0xf] %v718
          %720 = vst.msk [vmem:[%s713 + $0x4] sm:$0xf] %vm206, %v408
          %vm721 = vcmask 253952
          %vm722 = vmand %vm721, %vm390
          %v723 = vld [vmem:[%s713 + $0x8] sm:$0x1]
          %v724 = vsel %vm722, %v409, %v723
          %725 = vst [vmem:[%s713 + $0x8] sm:$0x1] %v724
          %v726 = vld [vmem:[%s713 + $0xc] sm:$0xf]
          %v727 = vsel %vm716, %v416, %v726
          %728 = vst [vmem:[%s713 + $0xc] sm:$0xf] %v727
          %729 = vst.msk [vmem:[%s713 + $0x10] sm:$0xf] %vm206, %v425
          %v730 = vld [vmem:[%s713 + $0x14] sm:$0x1]
          %v731 = vsel %vm722, %v426, %v730
          %732 = vst [vmem:[%s713 + $0x14] sm:$0x1] %v731
          %v733 = vld [vmem:[%s713 + $0x18] sm:$0xf]
          %v734 = vsel %vm716, %v433, %v733
          %735 = vst [vmem:[%s713 + $0x18] sm:$0xf] %v734
          %736 = vst.msk [vmem:[%s713 + $0x1c] sm:$0xf] %vm206, %v442
          %v737 = vld [vmem:[%s713 + $0x20] sm:$0x1]
          %v738 = vsel %vm722, %v443, %v737
          %739 = vst [vmem:[%s713 + $0x20] sm:$0x1] %v738
          %v740 = vld [vmem:[%s713 + $0x24] sm:$0xf]
          %v741 = vsel %vm716, %v450, %v740
          %742 = vst [vmem:[%s713 + $0x24] sm:$0xf] %v741
          %743 = vst.msk [vmem:[%s713 + $0x28] sm:$0xf] %vm206, %v459
          %v744 = vld [vmem:[%s713 + $0x2c] sm:$0x1]
          %v745 = vsel %vm722, %v460, %v744
          %746 = vst [vmem:[%s713 + $0x2c] sm:$0x1] %v745
          %v747 = vld [vmem:[%s713 + $0x30] sm:$0xf]
          %v748 = vsel %vm716, %v467, %v747
          %749 = vst [vmem:[%s713 + $0x30] sm:$0xf] %v748
          %750 = vst.msk [vmem:[%s713 + $0x34] sm:$0xf] %vm206, %v476
          %v751 = vld [vmem:[%s713 + $0x38] sm:$0x1]
          %v752 = vsel %vm722, %v477, %v751
          %753 = vst [vmem:[%s713 + $0x38] sm:$0x1] %v752
          %v754 = vld [vmem:[%s713 + $0x3c] sm:$0xf]
          %v755 = vsel %vm716, %v484, %v754
          %756 = vst [vmem:[%s713 + $0x3c] sm:$0xf] %v755
          %757 = vst.msk [vmem:[%s713 + $0x40] sm:$0xf] %vm206, %v493
          %v758 = vld [vmem:[%s713 + $0x44] sm:$0x1]
          %v759 = vsel %vm722, %v494, %v758
          %760 = vst [vmem:[%s713 + $0x44] sm:$0x1] %v759
          %v761 = vld [vmem:[%s713 + $0x48] sm:$0xf]
          %v762 = vsel %vm716, %v501, %v761
          %763 = vst [vmem:[%s713 + $0x48] sm:$0xf] %v762
          %764 = vst.msk [vmem:[%s713 + $0x4c] sm:$0xf] %vm206, %v510
          %v765 = vld [vmem:[%s713 + $0x50] sm:$0x1]
          %v766 = vsel %vm722, %v511, %v765
          %767 = vst [vmem:[%s713 + $0x50] sm:$0x1] %v766
          %v768 = vld [vmem:[%s713 + $0x54] sm:$0xf]
          %v769 = vsel %vm716, %v518, %v768
          %770 = vst [vmem:[%s713 + $0x54] sm:$0xf] %v769
          %771 = vst.msk [vmem:[%s713 + $0x58] sm:$0xf] %vm206, %v527
          %v772 = vld [vmem:[%s713 + $0x5c] sm:$0x1]
          %v773 = vsel %vm722, %v528, %v772
          %774 = vst [vmem:[%s713 + $0x5c] sm:$0x1] %v773
          %v775 = vld [vmem:[%s713 + $0x60] sm:$0xf]
          %v776 = vsel %vm716, %v535, %v775
          %777 = vst [vmem:[%s713 + $0x60] sm:$0xf] %v776
          %778 = vst.msk [vmem:[%s713 + $0x64] sm:$0xf] %vm206, %v544
          %v779 = vld [vmem:[%s713 + $0x68] sm:$0x1]
          %v780 = vsel %vm722, %v545, %v779
          %781 = vst [vmem:[%s713 + $0x68] sm:$0x1] %v780
          %v782 = vld [vmem:[%s713 + $0x6c] sm:$0xf]
          %v783 = vsel %vm716, %v552, %v782
          %784 = vst [vmem:[%s713 + $0x6c] sm:$0xf] %v783
          %785 = vst.msk [vmem:[%s713 + $0x70] sm:$0xf] %vm206, %v561
          %v786 = vld [vmem:[%s713 + $0x74] sm:$0x1]
          %v787 = vsel %vm722, %v562, %v786
          %788 = vst [vmem:[%s713 + $0x74] sm:$0x1] %v787
          %v789 = vld [vmem:[%s713 + $0x78] sm:$0xf]
          %v790 = vsel %vm716, %v569, %v789
          %791 = vst [vmem:[%s713 + $0x78] sm:$0xf] %v790
          %792 = vst.msk [vmem:[%s713 + $0x7c] sm:$0xf] %vm206, %v578
          %v793 = vld [vmem:[%s713 + $0x80] sm:$0x1]
          %v794 = vsel %vm722, %v579, %v793
          %795 = vst [vmem:[%s713 + $0x80] sm:$0x1] %v794
          %v796 = vld [vmem:[%s713 + $0x84] sm:$0xf]
          %v797 = vsel %vm716, %v586, %v796
          %798 = vst [vmem:[%s713 + $0x84] sm:$0xf] %v797
          %799 = vst.msk [vmem:[%s713 + $0x88] sm:$0xf] %vm206, %v595
          %v800 = vld [vmem:[%s713 + $0x8c] sm:$0x1]
          %v801 = vsel %vm722, %v596, %v800
          %802 = vst [vmem:[%s713 + $0x8c] sm:$0x1] %v801
          %v803 = vld [vmem:[%s713 + $0x90] sm:$0xf]
          %v804 = vsel %vm716, %v603, %v803
          %805 = vst [vmem:[%s713 + $0x90] sm:$0xf] %v804
          %806 = vst.msk [vmem:[%s713 + $0x94] sm:$0xf] %vm206, %v612
          %v807 = vld [vmem:[%s713 + $0x98] sm:$0x1]
          %v808 = vsel %vm722, %v613, %v807
          %809 = vst [vmem:[%s713 + $0x98] sm:$0x1] %v808
          %v810 = vld [vmem:[%s713 + $0x9c] sm:$0xf]
          %v811 = vsel %vm716, %v620, %v810
          %812 = vst [vmem:[%s713 + $0x9c] sm:$0xf] %v811
          %813 = vst.msk [vmem:[%s713 + $0xa0] sm:$0xf] %vm206, %v629
          %v814 = vld [vmem:[%s713 + $0xa4] sm:$0x1]
          %v815 = vsel %vm722, %v630, %v814
          %816 = vst [vmem:[%s713 + $0xa4] sm:$0x1] %v815
          %v817 = vld [vmem:[%s713 + $0xa8] sm:$0xf]
          %v818 = vsel %vm716, %v637, %v817
          %819 = vst [vmem:[%s713 + $0xa8] sm:$0xf] %v818
          %820 = vst.msk [vmem:[%s713 + $0xac] sm:$0xf] %vm206, %v646
          %v821 = vld [vmem:[%s713 + $0xb0] sm:$0x1]
          %v822 = vsel %vm722, %v647, %v821
          %823 = vst [vmem:[%s713 + $0xb0] sm:$0x1] %v822
          %v824 = vld [vmem:[%s713 + $0xb4] sm:$0xf]
          %v825 = vsel %vm716, %v654, %v824
          %826 = vst [vmem:[%s713 + $0xb4] sm:$0xf] %v825
          %827 = vst.msk [vmem:[%s713 + $0xb8] sm:$0xf] %vm206, %v663
          %v828 = vld [vmem:[%s713 + $0xbc] sm:$0x1]
          %v829 = vsel %vm722, %v664, %v828
          %830 = vst [vmem:[%s713 + $0xbc] sm:$0x1] %v829
          %831 = vst [vmem:[#allocation3] sm:$0xff] 0
          %832 = vst [vmem:[#allocation3 + $0x8] sm:$0xff] 0
          %833 = vst [vmem:[#allocation3 + $0x10] sm:$0xff] 0
          %834 = vst [vmem:[#allocation3 + $0x18] sm:$0xff] 0
          %835 = vst [vmem:[#allocation3 + $0x20] sm:$0xff] 0
          %836 = vst [vmem:[#allocation3 + $0x28] sm:$0xff] 0
          %837 = vst [vmem:[#allocation3 + $0x30] sm:$0xff] 0
          %838 = vst [vmem:[#allocation3 + $0x38] sm:$0xff] 0
          %839 = vst [vmem:[#allocation3 + $0x40] sm:$0xff] 0
          %840 = vst [vmem:[#allocation3 + $0x48] sm:$0xff] 0
          %841 = vst [vmem:[#allocation3 + $0x50] sm:$0xff] 0
          %842 = vst [vmem:[#allocation3 + $0x58] sm:$0xff] 0
          %843 = vst [vmem:[#allocation3 + $0x60] sm:$0xff] 0
          %844 = vst [vmem:[#allocation3 + $0x68] sm:$0xff] 0
          %845 = vst [vmem:[#allocation3 + $0x70] sm:$0xff] 0
          %846 = vst [vmem:[#allocation3 + $0x78] sm:$0xff] 0
          %847 = vst [vmem:[#allocation3 + $0x80] sm:$0xff] 0
          %848 = vst [vmem:[#allocation3 + $0x88] sm:$0xff] 0
          %849 = vst [vmem:[#allocation3 + $0x90] sm:$0xff] 0
          %850 = vst [vmem:[#allocation3 + $0x98] sm:$0xff] 0
          %851 = vst [vmem:[#allocation3 + $0xa0] sm:$0xff] 0
          %852 = vst [vmem:[#allocation3 + $0xa8] sm:$0xff] 0
          %853 = vst [vmem:[#allocation3 + $0xb0] sm:$0xff] 0
          %854 = vst [vmem:[#allocation3 + $0xb8] sm:$0xff] 0
          %855 = vst [vmem:[#allocation3 + $0xc0] sm:$0xff] 0
          %856 = vst [vmem:[#allocation3 + $0xc8] sm:$0xff] 0
          %857 = vst [vmem:[#allocation3 + $0xd0] sm:$0xff] 0
          %858 = vst [vmem:[#allocation3 + $0xd8] sm:$0xff] 0
          %859 = vst [vmem:[#allocation3 + $0xe0] sm:$0xff] 0
          %860 = vst [vmem:[#allocation3 + $0xe8] sm:$0xff] 0
          %861 = vst [vmem:[#allocation3 + $0xf0] sm:$0xff] 0
          %862 = vst [vmem:[#allocation3 + $0xf8] sm:$0xff] 0
          %863 = vst [vmem:[#allocation3 + $0x100] sm:$0xff] 0
          %864 = vst [vmem:[#allocation3 + $0x108] sm:$0xff] 0
          %865 = vst [vmem:[#allocation3 + $0x110] sm:$0xff] 0
          %866 = vst [vmem:[#allocation3 + $0x118] sm:$0xff] 0
          %867 = vst [vmem:[#allocation3 + $0x120] sm:$0xff] 0
          %868 = vst [vmem:[#allocation3 + $0x128] sm:$0xff] 0
          %869 = vst [vmem:[#allocation3 + $0x130] sm:$0xff] 0
          %870 = vst [vmem:[#allocation3 + $0x138] sm:$0xff] 0
          %871 = vst [vmem:[#allocation3 + $0x140] sm:$0xff] 0
          %872 = vst [vmem:[#allocation3 + $0x148] sm:$0xff] 0
          %873 = vst [vmem:[#allocation3 + $0x150] sm:$0xff] 0
          %874 = vst [vmem:[#allocation3 + $0x158] sm:$0xff] 0
          %875 = vst [vmem:[#allocation3 + $0x160] sm:$0xff] 0
          %876 = vst [vmem:[#allocation3 + $0x168] sm:$0xff] 0
          %877 = vst [vmem:[#allocation3 + $0x170] sm:$0xff] 0
          %878 = vst [vmem:[#allocation3 + $0x178] sm:$0xff] 0
          %v879 = vld [vmem:[#allocation2] sm:$0xf]
          %v880 = vld [vmem:[#allocation2 + $0x4] sm:$0xf]
          %v881 = vld [vmem:[#allocation2 + $0xc] sm:$0xf]
          %v882 = vld [vmem:[#allocation2 + $0x10] sm:$0xf]
          %v883 = vld [vmem:[#allocation2 + $0x18] sm:$0xf]
          %v884 = vld [vmem:[#allocation2 + $0x1c] sm:$0xf]
          %v885 = vld [vmem:[#allocation2 + $0x24] sm:$0xf]
          %v886 = vld [vmem:[#allocation2 + $0x28] sm:$0xf]
          %v887 = vld [vmem:[#allocation2 + $0x30] sm:$0xf]
          %v888 = vld [vmem:[#allocation2 + $0x34] sm:$0xf]
          %v889 = vld [vmem:[#allocation2 + $0x3c] sm:$0xf]
          %v890 = vld [vmem:[#allocation2 + $0x40] sm:$0xf]
          %v891 = vld [vmem:[#allocation2 + $0x48] sm:$0xf]
          %v892 = vld [vmem:[#allocation2 + $0x4c] sm:$0xf]
          %v893 = vld [vmem:[#allocation2 + $0x54] sm:$0xf]
          %v894 = vld [vmem:[#allocation2 + $0x58] sm:$0xf]
          %v895 = vld [vmem:[#allocation2 + $0x60] sm:$0xf]
          %v896 = vld [vmem:[#allocation2 + $0x64] sm:$0xf]
          %v897 = vld [vmem:[#allocation2 + $0x6c] sm:$0xf]
          %v898 = vld [vmem:[#allocation2 + $0x70] sm:$0xf]
          %v899 = vld [vmem:[#allocation2 + $0x78] sm:$0xf]
          %v900 = vld [vmem:[#allocation2 + $0x7c] sm:$0xf]
          %v901 = vld [vmem:[#allocation2 + $0x84] sm:$0xf]
          %v902 = vld [vmem:[#allocation2 + $0x88] sm:$0xf]
          %v903 = vld [vmem:[#allocation2 + $0x90] sm:$0xf]
          %v904 = vld [vmem:[#allocation2 + $0x94] sm:$0xf]
          %v905 = vld [vmem:[#allocation2 + $0x9c] sm:$0xf]
          %v906 = vld [vmem:[#allocation2 + $0xa0] sm:$0xf]
          %v907 = vld [vmem:[#allocation2 + $0xa8] sm:$0xf]
          %v908 = vld [vmem:[#allocation2 + $0xac] sm:$0xf]
          %v909 = vld [vmem:[#allocation2 + $0xb4] sm:$0xf]
          %v910 = vld [vmem:[#allocation2 + $0xb8] sm:$0xf]
          %v943 = vunpack.c.l.b16 %v879
          %v944 = vunpack.c.l.b16 %v880
          %v945 = vunpack.c.l.b16 %v881
          %v946 = vunpack.c.l.b16 %v882
          %v947 = vunpack.c.l.b16 %v883
          %v948 = vunpack.c.l.b16 %v884
          %v949 = vunpack.c.l.b16 %v885
          %v950 = vunpack.c.l.b16 %v886
          %v951 = vunpack.c.l.b16 %v887
          %v952 = vunpack.c.l.b16 %v888
          %v953 = vunpack.c.l.b16 %v889
          %v954 = vunpack.c.l.b16 %v890
          %v955 = vunpack.c.l.b16 %v891
          %v956 = vunpack.c.l.b16 %v892
          %v957 = vunpack.c.l.b16 %v893
          %v958 = vunpack.c.l.b16 %v894
          %v959 = vunpack.c.l.b16 %v895
          %v960 = vunpack.c.l.b16 %v896
          %v961 = vunpack.c.l.b16 %v897
          %v962 = vunpack.c.l.b16 %v898
          %v963 = vunpack.c.l.b16 %v899
          %v964 = vunpack.c.l.b16 %v900
          %v965 = vunpack.c.l.b16 %v901
          %v966 = vunpack.c.l.b16 %v902
          %v967 = vunpack.c.l.b16 %v903
          %v968 = vunpack.c.l.b16 %v904
          %v969 = vunpack.c.l.b16 %v905
          %v970 = vunpack.c.l.b16 %v906
          %v971 = vunpack.c.l.b16 %v907
          %v972 = vunpack.c.l.b16 %v908
          %v973 = vunpack.c.l.b16 %v909
          %v974 = vunpack.c.l.b16 %v910
          %v975 = vpack.c.b16 %v944, %v943
          %v976 = vpack.c.b16 %v946, %v945
          %v977 = vpack.c.b16 %v948, %v947
          %v978 = vpack.c.b16 %v950, %v949
          %v979 = vpack.c.b16 %v952, %v951
          %v980 = vpack.c.b16 %v954, %v953
          %v981 = vpack.c.b16 %v956, %v955
          %v982 = vpack.c.b16 %v958, %v957
          %v983 = vpack.c.b16 %v960, %v959
          %v984 = vpack.c.b16 %v962, %v961
          %v985 = vpack.c.b16 %v964, %v963
          %v986 = vpack.c.b16 %v966, %v965
          %v987 = vpack.c.b16 %v968, %v967
          %v988 = vpack.c.b16 %v970, %v969
          %v989 = vpack.c.b16 %v972, %v971
          %v990 = vpack.c.b16 %v974, %v973
          %vm1007 = vcmask 261120
          %1008 = vst.msk [vmem:[#allocation3] sm:$0xff] %vm1007, %v975
          %1009 = vst.msk [vmem:[#allocation3 + $0x18] sm:$0xff] %vm1007, %v976
          %1010 = vst.msk [vmem:[#allocation3 + $0x30] sm:$0xff] %vm1007, %v977
          %1011 = vst.msk [vmem:[#allocation3 + $0x48] sm:$0xff] %vm1007, %v978
          %1012 = vst.msk [vmem:[#allocation3 + $0x60] sm:$0xff] %vm1007, %v979
          %1013 = vst.msk [vmem:[#allocation3 + $0x78] sm:$0xff] %vm1007, %v980
          %1014 = vst.msk [vmem:[#allocation3 + $0x90] sm:$0xff] %vm1007, %v981
          %1015 = vst.msk [vmem:[#allocation3 + $0xa8] sm:$0xff] %vm1007, %v982
          %1016 = vst.msk [vmem:[#allocation3 + $0xc0] sm:$0xff] %vm1007, %v983
          %1017 = vst.msk [vmem:[#allocation3 + $0xd8] sm:$0xff] %vm1007, %v984
          %1018 = vst.msk [vmem:[#allocation3 + $0xf0] sm:$0xff] %vm1007, %v985
          %1019 = vst.msk [vmem:[#allocation3 + $0x108] sm:$0xff] %vm1007, %v986
          %1020 = vst.msk [vmem:[#allocation3 + $0x120] sm:$0xff] %vm1007, %v987
          %1021 = vst.msk [vmem:[#allocation3 + $0x138] sm:$0xff] %vm1007, %v988
          %1022 = vst.msk [vmem:[#allocation3 + $0x150] sm:$0xff] %vm1007, %v989
          %1023 = vst.msk [vmem:[#allocation3 + $0x168] sm:$0xff] %vm1007, %v990
          %v1024 = vld [vmem:[#allocation2] sm:$0xf]
          %v1025 = vld [vmem:[#allocation2 + $0x4] sm:$0xf]
          %v1026 = vld [vmem:[#allocation2 + $0x8] sm:$0x1]
          %v1027 = vld [vmem:[#allocation2 + $0xc] sm:$0xf]
          %v1028 = vld [vmem:[#allocation2 + $0x10] sm:$0xf]
          %v1029 = vld [vmem:[#allocation2 + $0x14] sm:$0x1]
          %v1030 = vld [vmem:[#allocation2 + $0x18] sm:$0xf]
          %v1031 = vld [vmem:[#allocation2 + $0x1c] sm:$0xf]
          %v1032 = vld [vmem:[#allocation2 + $0x20] sm:$0x1]
          %v1033 = vld [vmem:[#allocation2 + $0x24] sm:$0xf]
          %v1034 = vld [vmem:[#allocation2 + $0x28] sm:$0xf]
          %v1035 = vld [vmem:[#allocation2 + $0x2c] sm:$0x1]
          %v1036 = vld [vmem:[#allocation2 + $0x30] sm:$0xf]
          %v1037 = vld [vmem:[#allocation2 + $0x34] sm:$0xf]
          %v1038 = vld [vmem:[#allocation2 + $0x38] sm:$0x1]
          %v1039 = vld [vmem:[#allocation2 + $0x3c] sm:$0xf]
          %v1040 = vld [vmem:[#allocation2 + $0x40] sm:$0xf]
          %v1041 = vld [vmem:[#allocation2 + $0x44] sm:$0x1]
          %v1042 = vld [vmem:[#allocation2 + $0x48] sm:$0xf]
          %v1043 = vld [vmem:[#allocation2 + $0x4c] sm:$0xf]
          %v1044 = vld [vmem:[#allocation2 + $0x50] sm:$0x1]
          %v1045 = vld [vmem:[#allocation2 + $0x54] sm:$0xf]
          %v1046 = vld [vmem:[#allocation2 + $0x58] sm:$0xf]
          %v1047 = vld [vmem:[#allocation2 + $0x5c] sm:$0x1]
          %v1048 = vld [vmem:[#allocation2 + $0x60] sm:$0xf]
          %v1049 = vld [vmem:[#allocation2 + $0x64] sm:$0xf]
          %v1050 = vld [vmem:[#allocation2 + $0x68] sm:$0x1]
          %v1051 = vld [vmem:[#allocation2 + $0x6c] sm:$0xf]
          %v1052 = vld [vmem:[#allocation2 + $0x70] sm:$0xf]
          %v1053 = vld [vmem:[#allocation2 + $0x74] sm:$0x1]
          %v1054 = vld [vmem:[#allocation2 + $0x78] sm:$0xf]
          %v1055 = vld [vmem:[#allocation2 + $0x7c] sm:$0xf]
          %v1056 = vld [vmem:[#allocation2 + $0x80] sm:$0x1]
          %v1057 = vld [vmem:[#allocation2 + $0x84] sm:$0xf]
          %v1058 = vld [vmem:[#allocation2 + $0x88] sm:$0xf]
          %v1059 = vld [vmem:[#allocation2 + $0x8c] sm:$0x1]
          %v1060 = vld [vmem:[#allocation2 + $0x90] sm:$0xf]
          %v1061 = vld [vmem:[#allocation2 + $0x94] sm:$0xf]
          %v1062 = vld [vmem:[#allocation2 + $0x98] sm:$0x1]
          %v1063 = vld [vmem:[#allocation2 + $0x9c] sm:$0xf]
          %v1064 = vld [vmem:[#allocation2 + $0xa0] sm:$0xf]
          %v1065 = vld [vmem:[#allocation2 + $0xa4] sm:$0x1]
          %v1066 = vld [vmem:[#allocation2 + $0xa8] sm:$0xf]
          %v1067 = vld [vmem:[#allocation2 + $0xac] sm:$0xf]
          %v1068 = vld [vmem:[#allocation2 + $0xb0] sm:$0x1]
          %v1069 = vld [vmem:[#allocation2 + $0xb4] sm:$0xf]
          %v1070 = vld [vmem:[#allocation2 + $0xb8] sm:$0xf]
          %v1071 = vld [vmem:[#allocation2 + $0xbc] sm:$0x1]
          %v1120 = vunpack.c.l.b16 %v1024
          %v1121 = vunpack.c.l.b16 %v1025
          %v1122 = vunpack.c.l.b16 %v1026
          %v1123 = vunpack.c.l.b16 %v1027
          %v1124 = vunpack.c.l.b16 %v1028
          %v1125 = vunpack.c.l.b16 %v1029
          %v1126 = vunpack.c.l.b16 %v1030
          %v1127 = vunpack.c.l.b16 %v1031
          %v1128 = vunpack.c.l.b16 %v1032
          %v1129 = vunpack.c.l.b16 %v1033
          %v1130 = vunpack.c.l.b16 %v1034
          %v1131 = vunpack.c.l.b16 %v1035
          %v1132 = vunpack.c.l.b16 %v1036
          %v1133 = vunpack.c.l.b16 %v1037
          %v1134 = vunpack.c.l.b16 %v1038
          %v1135 = vunpack.c.l.b16 %v1039
          %v1136 = vunpack.c.l.b16 %v1040
          %v1137 = vunpack.c.l.b16 %v1041
          %v1138 = vunpack.c.l.b16 %v1042
          %v1139 = vunpack.c.l.b16 %v1043
          %v1140 = vunpack.c.l.b16 %v1044
          %v1141 = vunpack.c.l.b16 %v1045
          %v1142 = vunpack.c.l.b16 %v1046
          %v1143 = vunpack.c.l.b16 %v1047
          %v1144 = vunpack.c.l.b16 %v1048
          %v1145 = vunpack.c.l.b16 %v1049
          %v1146 = vunpack.c.l.b16 %v1050
          %v1147 = vunpack.c.l.b16 %v1051
          %v1148 = vunpack.c.l.b16 %v1052
          %v1149 = vunpack.c.l.b16 %v1053
          %v1150 = vunpack.c.l.b16 %v1054
          %v1151 = vunpack.c.l.b16 %v1055
          %v1152 = vunpack.c.l.b16 %v1056
          %v1153 = vunpack.c.l.b16 %v1057
          %v1154 = vunpack.c.l.b16 %v1058
          %v1155 = vunpack.c.l.b16 %v1059
          %v1156 = vunpack.c.l.b16 %v1060
          %v1157 = vunpack.c.l.b16 %v1061
          %v1158 = vunpack.c.l.b16 %v1062
          %v1159 = vunpack.c.l.b16 %v1063
          %v1160 = vunpack.c.l.b16 %v1064
          %v1161 = vunpack.c.l.b16 %v1065
          %v1162 = vunpack.c.l.b16 %v1066
          %v1163 = vunpack.c.l.b16 %v1067
          %v1164 = vunpack.c.l.b16 %v1068
          %v1165 = vunpack.c.l.b16 %v1069
          %v1166 = vunpack.c.l.b16 %v1070
          %v1167 = vunpack.c.l.b16 %v1071
          %v1168 = vpack.c.b16 %v1121, %v1120
          %v1169 = vpack.c.b16 %v1122, %v1122
          %v1170 = vpack.c.b16 %v1124, %v1123
          %v1171 = vpack.c.b16 %v1125, %v1125
          %v1172 = vpack.c.b16 %v1127, %v1126
          %v1173 = vpack.c.b16 %v1128, %v1128
          %v1174 = vpack.c.b16 %v1130, %v1129
          %v1175 = vpack.c.b16 %v1131, %v1131
          %v1176 = vpack.c.b16 %v1133, %v1132
          %v1177 = vpack.c.b16 %v1134, %v1134
          %v1178 = vpack.c.b16 %v1136, %v1135
          %v1179 = vpack.c.b16 %v1137, %v1137
          %v1180 = vpack.c.b16 %v1139, %v1138
          %v1181 = vpack.c.b16 %v1140, %v1140
          %v1182 = vpack.c.b16 %v1142, %v1141
          %v1183 = vpack.c.b16 %v1143, %v1143
          %v1184 = vpack.c.b16 %v1145, %v1144
          %v1185 = vpack.c.b16 %v1146, %v1146
          %v1186 = vpack.c.b16 %v1148, %v1147
          %v1187 = vpack.c.b16 %v1149, %v1149
          %v1188 = vpack.c.b16 %v1151, %v1150
          %v1189 = vpack.c.b16 %v1152, %v1152
          %v1190 = vpack.c.b16 %v1154, %v1153
          %v1191 = vpack.c.b16 %v1155, %v1155
          %v1192 = vpack.c.b16 %v1157, %v1156
          %v1193 = vpack.c.b16 %v1158, %v1158
          %v1194 = vpack.c.b16 %v1160, %v1159
          %v1195 = vpack.c.b16 %v1161, %v1161
          %v1196 = vpack.c.b16 %v1163, %v1162
          %v1197 = vpack.c.b16 %v1164, %v1164
          %v1198 = vpack.c.b16 %v1166, %v1165
          %v1199 = vpack.c.b16 %v1167, %v1167
          %vm1200 = vsmask.f32 7424
          %v1202 = vshrl.u32 %v1168, 16
          %v1204 = vshll.u32 %v1168, 16
          %v1206 = vrot.slane %v1204, 1
          %v1207 = vor.u32 %v1202, %v1206
          %v1209 = vshll.u32 %v1169, 16
          %v1211 = vrot.slane %v1209, 1
          %v1212 = vsel %vm1200, %v1207, %v1211
          %v1214 = vshrl.u32 %v1170, 16
          %v1216 = vshll.u32 %v1170, 16
          %v1218 = vrot.slane %v1216, 1
          %v1219 = vor.u32 %v1214, %v1218
          %v1221 = vshll.u32 %v1171, 16
          %v1223 = vrot.slane %v1221, 1
          %v1224 = vsel %vm1200, %v1219, %v1223
          %v1226 = vshrl.u32 %v1172, 16
          %v1228 = vshll.u32 %v1172, 16
          %v1230 = vrot.slane %v1228, 1
          %v1231 = vor.u32 %v1226, %v1230
          %v1233 = vshll.u32 %v1173, 16
          %v1235 = vrot.slane %v1233, 1
          %v1236 = vsel %vm1200, %v1231, %v1235
          %v1238 = vshrl.u32 %v1174, 16
          %v1240 = vshll.u32 %v1174, 16
          %v1242 = vrot.slane %v1240, 1
          %v1243 = vor.u32 %v1238, %v1242
          %v1245 = vshll.u32 %v1175, 16
          %v1247 = vrot.slane %v1245, 1
          %v1248 = vsel %vm1200, %v1243, %v1247
          %v1250 = vshrl.u32 %v1176, 16
          %v1252 = vshll.u32 %v1176, 16
          %v1254 = vrot.slane %v1252, 1
          %v1255 = vor.u32 %v1250, %v1254
          %v1257 = vshll.u32 %v1177, 16
          %v1259 = vrot.slane %v1257, 1
          %v1260 = vsel %vm1200, %v1255, %v1259
          %v1262 = vshrl.u32 %v1178, 16
          %v1264 = vshll.u32 %v1178, 16
          %v1266 = vrot.slane %v1264, 1
          %v1267 = vor.u32 %v1262, %v1266
          %v1269 = vshll.u32 %v1179, 16
          %v1271 = vrot.slane %v1269, 1
          %v1272 = vsel %vm1200, %v1267, %v1271
          %v1274 = vshrl.u32 %v1180, 16
          %v1276 = vshll.u32 %v1180, 16
          %v1278 = vrot.slane %v1276, 1
          %v1279 = vor.u32 %v1274, %v1278
          %v1281 = vshll.u32 %v1181, 16
          %v1283 = vrot.slane %v1281, 1
          %v1284 = vsel %vm1200, %v1279, %v1283
          %v1286 = vshrl.u32 %v1182, 16
          %v1288 = vshll.u32 %v1182, 16
          %v1290 = vrot.slane %v1288, 1
          %v1291 = vor.u32 %v1286, %v1290
          %v1293 = vshll.u32 %v1183, 16
          %v1295 = vrot.slane %v1293, 1
          %v1296 = vsel %vm1200, %v1291, %v1295
          %v1298 = vshrl.u32 %v1184, 16
          %v1300 = vshll.u32 %v1184, 16
          %v1302 = vrot.slane %v1300, 1
          %v1303 = vor.u32 %v1298, %v1302
          %v1305 = vshll.u32 %v1185, 16
          %v1307 = vrot.slane %v1305, 1
          %v1308 = vsel %vm1200, %v1303, %v1307
          %v1310 = vshrl.u32 %v1186, 16
          %v1312 = vshll.u32 %v1186, 16
          %v1314 = vrot.slane %v1312, 1
          %v1315 = vor.u32 %v1310, %v1314
          %v1317 = vshll.u32 %v1187, 16
          %v1319 = vrot.slane %v1317, 1
          %v1320 = vsel %vm1200, %v1315, %v1319
          %v1322 = vshrl.u32 %v1188, 16
          %v1324 = vshll.u32 %v1188, 16
          %v1326 = vrot.slane %v1324, 1
          %v1327 = vor.u32 %v1322, %v1326
          %v1329 = vshll.u32 %v1189, 16
          %v1331 = vrot.slane %v1329, 1
          %v1332 = vsel %vm1200, %v1327, %v1331
          %v1334 = vshrl.u32 %v1190, 16
          %v1336 = vshll.u32 %v1190, 16
          %v1338 = vrot.slane %v1336, 1
          %v1339 = vor.u32 %v1334, %v1338
          %v1341 = vshll.u32 %v1191, 16
          %v1343 = vrot.slane %v1341, 1
          %v1344 = vsel %vm1200, %v1339, %v1343
          %v1346 = vshrl.u32 %v1192, 16
          %v1348 = vshll.u32 %v1192, 16
          %v1350 = vrot.slane %v1348, 1
          %v1351 = vor.u32 %v1346, %v1350
          %v1353 = vshll.u32 %v1193, 16
          %v1355 = vrot.slane %v1353, 1
          %v1356 = vsel %vm1200, %v1351, %v1355
          %v1358 = vshrl.u32 %v1194, 16
          %v1360 = vshll.u32 %v1194, 16
          %v1362 = vrot.slane %v1360, 1
          %v1363 = vor.u32 %v1358, %v1362
          %v1365 = vshll.u32 %v1195, 16
          %v1367 = vrot.slane %v1365, 1
          %v1368 = vsel %vm1200, %v1363, %v1367
          %v1370 = vshrl.u32 %v1196, 16
          %v1372 = vshll.u32 %v1196, 16
          %v1374 = vrot.slane %v1372, 1
          %v1375 = vor.u32 %v1370, %v1374
          %v1377 = vshll.u32 %v1197, 16
          %v1379 = vrot.slane %v1377, 1
          %v1380 = vsel %vm1200, %v1375, %v1379
          %v1382 = vshrl.u32 %v1198, 16
          %v1384 = vshll.u32 %v1198, 16
          %v1386 = vrot.slane %v1384, 1
          %v1387 = vor.u32 %v1382, %v1386
          %v1389 = vshll.u32 %v1199, 16
          %v1391 = vrot.slane %v1389, 1
          %v1392 = vsel %vm1200, %v1387, %v1391
          %1393 = vrot.lane.b32.xlu0 %v1212, 32
          %v1394 = vpop.permute.xlu0 %1393
          %1395 = vrot.lane.b32.xlu0 %v1224, 32
          %v1396 = vpop.permute.xlu0 %1395
          %1397 = vrot.lane.b32.xlu0 %v1236, 32
          %v1398 = vpop.permute.xlu0 %1397
          %1399 = vrot.lane.b32.xlu0 %v1248, 32
          %v1400 = vpop.permute.xlu0 %1399
          %1401 = vrot.lane.b32.xlu0 %v1260, 32
          %v1402 = vpop.permute.xlu0 %1401
          %1403 = vrot.lane.b32.xlu0 %v1272, 32
          %v1404 = vpop.permute.xlu0 %1403
          %1405 = vrot.lane.b32.xlu0 %v1284, 32
          %v1406 = vpop.permute.xlu0 %1405
          %1407 = vrot.lane.b32.xlu0 %v1296, 32
          %v1408 = vpop.permute.xlu0 %1407
          %1409 = vrot.lane.b32.xlu0 %v1308, 32
          %v1410 = vpop.permute.xlu0 %1409
          %1411 = vrot.lane.b32.xlu0 %v1320, 32
          %v1412 = vpop.permute.xlu0 %1411
          %1413 = vrot.lane.b32.xlu0 %v1332, 32
          %v1414 = vpop.permute.xlu0 %1413
          %1415 = vrot.lane.b32.xlu0 %v1344, 32
          %v1416 = vpop.permute.xlu0 %1415
          %1417 = vrot.lane.b32.xlu0 %v1356, 32
          %v1418 = vpop.permute.xlu0 %1417
          %1419 = vrot.lane.b32.xlu0 %v1368, 32
          %v1420 = vpop.permute.xlu0 %1419
          %1421 = vrot.lane.b32.xlu0 %v1380, 32
          %v1422 = vpop.permute.xlu0 %1421
          %1423 = vrot.lane.b32.xlu0 %v1392, 32
          %v1424 = vpop.permute.xlu0 %1423
          %vm1441 = vcmask 523520
          %1442 = vst.msk [vmem:[#allocation3] sm:$0xff] %vm1441, %v1394
          %1443 = vst.msk [vmem:[#allocation3 + $0x18] sm:$0xff] %vm1441, %v1396
          %1444 = vst.msk [vmem:[#allocation3 + $0x30] sm:$0xff] %vm1441, %v1398
          %1445 = vst.msk [vmem:[#allocation3 + $0x48] sm:$0xff] %vm1441, %v1400
          %1446 = vst.msk [vmem:[#allocation3 + $0x60] sm:$0xff] %vm1441, %v1402
          %1447 = vst.msk [vmem:[#allocation3 + $0x78] sm:$0xff] %vm1441, %v1404
          %1448 = vst.msk [vmem:[#allocation3 + $0x90] sm:$0xff] %vm1441, %v1406
          %1449 = vst.msk [vmem:[#allocation3 + $0xa8] sm:$0xff] %vm1441, %v1408
          %1450 = vst.msk [vmem:[#allocation3 + $0xc0] sm:$0xff] %vm1441, %v1410
          %1451 = vst.msk [vmem:[#allocation3 + $0xd8] sm:$0xff] %vm1441, %v1412
          %1452 = vst.msk [vmem:[#allocation3 + $0xf0] sm:$0xff] %vm1441, %v1414
          %1453 = vst.msk [vmem:[#allocation3 + $0x108] sm:$0xff] %vm1441, %v1416
          %1454 = vst.msk [vmem:[#allocation3 + $0x120] sm:$0xff] %vm1441, %v1418
          %1455 = vst.msk [vmem:[#allocation3 + $0x138] sm:$0xff] %vm1441, %v1420
          %1456 = vst.msk [vmem:[#allocation3 + $0x150] sm:$0xff] %vm1441, %v1422
          %1457 = vst.msk [vmem:[#allocation3 + $0x168] sm:$0xff] %vm1441, %v1424
          %v1458 = vld [vmem:[#allocation2] sm:$0xe]
          %v1459 = vld [vmem:[#allocation2 + $0x4] sm:$0xf]
          %v1460 = vld [vmem:[#allocation2 + $0x8] sm:$0x1]
          %v1461 = vld [vmem:[#allocation2 + $0xc] sm:$0xe]
          %v1462 = vld [vmem:[#allocation2 + $0x10] sm:$0xf]
          %v1463 = vld [vmem:[#allocation2 + $0x14] sm:$0x1]
          %v1464 = vld [vmem:[#allocation2 + $0x18] sm:$0xe]
          %v1465 = vld [vmem:[#allocation2 + $0x1c] sm:$0xf]
          %v1466 = vld [vmem:[#allocation2 + $0x20] sm:$0x1]
          %v1467 = vld [vmem:[#allocation2 + $0x24] sm:$0xe]
          %v1468 = vld [vmem:[#allocation2 + $0x28] sm:$0xf]
          %v1469 = vld [vmem:[#allocation2 + $0x2c] sm:$0x1]
          %v1470 = vld [vmem:[#allocation2 + $0x30] sm:$0xe]
          %v1471 = vld [vmem:[#allocation2 + $0x34] sm:$0xf]
          %v1472 = vld [vmem:[#allocation2 + $0x38] sm:$0x1]
          %v1473 = vld [vmem:[#allocation2 + $0x3c] sm:$0xe]
          %v1474 = vld [vmem:[#allocation2 + $0x40] sm:$0xf]
          %v1475 = vld [vmem:[#allocation2 + $0x44] sm:$0x1]
          %v1476 = vld [vmem:[#allocation2 + $0x48] sm:$0xe]
          %v1477 = vld [vmem:[#allocation2 + $0x4c] sm:$0xf]
          %v1478 = vld [vmem:[#allocation2 + $0x50] sm:$0x1]
          %v1479 = vld [vmem:[#allocation2 + $0x54] sm:$0xe]
          %v1480 = vld [vmem:[#allocation2 + $0x58] sm:$0xf]
          %v1481 = vld [vmem:[#allocation2 + $0x5c] sm:$0x1]
          %v1482 = vld [vmem:[#allocation2 + $0x60] sm:$0xe]
          %v1483 = vld [vmem:[#allocation2 + $0x64] sm:$0xf]
          %v1484 = vld [vmem:[#allocation2 + $0x68] sm:$0x1]
          %v1485 = vld [vmem:[#allocation2 + $0x6c] sm:$0xe]
          %v1486 = vld [vmem:[#allocation2 + $0x70] sm:$0xf]
          %v1487 = vld [vmem:[#allocation2 + $0x74] sm:$0x1]
          %v1488 = vld [vmem:[#allocation2 + $0x78] sm:$0xe]
          %v1489 = vld [vmem:[#allocation2 + $0x7c] sm:$0xf]
          %v1490 = vld [vmem:[#allocation2 + $0x80] sm:$0x1]
          %v1491 = vld [vmem:[#allocation2 + $0x84] sm:$0xe]
          %v1492 = vld [vmem:[#allocation2 + $0x88] sm:$0xf]
          %v1493 = vld [vmem:[#allocation2 + $0x8c] sm:$0x1]
          %v1494 = vld [vmem:[#allocation2 + $0x90] sm:$0xe]
          %v1495 = vld [vmem:[#allocation2 + $0x94] sm:$0xf]
          %v1496 = vld [vmem:[#allocation2 + $0x98] sm:$0x1]
          %v1497 = vld [vmem:[#allocation2 + $0x9c] sm:$0xe]
          %v1498 = vld [vmem:[#allocation2 + $0xa0] sm:$0xf]
          %v1499 = vld [vmem:[#allocation2 + $0xa4] sm:$0x1]
          %v1500 = vld [vmem:[#allocation2 + $0xa8] sm:$0xe]
          %v1501 = vld [vmem:[#allocation2 + $0xac] sm:$0xf]
          %v1502 = vld [vmem:[#allocation2 + $0xb0] sm:$0x1]
          %v1503 = vld [vmem:[#allocation2 + $0xb4] sm:$0xe]
          %v1504 = vld [vmem:[#allocation2 + $0xb8] sm:$0xf]
          %v1505 = vld [vmem:[#allocation2 + $0xbc] sm:$0x1]
          %v1554 = vunpack.c.l.b16 %v1458
          %v1555 = vunpack.c.l.b16 %v1459
          %v1556 = vunpack.c.l.b16 %v1460
          %v1557 = vunpack.c.l.b16 %v1461
          %v1558 = vunpack.c.l.b16 %v1462
          %v1559 = vunpack.c.l.b16 %v1463
          %v1560 = vunpack.c.l.b16 %v1464
          %v1561 = vunpack.c.l.b16 %v1465
          %v1562 = vunpack.c.l.b16 %v1466
          %v1563 = vunpack.c.l.b16 %v1467
          %v1564 = vunpack.c.l.b16 %v1468
          %v1565 = vunpack.c.l.b16 %v1469
          %v1566 = vunpack.c.l.b16 %v1470
          %v1567 = vunpack.c.l.b16 %v1471
          %v1568 = vunpack.c.l.b16 %v1472
          %v1569 = vunpack.c.l.b16 %v1473
          %v1570 = vunpack.c.l.b16 %v1474
          %v1571 = vunpack.c.l.b16 %v1475
          %v1572 = vunpack.c.l.b16 %v1476
          %v1573 = vunpack.c.l.b16 %v1477
          %v1574 = vunpack.c.l.b16 %v1478
          %v1575 = vunpack.c.l.b16 %v1479
          %v1576 = vunpack.c.l.b16 %v1480
          %v1577 = vunpack.c.l.b16 %v1481
          %v1578 = vunpack.c.l.b16 %v1482
          %v1579 = vunpack.c.l.b16 %v1483
          %v1580 = vunpack.c.l.b16 %v1484
          %v1581 = vunpack.c.l.b16 %v1485
          %v1582 = vunpack.c.l.b16 %v1486
          %v1583 = vunpack.c.l.b16 %v1487
          %v1584 = vunpack.c.l.b16 %v1488
          %v1585 = vunpack.c.l.b16 %v1489
          %v1586 = vunpack.c.l.b16 %v1490
          %v1587 = vunpack.c.l.b16 %v1491
          %v1588 = vunpack.c.l.b16 %v1492
          %v1589 = vunpack.c.l.b16 %v1493
          %v1590 = vunpack.c.l.b16 %v1494
          %v1591 = vunpack.c.l.b16 %v1495
          %v1592 = vunpack.c.l.b16 %v1496
          %v1593 = vunpack.c.l.b16 %v1497
          %v1594 = vunpack.c.l.b16 %v1498
          %v1595 = vunpack.c.l.b16 %v1499
          %v1596 = vunpack.c.l.b16 %v1500
          %v1597 = vunpack.c.l.b16 %v1501
          %v1598 = vunpack.c.l.b16 %v1502
          %v1599 = vunpack.c.l.b16 %v1503
          %v1600 = vunpack.c.l.b16 %v1504
          %v1601 = vunpack.c.l.b16 %v1505
          %v1602 = vpack.c.b16 %v1555, %v1554
          %v1603 = vpack.c.b16 %v1556, %v1556
          %v1604 = vpack.c.b16 %v1558, %v1557
          %v1605 = vpack.c.b16 %v1559, %v1559
          %v1606 = vpack.c.b16 %v1561, %v1560
          %v1607 = vpack.c.b16 %v1562, %v1562
          %v1608 = vpack.c.b16 %v1564, %v1563
          %v1609 = vpack.c.b16 %v1565, %v1565
          %v1610 = vpack.c.b16 %v1567, %v1566
          %v1611 = vpack.c.b16 %v1568, %v1568
          %v1612 = vpack.c.b16 %v1570, %v1569
          %v1613 = vpack.c.b16 %v1571, %v1571
          %v1614 = vpack.c.b16 %v1573, %v1572
          %v1615 = vpack.c.b16 %v1574, %v1574
          %v1616 = vpack.c.b16 %v1576, %v1575
          %v1617 = vpack.c.b16 %v1577, %v1577
          %v1618 = vpack.c.b16 %v1579, %v1578
          %v1619 = vpack.c.b16 %v1580, %v1580
          %v1620 = vpack.c.b16 %v1582, %v1581
          %v1621 = vpack.c.b16 %v1583, %v1583
          %v1622 = vpack.c.b16 %v1585, %v1584
          %v1623 = vpack.c.b16 %v1586, %v1586
          %v1624 = vpack.c.b16 %v1588, %v1587
          %v1625 = vpack.c.b16 %v1589, %v1589
          %v1626 = vpack.c.b16 %v1591, %v1590
          %v1627 = vpack.c.b16 %v1592, %v1592
          %v1628 = vpack.c.b16 %v1594, %v1593
          %v1629 = vpack.c.b16 %v1595, %v1595
          %v1630 = vpack.c.b16 %v1597, %v1596
          %v1631 = vpack.c.b16 %v1598, %v1598
          %v1632 = vpack.c.b16 %v1600, %v1599
          %v1633 = vpack.c.b16 %v1601, %v1601
          %vm1634 = vcmask 1046528
          %v1635 = vrot.slane %v1602, 1
          %v1636 = vrot.slane %v1603, 1
          %v1637 = vsel %vm1634, %v1635, %v1636
          %v1638 = vrot.slane %v1604, 1
          %v1639 = vrot.slane %v1605, 1
          %v1640 = vsel %vm1634, %v1638, %v1639
          %v1641 = vrot.slane %v1606, 1
          %v1642 = vrot.slane %v1607, 1
          %v1643 = vsel %vm1634, %v1641, %v1642
          %v1644 = vrot.slane %v1608, 1
          %v1645 = vrot.slane %v1609, 1
          %v1646 = vsel %vm1634, %v1644, %v1645
          %v1647 = vrot.slane %v1610, 1
          %v1648 = vrot.slane %v1611, 1
          %v1649 = vsel %vm1634, %v1647, %v1648
          %v1650 = vrot.slane %v1612, 1
          %v1651 = vrot.slane %v1613, 1
          %v1652 = vsel %vm1634, %v1650, %v1651
          %v1653 = vrot.slane %v1614, 1
          %v1654 = vrot.slane %v1615, 1
          %v1655 = vsel %vm1634, %v1653, %v1654
          %v1656 = vrot.slane %v1616, 1
          %v1657 = vrot.slane %v1617, 1
          %v1658 = vsel %vm1634, %v1656, %v1657
          %v1659 = vrot.slane %v1618, 1
          %v1660 = vrot.slane %v1619, 1
          %v1661 = vsel %vm1634, %v1659, %v1660
          %v1662 = vrot.slane %v1620, 1
          %v1663 = vrot.slane %v1621, 1
          %v1664 = vsel %vm1634, %v1662, %v1663
          %v1665 = vrot.slane %v1622, 1
          %v1666 = vrot.slane %v1623, 1
          %v1667 = vsel %vm1634, %v1665, %v1666
          %v1668 = vrot.slane %v1624, 1
          %v1669 = vrot.slane %v1625, 1
          %v1670 = vsel %vm1634, %v1668, %v1669
          %v1671 = vrot.slane %v1626, 1
          %v1672 = vrot.slane %v1627, 1
          %v1673 = vsel %vm1634, %v1671, %v1672
          %v1674 = vrot.slane %v1628, 1
          %v1675 = vrot.slane %v1629, 1
          %v1676 = vsel %vm1634, %v1674, %v1675
          %v1677 = vrot.slane %v1630, 1
          %v1678 = vrot.slane %v1631, 1
          %v1679 = vsel %vm1634, %v1677, %v1678
          %v1680 = vrot.slane %v1632, 1
          %v1681 = vrot.slane %v1633, 1
          %v1682 = vsel %vm1634, %v1680, %v1681
          %1683 = vrot.lane.b32.xlu0 %v1637, 64
          %v1684 = vpop.permute.xlu0 %1683
          %1685 = vrot.lane.b32.xlu0 %v1640, 64
          %v1686 = vpop.permute.xlu0 %1685
          %1687 = vrot.lane.b32.xlu0 %v1643, 64
          %v1688 = vpop.permute.xlu0 %1687
          %1689 = vrot.lane.b32.xlu0 %v1646, 64
          %v1690 = vpop.permute.xlu0 %1689
          %1691 = vrot.lane.b32.xlu0 %v1649, 64
          %v1692 = vpop.permute.xlu0 %1691
          %1693 = vrot.lane.b32.xlu0 %v1652, 64
          %v1694 = vpop.permute.xlu0 %1693
          %1695 = vrot.lane.b32.xlu0 %v1655, 64
          %v1696 = vpop.permute.xlu0 %1695
          %1697 = vrot.lane.b32.xlu0 %v1658, 64
          %v1698 = vpop.permute.xlu0 %1697
          %1699 = vrot.lane.b32.xlu0 %v1661, 64
          %v1700 = vpop.permute.xlu0 %1699
          %1701 = vrot.lane.b32.xlu0 %v1664, 64
          %v1702 = vpop.permute.xlu0 %1701
          %1703 = vrot.lane.b32.xlu0 %v1667, 64
          %v1704 = vpop.permute.xlu0 %1703
          %1705 = vrot.lane.b32.xlu0 %v1670, 64
          %v1706 = vpop.permute.xlu0 %1705
          %1707 = vrot.lane.b32.xlu0 %v1673, 64
          %v1708 = vpop.permute.xlu0 %1707
          %1709 = vrot.lane.b32.xlu0 %v1676, 64
          %v1710 = vpop.permute.xlu0 %1709
          %1711 = vrot.lane.b32.xlu0 %v1679, 64
          %v1712 = vpop.permute.xlu0 %1711
          %1713 = vrot.lane.b32.xlu0 %v1682, 64
          %v1714 = vpop.permute.xlu0 %1713
          %vm1731 = vcmask 785920
          %1732 = vst.msk [vmem:[#allocation3] sm:$0xff] %vm1731, %v1684
          %1733 = vst.msk [vmem:[#allocation3 + $0x18] sm:$0xff] %vm1731, %v1686
          %1734 = vst.msk [vmem:[#allocation3 + $0x30] sm:$0xff] %vm1731, %v1688
          %1735 = vst.msk [vmem:[#allocation3 + $0x48] sm:$0xff] %vm1731, %v1690
          %1736 = vst.msk [vmem:[#allocation3 + $0x60] sm:$0xff] %vm1731, %v1692
          %1737 = vst.msk [vmem:[#allocation3 + $0x78] sm:$0xff] %vm1731, %v1694
          %1738 = vst.msk [vmem:[#allocation3 + $0x90] sm:$0xff] %vm1731, %v1696
          %1739 = vst.msk [vmem:[#allocation3 + $0xa8] sm:$0xff] %vm1731, %v1698
          %1740 = vst.msk [vmem:[#allocation3 + $0xc0] sm:$0xff] %vm1731, %v1700
          %1741 = vst.msk [vmem:[#allocation3 + $0xd8] sm:$0xff] %vm1731, %v1702
          %1742 = vst.msk [vmem:[#allocation3 + $0xf0] sm:$0xff] %vm1731, %v1704
          %1743 = vst.msk [vmem:[#allocation3 + $0x108] sm:$0xff] %vm1731, %v1706
          %1744 = vst.msk [vmem:[#allocation3 + $0x120] sm:$0xff] %vm1731, %v1708
          %1745 = vst.msk [vmem:[#allocation3 + $0x138] sm:$0xff] %vm1731, %v1710
          %1746 = vst.msk [vmem:[#allocation3 + $0x150] sm:$0xff] %vm1731, %v1712
          %1747 = vst.msk [vmem:[#allocation3 + $0x168] sm:$0xff] %vm1731, %v1714
          %v1748 = vld [vmem:[%s713] sm:$0xf]
          %v1749 = vld [vmem:[%s713 + $0x4] sm:$0xf]
          %v1750 = vld [vmem:[%s713 + $0xc] sm:$0xf]
          %v1751 = vld [vmem:[%s713 + $0x10] sm:$0xf]
          %v1752 = vld [vmem:[%s713 + $0x18] sm:$0xf]
          %v1753 = vld [vmem:[%s713 + $0x1c] sm:$0xf]
          %v1754 = vld [vmem:[%s713 + $0x24] sm:$0xf]
          %v1755 = vld [vmem:[%s713 + $0x28] sm:$0xf]
          %v1756 = vld [vmem:[%s713 + $0x30] sm:$0xf]
          %v1757 = vld [vmem:[%s713 + $0x34] sm:$0xf]
          %v1758 = vld [vmem:[%s713 + $0x3c] sm:$0xf]
          %v1759 = vld [vmem:[%s713 + $0x40] sm:$0xf]
          %v1760 = vld [vmem:[%s713 + $0x48] sm:$0xf]
          %v1761 = vld [vmem:[%s713 + $0x4c] sm:$0xf]
          %v1762 = vld [vmem:[%s713 + $0x54] sm:$0xf]
          %v1763 = vld [vmem:[%s713 + $0x58] sm:$0xf]
          %v1764 = vld [vmem:[%s713 + $0x60] sm:$0xf]
          %v1765 = vld [vmem:[%s713 + $0x64] sm:$0xf]
          %v1766 = vld [vmem:[%s713 + $0x6c] sm:$0xf]
          %v1767 = vld [vmem:[%s713 + $0x70] sm:$0xf]
          %v1768 = vld [vmem:[%s713 + $0x78] sm:$0xf]
          %v1769 = vld [vmem:[%s713 + $0x7c] sm:$0xf]
          %v1770 = vld [vmem:[%s713 + $0x84] sm:$0xf]
          %v1771 = vld [vmem:[%s713 + $0x88] sm:$0xf]
          %v1772 = vld [vmem:[%s713 + $0x90] sm:$0xf]
          %v1773 = vld [vmem:[%s713 + $0x94] sm:$0xf]
          %v1774 = vld [vmem:[%s713 + $0x9c] sm:$0xf]
          %v1775 = vld [vmem:[%s713 + $0xa0] sm:$0xf]
          %v1776 = vld [vmem:[%s713 + $0xa8] sm:$0xf]
          %v1777 = vld [vmem:[%s713 + $0xac] sm:$0xf]
          %v1778 = vld [vmem:[%s713 + $0xb4] sm:$0xf]
          %v1779 = vld [vmem:[%s713 + $0xb8] sm:$0xf]
          %v1812 = vunpack.c.l.b16 %v1748
          %v1813 = vunpack.c.l.b16 %v1749
          %v1814 = vunpack.c.l.b16 %v1750
          %v1815 = vunpack.c.l.b16 %v1751
          %v1816 = vunpack.c.l.b16 %v1752
          %v1817 = vunpack.c.l.b16 %v1753
          %v1818 = vunpack.c.l.b16 %v1754
          %v1819 = vunpack.c.l.b16 %v1755
          %v1820 = vunpack.c.l.b16 %v1756
          %v1821 = vunpack.c.l.b16 %v1757
          %v1822 = vunpack.c.l.b16 %v1758
          %v1823 = vunpack.c.l.b16 %v1759
          %v1824 = vunpack.c.l.b16 %v1760
          %v1825 = vunpack.c.l.b16 %v1761
          %v1826 = vunpack.c.l.b16 %v1762
          %v1827 = vunpack.c.l.b16 %v1763
          %v1828 = vunpack.c.l.b16 %v1764
          %v1829 = vunpack.c.l.b16 %v1765
          %v1830 = vunpack.c.l.b16 %v1766
          %v1831 = vunpack.c.l.b16 %v1767
          %v1832 = vunpack.c.l.b16 %v1768
          %v1833 = vunpack.c.l.b16 %v1769
          %v1834 = vunpack.c.l.b16 %v1770
          %v1835 = vunpack.c.l.b16 %v1771
          %v1836 = vunpack.c.l.b16 %v1772
          %v1837 = vunpack.c.l.b16 %v1773
          %v1838 = vunpack.c.l.b16 %v1774
          %v1839 = vunpack.c.l.b16 %v1775
          %v1840 = vunpack.c.l.b16 %v1776
          %v1841 = vunpack.c.l.b16 %v1777
          %v1842 = vunpack.c.l.b16 %v1778
          %v1843 = vunpack.c.l.b16 %v1779
          %v1844 = vpack.c.b16 %v1813, %v1812
          %v1845 = vpack.c.b16 %v1815, %v1814
          %v1846 = vpack.c.b16 %v1817, %v1816
          %v1847 = vpack.c.b16 %v1819, %v1818
          %v1848 = vpack.c.b16 %v1821, %v1820
          %v1849 = vpack.c.b16 %v1823, %v1822
          %v1850 = vpack.c.b16 %v1825, %v1824
          %v1851 = vpack.c.b16 %v1827, %v1826
          %v1852 = vpack.c.b16 %v1829, %v1828
          %v1853 = vpack.c.b16 %v1831, %v1830
          %v1854 = vpack.c.b16 %v1833, %v1832
          %v1855 = vpack.c.b16 %v1835, %v1834
          %v1856 = vpack.c.b16 %v1837, %v1836
          %v1857 = vpack.c.b16 %v1839, %v1838
          %v1858 = vpack.c.b16 %v1841, %v1840
          %v1859 = vpack.c.b16 %v1843, %v1842
          %1860 = vrot.lane.b32.xlu0 %v1844, 96
          %v1861 = vpop.permute.xlu0 %1860
          %1862 = vrot.lane.b32.xlu0 %v1845, 96
          %v1863 = vpop.permute.xlu0 %1862
          %1864 = vrot.lane.b32.xlu0 %v1846, 96
          %v1865 = vpop.permute.xlu0 %1864
          %1866 = vrot.lane.b32.xlu0 %v1847, 96
          %v1867 = vpop.permute.xlu0 %1866
          %1868 = vrot.lane.b32.xlu0 %v1848, 96
          %v1869 = vpop.permute.xlu0 %1868
          %1870 = vrot.lane.b32.xlu0 %v1849, 96
          %v1871 = vpop.permute.xlu0 %1870
          %1872 = vrot.lane.b32.xlu0 %v1850, 96
          %v1873 = vpop.permute.xlu0 %1872
          %1874 = vrot.lane.b32.xlu0 %v1851, 96
          %v1875 = vpop.permute.xlu0 %1874
          %1876 = vrot.lane.b32.xlu0 %v1852, 96
          %v1877 = vpop.permute.xlu0 %1876
          %1878 = vrot.lane.b32.xlu0 %v1853, 96
          %v1879 = vpop.permute.xlu0 %1878
          %1880 = vrot.lane.b32.xlu0 %v1854, 96
          %v1881 = vpop.permute.xlu0 %1880
          %1882 = vrot.lane.b32.xlu0 %v1855, 96
          %v1883 = vpop.permute.xlu0 %1882
          %1884 = vrot.lane.b32.xlu0 %v1856, 96
          %v1885 = vpop.permute.xlu0 %1884
          %1886 = vrot.lane.b32.xlu0 %v1857, 96
          %v1887 = vpop.permute.xlu0 %1886
          %1888 = vrot.lane.b32.xlu0 %v1858, 96
          %v1889 = vpop.permute.xlu0 %1888
          %1890 = vrot.lane.b32.xlu0 %v1859, 96
          %v1891 = vpop.permute.xlu0 %1890
          %vm1908 = vcmask 1048320
          %1909 = vst.msk [vmem:[#allocation3] sm:$0xff] %vm1908, %v1861
          %1910 = vst.msk [vmem:[#allocation3 + $0x18] sm:$0xff] %vm1908, %v1863
          %1911 = vst.msk [vmem:[#allocation3 + $0x30] sm:$0xff] %vm1908, %v1865
          %1912 = vst.msk [vmem:[#allocation3 + $0x48] sm:$0xff] %vm1908, %v1867
          %1913 = vst.msk [vmem:[#allocation3 + $0x60] sm:$0xff] %vm1908, %v1869
          %1914 = vst.msk [vmem:[#allocation3 + $0x78] sm:$0xff] %vm1908, %v1871
          %1915 = vst.msk [vmem:[#allocation3 + $0x90] sm:$0xff] %vm1908, %v1873
          %1916 = vst.msk [vmem:[#allocation3 + $0xa8] sm:$0xff] %vm1908, %v1875
          %1917 = vst.msk [vmem:[#allocation3 + $0xc0] sm:$0xff] %vm1908, %v1877
          %1918 = vst.msk [vmem:[#allocation3 + $0xd8] sm:$0xff] %vm1908, %v1879
          %1919 = vst.msk [vmem:[#allocation3 + $0xf0] sm:$0xff] %vm1908, %v1881
          %1920 = vst.msk [vmem:[#allocation3 + $0x108] sm:$0xff] %vm1908, %v1883
          %1921 = vst.msk [vmem:[#allocation3 + $0x120] sm:$0xff] %vm1908, %v1885
          %1922 = vst.msk [vmem:[#allocation3 + $0x138] sm:$0xff] %vm1908, %v1887
          %1923 = vst.msk [vmem:[#allocation3 + $0x150] sm:$0xff] %vm1908, %v1889
          %1924 = vst.msk [vmem:[#allocation3 + $0x168] sm:$0xff] %vm1908, %v1891
          %v1925 = vld [vmem:[%s713] sm:$0xf]
          %v1926 = vld [vmem:[%s713 + $0x4] sm:$0xf]
          %v1927 = vld [vmem:[%s713 + $0x8] sm:$0x1]
          %v1928 = vld [vmem:[%s713 + $0xc] sm:$0xf]
          %v1929 = vld [vmem:[%s713 + $0x10] sm:$0xf]
          %v1930 = vld [vmem:[%s713 + $0x14] sm:$0x1]
          %v1931 = vld [vmem:[%s713 + $0x18] sm:$0xf]
          %v1932 = vld [vmem:[%s713 + $0x1c] sm:$0xf]
          %v1933 = vld [vmem:[%s713 + $0x20] sm:$0x1]
          %v1934 = vld [vmem:[%s713 + $0x24] sm:$0xf]
          %v1935 = vld [vmem:[%s713 + $0x28] sm:$0xf]
          %v1936 = vld [vmem:[%s713 + $0x2c] sm:$0x1]
          %v1937 = vld [vmem:[%s713 + $0x30] sm:$0xf]
          %v1938 = vld [vmem:[%s713 + $0x34] sm:$0xf]
          %v1939 = vld [vmem:[%s713 + $0x38] sm:$0x1]
          %v1940 = vld [vmem:[%s713 + $0x3c] sm:$0xf]
          %v1941 = vld [vmem:[%s713 + $0x40] sm:$0xf]
          %v1942 = vld [vmem:[%s713 + $0x44] sm:$0x1]
          %v1943 = vld [vmem:[%s713 + $0x48] sm:$0xf]
          %v1944 = vld [vmem:[%s713 + $0x4c] sm:$0xf]
          %v1945 = vld [vmem:[%s713 + $0x50] sm:$0x1]
          %v1946 = vld [vmem:[%s713 + $0x54] sm:$0xf]
          %v1947 = vld [vmem:[%s713 + $0x58] sm:$0xf]
          %v1948 = vld [vmem:[%s713 + $0x5c] sm:$0x1]
          %v1949 = vld [vmem:[%s713 + $0x60] sm:$0xf]
          %v1950 = vld [vmem:[%s713 + $0x64] sm:$0xf]
          %v1951 = vld [vmem:[%s713 + $0x68] sm:$0x1]
          %v1952 = vld [vmem:[%s713 + $0x6c] sm:$0xf]
          %v1953 = vld [vmem:[%s713 + $0x70] sm:$0xf]
          %v1954 = vld [vmem:[%s713 + $0x74] sm:$0x1]
          %v1955 = vld [vmem:[%s713 + $0x78] sm:$0xf]
          %v1956 = vld [vmem:[%s713 + $0x7c] sm:$0xf]
          %v1957 = vld [vmem:[%s713 + $0x80] sm:$0x1]
          %v1958 = vld [vmem:[%s713 + $0x84] sm:$0xf]
          %v1959 = vld [vmem:[%s713 + $0x88] sm:$0xf]
          %v1960 = vld [vmem:[%s713 + $0x8c] sm:$0x1]
          %v1961 = vld [vmem:[%s713 + $0x90] sm:$0xf]
          %v1962 = vld [vmem:[%s713 + $0x94] sm:$0xf]
          %v1963 = vld [vmem:[%s713 + $0x98] sm:$0x1]
          %v1964 = vld [vmem:[%s713 + $0x9c] sm:$0xf]
          %v1965 = vld [vmem:[%s713 + $0xa0] sm:$0xf]
          %v1966 = vld [vmem:[%s713 + $0xa4] sm:$0x1]
          %v1967 = vld [vmem:[%s713 + $0xa8] sm:$0xf]
          %v1968 = vld [vmem:[%s713 + $0xac] sm:$0xf]
          %v1969 = vld [vmem:[%s713 + $0xb0] sm:$0x1]
          %v1970 = vld [vmem:[%s713 + $0xb4] sm:$0xf]
          %v1971 = vld [vmem:[%s713 + $0xb8] sm:$0xf]
          %v1972 = vld [vmem:[%s713 + $0xbc] sm:$0x1]
          %v2021 = vunpack.c.l.b16 %v1925
          %v2022 = vunpack.c.l.b16 %v1926
          %v2023 = vunpack.c.l.b16 %v1927
          %v2024 = vunpack.c.l.b16 %v1928
          %v2025 = vunpack.c.l.b16 %v1929
          %v2026 = vunpack.c.l.b16 %v1930
          %v2027 = vunpack.c.l.b16 %v1931
          %v2028 = vunpack.c.l.b16 %v1932
          %v2029 = vunpack.c.l.b16 %v1933
          %v2030 = vunpack.c.l.b16 %v1934
          %v2031 = vunpack.c.l.b16 %v1935
          %v2032 = vunpack.c.l.b16 %v1936
          %v2033 = vunpack.c.l.b16 %v1937
          %v2034 = vunpack.c.l.b16 %v1938
          %v2035 = vunpack.c.l.b16 %v1939
          %v2036 = vunpack.c.l.b16 %v1940
          %v2037 = vunpack.c.l.b16 %v1941
          %v2038 = vunpack.c.l.b16 %v1942
          %v2039 = vunpack.c.l.b16 %v1943
          %v2040 = vunpack.c.l.b16 %v1944
          %v2041 = vunpack.c.l.b16 %v1945
          %v2042 = vunpack.c.l.b16 %v1946
          %v2043 = vunpack.c.l.b16 %v1947
          %v2044 = vunpack.c.l.b16 %v1948
          %v2045 = vunpack.c.l.b16 %v1949
          %v2046 = vunpack.c.l.b16 %v1950
          %v2047 = vunpack.c.l.b16 %v1951
          %v2048 = vunpack.c.l.b16 %v1952
          %v2049 = vunpack.c.l.b16 %v1953
          %v2050 = vunpack.c.l.b16 %v1954
          %v2051 = vunpack.c.l.b16 %v1955
          %v2052 = vunpack.c.l.b16 %v1956
          %v2053 = vunpack.c.l.b16 %v1957
          %v2054 = vunpack.c.l.b16 %v1958
          %v2055 = vunpack.c.l.b16 %v1959
          %v2056 = vunpack.c.l.b16 %v1960
          %v2057 = vunpack.c.l.b16 %v1961
          %v2058 = vunpack.c.l.b16 %v1962
          %v2059 = vunpack.c.l.b16 %v1963
          %v2060 = vunpack.c.l.b16 %v1964
          %v2061 = vunpack.c.l.b16 %v1965
          %v2062 = vunpack.c.l.b16 %v1966
          %v2063 = vunpack.c.l.b16 %v1967
          %v2064 = vunpack.c.l.b16 %v1968
          %v2065 = vunpack.c.l.b16 %v1969
          %v2066 = vunpack.c.l.b16 %v1970
          %v2067 = vunpack.c.l.b16 %v1971
          %v2068 = vunpack.c.l.b16 %v1972
          %v2069 = vpack.c.b16 %v2022, %v2021
          %v2070 = vpack.c.b16 %v2023, %v2023
          %v2071 = vpack.c.b16 %v2025, %v2024
          %v2072 = vpack.c.b16 %v2026, %v2026
          %v2073 = vpack.c.b16 %v2028, %v2027
          %v2074 = vpack.c.b16 %v2029, %v2029
          %v2075 = vpack.c.b16 %v2031, %v2030
          %v2076 = vpack.c.b16 %v2032, %v2032
          %v2077 = vpack.c.b16 %v2034, %v2033
          %v2078 = vpack.c.b16 %v2035, %v2035
          %v2079 = vpack.c.b16 %v2037, %v2036
          %v2080 = vpack.c.b16 %v2038, %v2038
          %v2081 = vpack.c.b16 %v2040, %v2039
          %v2082 = vpack.c.b16 %v2041, %v2041
          %v2083 = vpack.c.b16 %v2043, %v2042
          %v2084 = vpack.c.b16 %v2044, %v2044
          %v2085 = vpack.c.b16 %v2046, %v2045
          %v2086 = vpack.c.b16 %v2047, %v2047
          %v2087 = vpack.c.b16 %v2049, %v2048
          %v2088 = vpack.c.b16 %v2050, %v2050
          %v2089 = vpack.c.b16 %v2052, %v2051
          %v2090 = vpack.c.b16 %v2053, %v2053
          %v2091 = vpack.c.b16 %v2055, %v2054
          %v2092 = vpack.c.b16 %v2056, %v2056
          %v2093 = vpack.c.b16 %v2058, %v2057
          %v2094 = vpack.c.b16 %v2059, %v2059
          %v2095 = vpack.c.b16 %v2061, %v2060
          %v2096 = vpack.c.b16 %v2062, %v2062
          %v2097 = vpack.c.b16 %v2064, %v2063
          %v2098 = vpack.c.b16 %v2065, %v2065
          %v2099 = vpack.c.b16 %v2067, %v2066
          %v2100 = vpack.c.b16 %v2068, %v2068
          %v2102 = vshrl.u32 %v2069, 16
          %v2104 = vshll.u32 %v2069, 16
          %v2106 = vrot.slane %v2104, 1
          %v2107 = vor.u32 %v2102, %v2106
          %v2109 = vshll.u32 %v2070, 16
          %v2111 = vrot.slane %v2109, 1
          %v2112 = vsel %vm1200, %v2107, %v2111
          %v2114 = vshrl.u32 %v2071, 16
          %v2116 = vshll.u32 %v2071, 16
          %v2118 = vrot.slane %v2116, 1
          %v2119 = vor.u32 %v2114, %v2118
          %v2121 = vshll.u32 %v2072, 16
          %v2123 = vrot.slane %v2121, 1
          %v2124 = vsel %vm1200, %v2119, %v2123
          %v2126 = vshrl.u32 %v2073, 16
          %v2128 = vshll.u32 %v2073, 16
          %v2130 = vrot.slane %v2128, 1
          %v2131 = vor.u32 %v2126, %v2130
          %v2133 = vshll.u32 %v2074, 16
          %v2135 = vrot.slane %v2133, 1
          %v2136 = vsel %vm1200, %v2131, %v2135
          %v2138 = vshrl.u32 %v2075, 16
          %v2140 = vshll.u32 %v2075, 16
          %v2142 = vrot.slane %v2140, 1
          %v2143 = vor.u32 %v2138, %v2142
          %v2145 = vshll.u32 %v2076, 16
          %v2147 = vrot.slane %v2145, 1
          %v2148 = vsel %vm1200, %v2143, %v2147
          %v2150 = vshrl.u32 %v2077, 16
          %v2152 = vshll.u32 %v2077, 16
          %v2154 = vrot.slane %v2152, 1
          %v2155 = vor.u32 %v2150, %v2154
          %v2157 = vshll.u32 %v2078, 16
          %v2159 = vrot.slane %v2157, 1
          %v2160 = vsel %vm1200, %v2155, %v2159
          %v2162 = vshrl.u32 %v2079, 16
          %v2164 = vshll.u32 %v2079, 16
          %v2166 = vrot.slane %v2164, 1
          %v2167 = vor.u32 %v2162, %v2166
          %v2169 = vshll.u32 %v2080, 16
          %v2171 = vrot.slane %v2169, 1
          %v2172 = vsel %vm1200, %v2167, %v2171
          %v2174 = vshrl.u32 %v2081, 16
          %v2176 = vshll.u32 %v2081, 16
          %v2178 = vrot.slane %v2176, 1
          %v2179 = vor.u32 %v2174, %v2178
          %v2181 = vshll.u32 %v2082, 16
          %v2183 = vrot.slane %v2181, 1
          %v2184 = vsel %vm1200, %v2179, %v2183
          %v2186 = vshrl.u32 %v2083, 16
          %v2188 = vshll.u32 %v2083, 16
          %v2190 = vrot.slane %v2188, 1
          %v2191 = vor.u32 %v2186, %v2190
          %v2193 = vshll.u32 %v2084, 16
          %v2195 = vrot.slane %v2193, 1
          %v2196 = vsel %vm1200, %v2191, %v2195
          %v2198 = vshrl.u32 %v2085, 16
          %v2200 = vshll.u32 %v2085, 16
          %v2202 = vrot.slane %v2200, 1
          %v2203 = vor.u32 %v2198, %v2202
          %v2205 = vshll.u32 %v2086, 16
          %v2207 = vrot.slane %v2205, 1
          %v2208 = vsel %vm1200, %v2203, %v2207
          %v2210 = vshrl.u32 %v2087, 16
          %v2212 = vshll.u32 %v2087, 16
          %v2214 = vrot.slane %v2212, 1
          %v2215 = vor.u32 %v2210, %v2214
          %v2217 = vshll.u32 %v2088, 16
          %v2219 = vrot.slane %v2217, 1
          %v2220 = vsel %vm1200, %v2215, %v2219
          %v2222 = vshrl.u32 %v2089, 16
          %v2224 = vshll.u32 %v2089, 16
          %v2226 = vrot.slane %v2224, 1
          %v2227 = vor.u32 %v2222, %v2226
          %v2229 = vshll.u32 %v2090, 16
          %v2231 = vrot.slane %v2229, 1
          %v2232 = vsel %vm1200, %v2227, %v2231
          %v2234 = vshrl.u32 %v2091, 16
          %v2236 = vshll.u32 %v2091, 16
          %v2238 = vrot.slane %v2236, 1
          %v2239 = vor.u32 %v2234, %v2238
          %v2241 = vshll.u32 %v2092, 16
          %v2243 = vrot.slane %v2241, 1
          %v2244 = vsel %vm1200, %v2239, %v2243
          %v2246 = vshrl.u32 %v2093, 16
          %v2248 = vshll.u32 %v2093, 16
          %v2250 = vrot.slane %v2248, 1
          %v2251 = vor.u32 %v2246, %v2250
          %v2253 = vshll.u32 %v2094, 16
          %v2255 = vrot.slane %v2253, 1
          %v2256 = vsel %vm1200, %v2251, %v2255
          %v2258 = vshrl.u32 %v2095, 16
          %v2260 = vshll.u32 %v2095, 16
          %v2262 = vrot.slane %v2260, 1
          %v2263 = vor.u32 %v2258, %v2262
          %v2265 = vshll.u32 %v2096, 16
          %v2267 = vrot.slane %v2265, 1
          %v2268 = vsel %vm1200, %v2263, %v2267
          %v2270 = vshrl.u32 %v2097, 16
          %v2272 = vshll.u32 %v2097, 16
          %v2274 = vrot.slane %v2272, 1
          %v2275 = vor.u32 %v2270, %v2274
          %v2277 = vshll.u32 %v2098, 16
          %v2279 = vrot.slane %v2277, 1
          %v2280 = vsel %vm1200, %v2275, %v2279
          %v2282 = vshrl.u32 %v2099, 16
          %v2284 = vshll.u32 %v2099, 16
          %v2286 = vrot.slane %v2284, 1
          %v2287 = vor.u32 %v2282, %v2286
          %v2289 = vshll.u32 %v2100, 16
          %v2291 = vrot.slane %v2289, 1
          %v2292 = vsel %vm1200, %v2287, %v2291
          %2309 = vst.msk [vmem:[#allocation3 + $0x8] sm:$0xff] %vm1007, %v2112
          %2310 = vst.msk [vmem:[#allocation3 + $0x20] sm:$0xff] %vm1007, %v2124
          %2311 = vst.msk [vmem:[#allocation3 + $0x38] sm:$0xff] %vm1007, %v2136
          %2312 = vst.msk [vmem:[#allocation3 + $0x50] sm:$0xff] %vm1007, %v2148
          %2313 = vst.msk [vmem:[#allocation3 + $0x68] sm:$0xff] %vm1007, %v2160
          %2314 = vst.msk [vmem:[#allocation3 + $0x80] sm:$0xff] %vm1007, %v2172
          %2315 = vst.msk [vmem:[#allocation3 + $0x98] sm:$0xff] %vm1007, %v2184
          %2316 = vst.msk [vmem:[#allocation3 + $0xb0] sm:$0xff] %vm1007, %v2196
          %2317 = vst.msk [vmem:[#allocation3 + $0xc8] sm:$0xff] %vm1007, %v2208
          %2318 = vst.msk [vmem:[#allocation3 + $0xe0] sm:$0xff] %vm1007, %v2220
          %2319 = vst.msk [vmem:[#allocation3 + $0xf8] sm:$0xff] %vm1007, %v2232
          %2320 = vst.msk [vmem:[#allocation3 + $0x110] sm:$0xff] %vm1007, %v2244
          %2321 = vst.msk [vmem:[#allocation3 + $0x128] sm:$0xff] %vm1007, %v2256
          %2322 = vst.msk [vmem:[#allocation3 + $0x140] sm:$0xff] %vm1007, %v2268
          %2323 = vst.msk [vmem:[#allocation3 + $0x158] sm:$0xff] %vm1007, %v2280
          %2324 = vst.msk [vmem:[#allocation3 + $0x170] sm:$0xff] %vm1007, %v2292
          %v2325 = vld [vmem:[%s713] sm:$0xe]
          %v2326 = vld [vmem:[%s713 + $0x4] sm:$0xf]
          %v2327 = vld [vmem:[%s713 + $0x8] sm:$0x1]
          %v2328 = vld [vmem:[%s713 + $0xc] sm:$0xe]
          %v2329 = vld [vmem:[%s713 + $0x10] sm:$0xf]
          %v2330 = vld [vmem:[%s713 + $0x14] sm:$0x1]
          %v2331 = vld [vmem:[%s713 + $0x18] sm:$0xe]
          %v2332 = vld [vmem:[%s713 + $0x1c] sm:$0xf]
          %v2333 = vld [vmem:[%s713 + $0x20] sm:$0x1]
          %v2334 = vld [vmem:[%s713 + $0x24] sm:$0xe]
          %v2335 = vld [vmem:[%s713 + $0x28] sm:$0xf]
          %v2336 = vld [vmem:[%s713 + $0x2c] sm:$0x1]
          %v2337 = vld [vmem:[%s713 + $0x30] sm:$0xe]
          %v2338 = vld [vmem:[%s713 + $0x34] sm:$0xf]
          %v2339 = vld [vmem:[%s713 + $0x38] sm:$0x1]
          %v2340 = vld [vmem:[%s713 + $0x3c] sm:$0xe]
          %v2341 = vld [vmem:[%s713 + $0x40] sm:$0xf]
          %v2342 = vld [vmem:[%s713 + $0x44] sm:$0x1]
          %v2343 = vld [vmem:[%s713 + $0x48] sm:$0xe]
          %v2344 = vld [vmem:[%s713 + $0x4c] sm:$0xf]
          %v2345 = vld [vmem:[%s713 + $0x50] sm:$0x1]
          %v2346 = vld [vmem:[%s713 + $0x54] sm:$0xe]
          %v2347 = vld [vmem:[%s713 + $0x58] sm:$0xf]
          %v2348 = vld [vmem:[%s713 + $0x5c] sm:$0x1]
          %v2349 = vld [vmem:[%s713 + $0x60] sm:$0xe]
          %v2350 = vld [vmem:[%s713 + $0x64] sm:$0xf]
          %v2351 = vld [vmem:[%s713 + $0x68] sm:$0x1]
          %v2352 = vld [vmem:[%s713 + $0x6c] sm:$0xe]
          %v2353 = vld [vmem:[%s713 + $0x70] sm:$0xf]
          %v2354 = vld [vmem:[%s713 + $0x74] sm:$0x1]
          %v2355 = vld [vmem:[%s713 + $0x78] sm:$0xe]
          %v2356 = vld [vmem:[%s713 + $0x7c] sm:$0xf]
          %v2357 = vld [vmem:[%s713 + $0x80] sm:$0x1]
          %v2358 = vld [vmem:[%s713 + $0x84] sm:$0xe]
          %v2359 = vld [vmem:[%s713 + $0x88] sm:$0xf]
          %v2360 = vld [vmem:[%s713 + $0x8c] sm:$0x1]
          %v2361 = vld [vmem:[%s713 + $0x90] sm:$0xe]
          %v2362 = vld [vmem:[%s713 + $0x94] sm:$0xf]
          %v2363 = vld [vmem:[%s713 + $0x98] sm:$0x1]
          %v2364 = vld [vmem:[%s713 + $0x9c] sm:$0xe]
          %v2365 = vld [vmem:[%s713 + $0xa0] sm:$0xf]
          %v2366 = vld [vmem:[%s713 + $0xa4] sm:$0x1]
          %v2367 = vld [vmem:[%s713 + $0xa8] sm:$0xe]
          %v2368 = vld [vmem:[%s713 + $0xac] sm:$0xf]
          %v2369 = vld [vmem:[%s713 + $0xb0] sm:$0x1]
          %v2370 = vld [vmem:[%s713 + $0xb4] sm:$0xe]
          %v2371 = vld [vmem:[%s713 + $0xb8] sm:$0xf]
          %v2372 = vld [vmem:[%s713 + $0xbc] sm:$0x1]
          %v2421 = vunpack.c.l.b16 %v2325
          %v2422 = vunpack.c.l.b16 %v2326
          %v2423 = vunpack.c.l.b16 %v2327
          %v2424 = vunpack.c.l.b16 %v2328
          %v2425 = vunpack.c.l.b16 %v2329
          %v2426 = vunpack.c.l.b16 %v2330
          %v2427 = vunpack.c.l.b16 %v2331
          %v2428 = vunpack.c.l.b16 %v2332
          %v2429 = vunpack.c.l.b16 %v2333
          %v2430 = vunpack.c.l.b16 %v2334
          %v2431 = vunpack.c.l.b16 %v2335
          %v2432 = vunpack.c.l.b16 %v2336
          %v2433 = vunpack.c.l.b16 %v2337
          %v2434 = vunpack.c.l.b16 %v2338
          %v2435 = vunpack.c.l.b16 %v2339
          %v2436 = vunpack.c.l.b16 %v2340
          %v2437 = vunpack.c.l.b16 %v2341
          %v2438 = vunpack.c.l.b16 %v2342
          %v2439 = vunpack.c.l.b16 %v2343
          %v2440 = vunpack.c.l.b16 %v2344
          %v2441 = vunpack.c.l.b16 %v2345
          %v2442 = vunpack.c.l.b16 %v2346
          %v2443 = vunpack.c.l.b16 %v2347
          %v2444 = vunpack.c.l.b16 %v2348
          %v2445 = vunpack.c.l.b16 %v2349
          %v2446 = vunpack.c.l.b16 %v2350
          %v2447 = vunpack.c.l.b16 %v2351
          %v2448 = vunpack.c.l.b16 %v2352
          %v2449 = vunpack.c.l.b16 %v2353
          %v2450 = vunpack.c.l.b16 %v2354
          %v2451 = vunpack.c.l.b16 %v2355
          %v2452 = vunpack.c.l.b16 %v2356
          %v2453 = vunpack.c.l.b16 %v2357
          %v2454 = vunpack.c.l.b16 %v2358
          %v2455 = vunpack.c.l.b16 %v2359
          %v2456 = vunpack.c.l.b16 %v2360
          %v2457 = vunpack.c.l.b16 %v2361
          %v2458 = vunpack.c.l.b16 %v2362
          %v2459 = vunpack.c.l.b16 %v2363
          %v2460 = vunpack.c.l.b16 %v2364
          %v2461 = vunpack.c.l.b16 %v2365
          %v2462 = vunpack.c.l.b16 %v2366
          %v2463 = vunpack.c.l.b16 %v2367
          %v2464 = vunpack.c.l.b16 %v2368
          %v2465 = vunpack.c.l.b16 %v2369
          %v2466 = vunpack.c.l.b16 %v2370
          %v2467 = vunpack.c.l.b16 %v2371
          %v2468 = vunpack.c.l.b16 %v2372
          %v2469 = vpack.c.b16 %v2422, %v2421
          %v2470 = vpack.c.b16 %v2423, %v2423
          %v2471 = vpack.c.b16 %v2425, %v2424
          %v2472 = vpack.c.b16 %v2426, %v2426
          %v2473 = vpack.c.b16 %v2428, %v2427
          %v2474 = vpack.c.b16 %v2429, %v2429
          %v2475 = vpack.c.b16 %v2431, %v2430
          %v2476 = vpack.c.b16 %v2432, %v2432
          %v2477 = vpack.c.b16 %v2434, %v2433
          %v2478 = vpack.c.b16 %v2435, %v2435
          %v2479 = vpack.c.b16 %v2437, %v2436
          %v2480 = vpack.c.b16 %v2438, %v2438
          %v2481 = vpack.c.b16 %v2440, %v2439
          %v2482 = vpack.c.b16 %v2441, %v2441
          %v2483 = vpack.c.b16 %v2443, %v2442
          %v2484 = vpack.c.b16 %v2444, %v2444
          %v2485 = vpack.c.b16 %v2446, %v2445
          %v2486 = vpack.c.b16 %v2447, %v2447
          %v2487 = vpack.c.b16 %v2449, %v2448
          %v2488 = vpack.c.b16 %v2450, %v2450
          %v2489 = vpack.c.b16 %v2452, %v2451
          %v2490 = vpack.c.b16 %v2453, %v2453
          %v2491 = vpack.c.b16 %v2455, %v2454
          %v2492 = vpack.c.b16 %v2456, %v2456
          %v2493 = vpack.c.b16 %v2458, %v2457
          %v2494 = vpack.c.b16 %v2459, %v2459
          %v2495 = vpack.c.b16 %v2461, %v2460
          %v2496 = vpack.c.b16 %v2462, %v2462
          %v2497 = vpack.c.b16 %v2464, %v2463
          %v2498 = vpack.c.b16 %v2465, %v2465
          %v2499 = vpack.c.b16 %v2467, %v2466
          %v2500 = vpack.c.b16 %v2468, %v2468
          %v2501 = vrot.slane %v2469, 1
          %v2502 = vrot.slane %v2470, 1
          %v2503 = vsel %vm1634, %v2501, %v2502
          %v2504 = vrot.slane %v2471, 1
          %v2505 = vrot.slane %v2472, 1
          %v2506 = vsel %vm1634, %v2504, %v2505
          %v2507 = vrot.slane %v2473, 1
          %v2508 = vrot.slane %v2474, 1
          %v2509 = vsel %vm1634, %v2507, %v2508
          %v2510 = vrot.slane %v2475, 1
          %v2511 = vrot.slane %v2476, 1
          %v2512 = vsel %vm1634, %v2510, %v2511
          %v2513 = vrot.slane %v2477, 1
          %v2514 = vrot.slane %v2478, 1
          %v2515 = vsel %vm1634, %v2513, %v2514
          %v2516 = vrot.slane %v2479, 1
          %v2517 = vrot.slane %v2480, 1
          %v2518 = vsel %vm1634, %v2516, %v2517
          %v2519 = vrot.slane %v2481, 1
          %v2520 = vrot.slane %v2482, 1
          %v2521 = vsel %vm1634, %v2519, %v2520
          %v2522 = vrot.slane %v2483, 1
          %v2523 = vrot.slane %v2484, 1
          %v2524 = vsel %vm1634, %v2522, %v2523
          %v2525 = vrot.slane %v2485, 1
          %v2526 = vrot.slane %v2486, 1
          %v2527 = vsel %vm1634, %v2525, %v2526
          %v2528 = vrot.slane %v2487, 1
          %v2529 = vrot.slane %v2488, 1
          %v2530 = vsel %vm1634, %v2528, %v2529
          %v2531 = vrot.slane %v2489, 1
          %v2532 = vrot.slane %v2490, 1
          %v2533 = vsel %vm1634, %v2531, %v2532
          %v2534 = vrot.slane %v2491, 1
          %v2535 = vrot.slane %v2492, 1
          %v2536 = vsel %vm1634, %v2534, %v2535
          %v2537 = vrot.slane %v2493, 1
          %v2538 = vrot.slane %v2494, 1
          %v2539 = vsel %vm1634, %v2537, %v2538
          %v2540 = vrot.slane %v2495, 1
          %v2541 = vrot.slane %v2496, 1
          %v2542 = vsel %vm1634, %v2540, %v2541
          %v2543 = vrot.slane %v2497, 1
          %v2544 = vrot.slane %v2498, 1
          %v2545 = vsel %vm1634, %v2543, %v2544
          %v2546 = vrot.slane %v2499, 1
          %v2547 = vrot.slane %v2500, 1
          %v2548 = vsel %vm1634, %v2546, %v2547
          %2549 = vrot.lane.b32.xlu0 %v2503, 32
          %v2550 = vpop.permute.xlu0 %2549
          %2551 = vrot.lane.b32.xlu0 %v2506, 32
          %v2552 = vpop.permute.xlu0 %2551
          %2553 = vrot.lane.b32.xlu0 %v2509, 32
          %v2554 = vpop.permute.xlu0 %2553
          %2555 = vrot.lane.b32.xlu0 %v2512, 32
          %v2556 = vpop.permute.xlu0 %2555
          %2557 = vrot.lane.b32.xlu0 %v2515, 32
          %v2558 = vpop.permute.xlu0 %2557
          %2559 = vrot.lane.b32.xlu0 %v2518, 32
          %v2560 = vpop.permute.xlu0 %2559
          %2561 = vrot.lane.b32.xlu0 %v2521, 32
          %v2562 = vpop.permute.xlu0 %2561
          %2563 = vrot.lane.b32.xlu0 %v2524, 32
          %v2564 = vpop.permute.xlu0 %2563
          %2565 = vrot.lane.b32.xlu0 %v2527, 32
          %v2566 = vpop.permute.xlu0 %2565
          %2567 = vrot.lane.b32.xlu0 %v2530, 32
          %v2568 = vpop.permute.xlu0 %2567
          %2569 = vrot.lane.b32.xlu0 %v2533, 32
          %v2570 = vpop.permute.xlu0 %2569
          %2571 = vrot.lane.b32.xlu0 %v2536, 32
          %v2572 = vpop.permute.xlu0 %2571
          %2573 = vrot.lane.b32.xlu0 %v2539, 32
          %v2574 = vpop.permute.xlu0 %2573
          %2575 = vrot.lane.b32.xlu0 %v2542, 32
          %v2576 = vpop.permute.xlu0 %2575
          %2577 = vrot.lane.b32.xlu0 %v2545, 32
          %v2578 = vpop.permute.xlu0 %2577
          %2579 = vrot.lane.b32.xlu0 %v2548, 32
          %v2580 = vpop.permute.xlu0 %2579
          %2597 = vst.msk [vmem:[#allocation3 + $0x8] sm:$0xff] %vm1441, %v2550
          %2598 = vst.msk [vmem:[#allocation3 + $0x20] sm:$0xff] %vm1441, %v2552
          %2599 = vst.msk [vmem:[#allocation3 + $0x38] sm:$0xff] %vm1441, %v2554
          %2600 = vst.msk [vmem:[#allocation3 + $0x50] sm:$0xff] %vm1441, %v2556
          %2601 = vst.msk [vmem:[#allocation3 + $0x68] sm:$0xff] %vm1441, %v2558
          %2602 = vst.msk [vmem:[#allocation3 + $0x80] sm:$0xff] %vm1441, %v2560
          %2603 = vst.msk [vmem:[#allocation3 + $0x98] sm:$0xff] %vm1441, %v2562
          %2604 = vst.msk [vmem:[#allocation3 + $0xb0] sm:$0xff] %vm1441, %v2564
          %2605 = vst.msk [vmem:[#allocation3 + $0xc8] sm:$0xff] %vm1441, %v2566
          %2606 = vst.msk [vmem:[#allocation3 + $0xe0] sm:$0xff] %vm1441, %v2568
          %2607 = vst.msk [vmem:[#allocation3 + $0xf8] sm:$0xff] %vm1441, %v2570
          %2608 = vst.msk [vmem:[#allocation3 + $0x110] sm:$0xff] %vm1441, %v2572
          %2609 = vst.msk [vmem:[#allocation3 + $0x128] sm:$0xff] %vm1441, %v2574
          %2610 = vst.msk [vmem:[#allocation3 + $0x140] sm:$0xff] %vm1441, %v2576
          %2611 = vst.msk [vmem:[#allocation3 + $0x158] sm:$0xff] %vm1441, %v2578
          %2612 = vst.msk [vmem:[#allocation3 + $0x170] sm:$0xff] %vm1441, %v2580
          %s2613 = scalar_lea.vmem [#allocation2], 24
          %v2614 = vld [vmem:[%s2613] sm:$0xf]
          %v2615 = vld [vmem:[%s2613 + $0x4] sm:$0xf]
          %v2616 = vld [vmem:[%s2613 + $0xc] sm:$0xf]
          %v2617 = vld [vmem:[%s2613 + $0x10] sm:$0xf]
          %v2618 = vld [vmem:[%s2613 + $0x18] sm:$0xf]
          %v2619 = vld [vmem:[%s2613 + $0x1c] sm:$0xf]
          %v2620 = vld [vmem:[%s2613 + $0x24] sm:$0xf]
          %v2621 = vld [vmem:[%s2613 + $0x28] sm:$0xf]
          %v2622 = vld [vmem:[%s2613 + $0x30] sm:$0xf]
          %v2623 = vld [vmem:[%s2613 + $0x34] sm:$0xf]
          %v2624 = vld [vmem:[%s2613 + $0x3c] sm:$0xf]
          %v2625 = vld [vmem:[%s2613 + $0x40] sm:$0xf]
          %v2626 = vld [vmem:[%s2613 + $0x48] sm:$0xf]
          %v2627 = vld [vmem:[%s2613 + $0x4c] sm:$0xf]
          %v2628 = vld [vmem:[%s2613 + $0x54] sm:$0xf]
          %v2629 = vld [vmem:[%s2613 + $0x58] sm:$0xf]
          %v2630 = vld [vmem:[%s2613 + $0x60] sm:$0xf]
          %v2631 = vld [vmem:[%s2613 + $0x64] sm:$0xf]
          %v2632 = vld [vmem:[%s2613 + $0x6c] sm:$0xf]
          %v2633 = vld [vmem:[%s2613 + $0x70] sm:$0xf]
          %v2634 = vld [vmem:[%s2613 + $0x78] sm:$0xf]
          %v2635 = vld [vmem:[%s2613 + $0x7c] sm:$0xf]
          %v2636 = vld [vmem:[%s2613 + $0x84] sm:$0xf]
          %v2637 = vld [vmem:[%s2613 + $0x88] sm:$0xf]
          %v2638 = vld [vmem:[%s2613 + $0x90] sm:$0xf]
          %v2639 = vld [vmem:[%s2613 + $0x94] sm:$0xf]
          %v2640 = vld [vmem:[%s2613 + $0x9c] sm:$0xf]
          %v2641 = vld [vmem:[%s2613 + $0xa0] sm:$0xf]
          %v2642 = vld [vmem:[%s2613 + $0xa8] sm:$0xf]
          %v2643 = vld [vmem:[%s2613 + $0xac] sm:$0xf]
          %v2644 = vld [vmem:[%s2613 + $0xb4] sm:$0xf]
          %v2645 = vld [vmem:[%s2613 + $0xb8] sm:$0xf]
          %v2678 = vunpack.c.l.b16 %v2614
          %v2679 = vunpack.c.l.b16 %v2615
          %v2680 = vunpack.c.l.b16 %v2616
          %v2681 = vunpack.c.l.b16 %v2617
          %v2682 = vunpack.c.l.b16 %v2618
          %v2683 = vunpack.c.l.b16 %v2619
          %v2684 = vunpack.c.l.b16 %v2620
          %v2685 = vunpack.c.l.b16 %v2621
          %v2686 = vunpack.c.l.b16 %v2622
          %v2687 = vunpack.c.l.b16 %v2623
          %v2688 = vunpack.c.l.b16 %v2624
          %v2689 = vunpack.c.l.b16 %v2625
          %v2690 = vunpack.c.l.b16 %v2626
          %v2691 = vunpack.c.l.b16 %v2627
          %v2692 = vunpack.c.l.b16 %v2628
          %v2693 = vunpack.c.l.b16 %v2629
          %v2694 = vunpack.c.l.b16 %v2630
          %v2695 = vunpack.c.l.b16 %v2631
          %v2696 = vunpack.c.l.b16 %v2632
          %v2697 = vunpack.c.l.b16 %v2633
          %v2698 = vunpack.c.l.b16 %v2634
          %v2699 = vunpack.c.l.b16 %v2635
          %v2700 = vunpack.c.l.b16 %v2636
          %v2701 = vunpack.c.l.b16 %v2637
          %v2702 = vunpack.c.l.b16 %v2638
          %v2703 = vunpack.c.l.b16 %v2639
          %v2704 = vunpack.c.l.b16 %v2640
          %v2705 = vunpack.c.l.b16 %v2641
          %v2706 = vunpack.c.l.b16 %v2642
          %v2707 = vunpack.c.l.b16 %v2643
          %v2708 = vunpack.c.l.b16 %v2644
          %v2709 = vunpack.c.l.b16 %v2645
          %v2710 = vpack.c.b16 %v2679, %v2678
          %v2711 = vpack.c.b16 %v2681, %v2680
          %v2712 = vpack.c.b16 %v2683, %v2682
          %v2713 = vpack.c.b16 %v2685, %v2684
          %v2714 = vpack.c.b16 %v2687, %v2686
          %v2715 = vpack.c.b16 %v2689, %v2688
          %v2716 = vpack.c.b16 %v2691, %v2690
          %v2717 = vpack.c.b16 %v2693, %v2692
          %v2718 = vpack.c.b16 %v2695, %v2694
          %v2719 = vpack.c.b16 %v2697, %v2696
          %v2720 = vpack.c.b16 %v2699, %v2698
          %v2721 = vpack.c.b16 %v2701, %v2700
          %v2722 = vpack.c.b16 %v2703, %v2702
          %v2723 = vpack.c.b16 %v2705, %v2704
          %v2724 = vpack.c.b16 %v2707, %v2706
          %v2725 = vpack.c.b16 %v2709, %v2708
          %2726 = vrot.lane.b32.xlu0 %v2710, 64
          %v2727 = vpop.permute.xlu0 %2726
          %2728 = vrot.lane.b32.xlu0 %v2711, 64
          %v2729 = vpop.permute.xlu0 %2728
          %2730 = vrot.lane.b32.xlu0 %v2712, 64
          %v2731 = vpop.permute.xlu0 %2730
          %2732 = vrot.lane.b32.xlu0 %v2713, 64
          %v2733 = vpop.permute.xlu0 %2732
          %2734 = vrot.lane.b32.xlu0 %v2714, 64
          %v2735 = vpop.permute.xlu0 %2734
          %2736 = vrot.lane.b32.xlu0 %v2715, 64
          %v2737 = vpop.permute.xlu0 %2736
          %2738 = vrot.lane.b32.xlu0 %v2716, 64
          %v2739 = vpop.permute.xlu0 %2738
          %2740 = vrot.lane.b32.xlu0 %v2717, 64
          %v2741 = vpop.permute.xlu0 %2740
          %2742 = vrot.lane.b32.xlu0 %v2718, 64
          %v2743 = vpop.permute.xlu0 %2742
          %2744 = vrot.lane.b32.xlu0 %v2719, 64
          %v2745 = vpop.permute.xlu0 %2744
          %2746 = vrot.lane.b32.xlu0 %v2720, 64
          %v2747 = vpop.permute.xlu0 %2746
          %2748 = vrot.lane.b32.xlu0 %v2721, 64
          %v2749 = vpop.permute.xlu0 %2748
          %2750 = vrot.lane.b32.xlu0 %v2722, 64
          %v2751 = vpop.permute.xlu0 %2750
          %2752 = vrot.lane.b32.xlu0 %v2723, 64
          %v2753 = vpop.permute.xlu0 %2752
          %2754 = vrot.lane.b32.xlu0 %v2724, 64
          %v2755 = vpop.permute.xlu0 %2754
          %2756 = vrot.lane.b32.xlu0 %v2725, 64
          %v2757 = vpop.permute.xlu0 %2756
          %2774 = vst.msk [vmem:[#allocation3 + $0x8] sm:$0xff] %vm1731, %v2727
          %2775 = vst.msk [vmem:[#allocation3 + $0x20] sm:$0xff] %vm1731, %v2729
          %2776 = vst.msk [vmem:[#allocation3 + $0x38] sm:$0xff] %vm1731, %v2731
          %2777 = vst.msk [vmem:[#allocation3 + $0x50] sm:$0xff] %vm1731, %v2733
          %2778 = vst.msk [vmem:[#allocation3 + $0x68] sm:$0xff] %vm1731, %v2735
          %2779 = vst.msk [vmem:[#allocation3 + $0x80] sm:$0xff] %vm1731, %v2737
          %2780 = vst.msk [vmem:[#allocation3 + $0x98] sm:$0xff] %vm1731, %v2739
          %2781 = vst.msk [vmem:[#allocation3 + $0xb0] sm:$0xff] %vm1731, %v2741
          %2782 = vst.msk [vmem:[#allocation3 + $0xc8] sm:$0xff] %vm1731, %v2743
          %2783 = vst.msk [vmem:[#allocation3 + $0xe0] sm:$0xff] %vm1731, %v2745
          %2784 = vst.msk [vmem:[#allocation3 + $0xf8] sm:$0xff] %vm1731, %v2747
          %2785 = vst.msk [vmem:[#allocation3 + $0x110] sm:$0xff] %vm1731, %v2749
          %2786 = vst.msk [vmem:[#allocation3 + $0x128] sm:$0xff] %vm1731, %v2751
          %2787 = vst.msk [vmem:[#allocation3 + $0x140] sm:$0xff] %vm1731, %v2753
          %2788 = vst.msk [vmem:[#allocation3 + $0x158] sm:$0xff] %vm1731, %v2755
          %2789 = vst.msk [vmem:[#allocation3 + $0x170] sm:$0xff] %vm1731, %v2757
          %v2790 = vld [vmem:[%s2613] sm:$0xf]
          %v2791 = vld [vmem:[%s2613 + $0x4] sm:$0xf]
          %v2792 = vld [vmem:[%s2613 + $0x8] sm:$0x1]
          %v2793 = vld [vmem:[%s2613 + $0xc] sm:$0xf]
          %v2794 = vld [vmem:[%s2613 + $0x10] sm:$0xf]
          %v2795 = vld [vmem:[%s2613 + $0x14] sm:$0x1]
          %v2796 = vld [vmem:[%s2613 + $0x18] sm:$0xf]
          %v2797 = vld [vmem:[%s2613 + $0x1c] sm:$0xf]
          %v2798 = vld [vmem:[%s2613 + $0x20] sm:$0x1]
          %v2799 = vld [vmem:[%s2613 + $0x24] sm:$0xf]
          %v2800 = vld [vmem:[%s2613 + $0x28] sm:$0xf]
          %v2801 = vld [vmem:[%s2613 + $0x2c] sm:$0x1]
          %v2802 = vld [vmem:[%s2613 + $0x30] sm:$0xf]
          %v2803 = vld [vmem:[%s2613 + $0x34] sm:$0xf]
          %v2804 = vld [vmem:[%s2613 + $0x38] sm:$0x1]
          %v2805 = vld [vmem:[%s2613 + $0x3c] sm:$0xf]
          %v2806 = vld [vmem:[%s2613 + $0x40] sm:$0xf]
          %v2807 = vld [vmem:[%s2613 + $0x44] sm:$0x1]
          %v2808 = vld [vmem:[%s2613 + $0x48] sm:$0xf]
          %v2809 = vld [vmem:[%s2613 + $0x4c] sm:$0xf]
          %v2810 = vld [vmem:[%s2613 + $0x50] sm:$0x1]
          %v2811 = vld [vmem:[%s2613 + $0x54] sm:$0xf]
          %v2812 = vld [vmem:[%s2613 + $0x58] sm:$0xf]
          %v2813 = vld [vmem:[%s2613 + $0x5c] sm:$0x1]
          %v2814 = vld [vmem:[%s2613 + $0x60] sm:$0xf]
          %v2815 = vld [vmem:[%s2613 + $0x64] sm:$0xf]
          %v2816 = vld [vmem:[%s2613 + $0x68] sm:$0x1]
          %v2817 = vld [vmem:[%s2613 + $0x6c] sm:$0xf]
          %v2818 = vld [vmem:[%s2613 + $0x70] sm:$0xf]
          %v2819 = vld [vmem:[%s2613 + $0x74] sm:$0x1]
          %v2820 = vld [vmem:[%s2613 + $0x78] sm:$0xf]
          %v2821 = vld [vmem:[%s2613 + $0x7c] sm:$0xf]
          %v2822 = vld [vmem:[%s2613 + $0x80] sm:$0x1]
          %v2823 = vld [vmem:[%s2613 + $0x84] sm:$0xf]
          %v2824 = vld [vmem:[%s2613 + $0x88] sm:$0xf]
          %v2825 = vld [vmem:[%s2613 + $0x8c] sm:$0x1]
          %v2826 = vld [vmem:[%s2613 + $0x90] sm:$0xf]
          %v2827 = vld [vmem:[%s2613 + $0x94] sm:$0xf]
          %v2828 = vld [vmem:[%s2613 + $0x98] sm:$0x1]
          %v2829 = vld [vmem:[%s2613 + $0x9c] sm:$0xf]
          %v2830 = vld [vmem:[%s2613 + $0xa0] sm:$0xf]
          %v2831 = vld [vmem:[%s2613 + $0xa4] sm:$0x1]
          %v2832 = vld [vmem:[%s2613 + $0xa8] sm:$0xf]
          %v2833 = vld [vmem:[%s2613 + $0xac] sm:$0xf]
          %v2834 = vld [vmem:[%s2613 + $0xb0] sm:$0x1]
          %v2835 = vld [vmem:[%s2613 + $0xb4] sm:$0xf]
          %v2836 = vld [vmem:[%s2613 + $0xb8] sm:$0xf]
          %v2837 = vld [vmem:[%s2613 + $0xbc] sm:$0x1]
          %v2886 = vunpack.c.l.b16 %v2790
          %v2887 = vunpack.c.l.b16 %v2791
          %v2888 = vunpack.c.l.b16 %v2792
          %v2889 = vunpack.c.l.b16 %v2793
          %v2890 = vunpack.c.l.b16 %v2794
          %v2891 = vunpack.c.l.b16 %v2795
          %v2892 = vunpack.c.l.b16 %v2796
          %v2893 = vunpack.c.l.b16 %v2797
          %v2894 = vunpack.c.l.b16 %v2798
          %v2895 = vunpack.c.l.b16 %v2799
          %v2896 = vunpack.c.l.b16 %v2800
          %v2897 = vunpack.c.l.b16 %v2801
          %v2898 = vunpack.c.l.b16 %v2802
          %v2899 = vunpack.c.l.b16 %v2803
          %v2900 = vunpack.c.l.b16 %v2804
          %v2901 = vunpack.c.l.b16 %v2805
          %v2902 = vunpack.c.l.b16 %v2806
          %v2903 = vunpack.c.l.b16 %v2807
          %v2904 = vunpack.c.l.b16 %v2808
          %v2905 = vunpack.c.l.b16 %v2809
          %v2906 = vunpack.c.l.b16 %v2810
          %v2907 = vunpack.c.l.b16 %v2811
          %v2908 = vunpack.c.l.b16 %v2812
          %v2909 = vunpack.c.l.b16 %v2813
          %v2910 = vunpack.c.l.b16 %v2814
          %v2911 = vunpack.c.l.b16 %v2815
          %v2912 = vunpack.c.l.b16 %v2816
          %v2913 = vunpack.c.l.b16 %v2817
          %v2914 = vunpack.c.l.b16 %v2818
          %v2915 = vunpack.c.l.b16 %v2819
          %v2916 = vunpack.c.l.b16 %v2820
          %v2917 = vunpack.c.l.b16 %v2821
          %v2918 = vunpack.c.l.b16 %v2822
          %v2919 = vunpack.c.l.b16 %v2823
          %v2920 = vunpack.c.l.b16 %v2824
          %v2921 = vunpack.c.l.b16 %v2825
          %v2922 = vunpack.c.l.b16 %v2826
          %v2923 = vunpack.c.l.b16 %v2827
          %v2924 = vunpack.c.l.b16 %v2828
          %v2925 = vunpack.c.l.b16 %v2829
          %v2926 = vunpack.c.l.b16 %v2830
          %v2927 = vunpack.c.l.b16 %v2831
          %v2928 = vunpack.c.l.b16 %v2832
          %v2929 = vunpack.c.l.b16 %v2833
          %v2930 = vunpack.c.l.b16 %v2834
          %v2931 = vunpack.c.l.b16 %v2835
          %v2932 = vunpack.c.l.b16 %v2836
          %v2933 = vunpack.c.l.b16 %v2837
          %v2934 = vpack.c.b16 %v2887, %v2886
          %v2935 = vpack.c.b16 %v2888, %v2888
          %v2936 = vpack.c.b16 %v2890, %v2889
          %v2937 = vpack.c.b16 %v2891, %v2891
          %v2938 = vpack.c.b16 %v2893, %v2892
          %v2939 = vpack.c.b16 %v2894, %v2894
          %v2940 = vpack.c.b16 %v2896, %v2895
          %v2941 = vpack.c.b16 %v2897, %v2897
          %v2942 = vpack.c.b16 %v2899, %v2898
          %v2943 = vpack.c.b16 %v2900, %v2900
          %v2944 = vpack.c.b16 %v2902, %v2901
          %v2945 = vpack.c.b16 %v2903, %v2903
          %v2946 = vpack.c.b16 %v2905, %v2904
          %v2947 = vpack.c.b16 %v2906, %v2906
          %v2948 = vpack.c.b16 %v2908, %v2907
          %v2949 = vpack.c.b16 %v2909, %v2909
          %v2950 = vpack.c.b16 %v2911, %v2910
          %v2951 = vpack.c.b16 %v2912, %v2912
          %v2952 = vpack.c.b16 %v2914, %v2913
          %v2953 = vpack.c.b16 %v2915, %v2915
          %v2954 = vpack.c.b16 %v2917, %v2916
          %v2955 = vpack.c.b16 %v2918, %v2918
          %v2956 = vpack.c.b16 %v2920, %v2919
          %v2957 = vpack.c.b16 %v2921, %v2921
          %v2958 = vpack.c.b16 %v2923, %v2922
          %v2959 = vpack.c.b16 %v2924, %v2924
          %v2960 = vpack.c.b16 %v2926, %v2925
          %v2961 = vpack.c.b16 %v2927, %v2927
          %v2962 = vpack.c.b16 %v2929, %v2928
          %v2963 = vpack.c.b16 %v2930, %v2930
          %v2964 = vpack.c.b16 %v2932, %v2931
          %v2965 = vpack.c.b16 %v2933, %v2933
          %v2967 = vshrl.u32 %v2934, 16
          %v2969 = vshll.u32 %v2934, 16
          %v2971 = vrot.slane %v2969, 1
          %v2972 = vor.u32 %v2967, %v2971
          %v2974 = vshll.u32 %v2935, 16
          %v2976 = vrot.slane %v2974, 1
          %v2977 = vsel %vm1200, %v2972, %v2976
          %v2979 = vshrl.u32 %v2936, 16
          %v2981 = vshll.u32 %v2936, 16
          %v2983 = vrot.slane %v2981, 1
          %v2984 = vor.u32 %v2979, %v2983
          %v2986 = vshll.u32 %v2937, 16
          %v2988 = vrot.slane %v2986, 1
          %v2989 = vsel %vm1200, %v2984, %v2988
          %v2991 = vshrl.u32 %v2938, 16
          %v2993 = vshll.u32 %v2938, 16
          %v2995 = vrot.slane %v2993, 1
          %v2996 = vor.u32 %v2991, %v2995
          %v2998 = vshll.u32 %v2939, 16
          %v3000 = vrot.slane %v2998, 1
          %v3001 = vsel %vm1200, %v2996, %v3000
          %v3003 = vshrl.u32 %v2940, 16
          %v3005 = vshll.u32 %v2940, 16
          %v3007 = vrot.slane %v3005, 1
          %v3008 = vor.u32 %v3003, %v3007
          %v3010 = vshll.u32 %v2941, 16
          %v3012 = vrot.slane %v3010, 1
          %v3013 = vsel %vm1200, %v3008, %v3012
          %v3015 = vshrl.u32 %v2942, 16
          %v3017 = vshll.u32 %v2942, 16
          %v3019 = vrot.slane %v3017, 1
          %v3020 = vor.u32 %v3015, %v3019
          %v3022 = vshll.u32 %v2943, 16
          %v3024 = vrot.slane %v3022, 1
          %v3025 = vsel %vm1200, %v3020, %v3024
          %v3027 = vshrl.u32 %v2944, 16
          %v3029 = vshll.u32 %v2944, 16
          %v3031 = vrot.slane %v3029, 1
          %v3032 = vor.u32 %v3027, %v3031
          %v3034 = vshll.u32 %v2945, 16
          %v3036 = vrot.slane %v3034, 1
          %v3037 = vsel %vm1200, %v3032, %v3036
          %v3039 = vshrl.u32 %v2946, 16
          %v3041 = vshll.u32 %v2946, 16
          %v3043 = vrot.slane %v3041, 1
          %v3044 = vor.u32 %v3039, %v3043
          %v3046 = vshll.u32 %v2947, 16
          %v3048 = vrot.slane %v3046, 1
          %v3049 = vsel %vm1200, %v3044, %v3048
          %v3051 = vshrl.u32 %v2948, 16
          %v3053 = vshll.u32 %v2948, 16
          %v3055 = vrot.slane %v3053, 1
          %v3056 = vor.u32 %v3051, %v3055
          %v3058 = vshll.u32 %v2949, 16
          %v3060 = vrot.slane %v3058, 1
          %v3061 = vsel %vm1200, %v3056, %v3060
          %v3063 = vshrl.u32 %v2950, 16
          %v3065 = vshll.u32 %v2950, 16
          %v3067 = vrot.slane %v3065, 1
          %v3068 = vor.u32 %v3063, %v3067
          %v3070 = vshll.u32 %v2951, 16
          %v3072 = vrot.slane %v3070, 1
          %v3073 = vsel %vm1200, %v3068, %v3072
          %v3075 = vshrl.u32 %v2952, 16
          %v3077 = vshll.u32 %v2952, 16
          %v3079 = vrot.slane %v3077, 1
          %v3080 = vor.u32 %v3075, %v3079
          %v3082 = vshll.u32 %v2953, 16
          %v3084 = vrot.slane %v3082, 1
          %v3085 = vsel %vm1200, %v3080, %v3084
          %v3087 = vshrl.u32 %v2954, 16
          %v3089 = vshll.u32 %v2954, 16
          %v3091 = vrot.slane %v3089, 1
          %v3092 = vor.u32 %v3087, %v3091
          %v3094 = vshll.u32 %v2955, 16
          %v3096 = vrot.slane %v3094, 1
          %v3097 = vsel %vm1200, %v3092, %v3096
          %v3099 = vshrl.u32 %v2956, 16
          %v3101 = vshll.u32 %v2956, 16
          %v3103 = vrot.slane %v3101, 1
          %v3104 = vor.u32 %v3099, %v3103
          %v3106 = vshll.u32 %v2957, 16
          %v3108 = vrot.slane %v3106, 1
          %v3109 = vsel %vm1200, %v3104, %v3108
          %v3111 = vshrl.u32 %v2958, 16
          %v3113 = vshll.u32 %v2958, 16
          %v3115 = vrot.slane %v3113, 1
          %v3116 = vor.u32 %v3111, %v3115
          %v3118 = vshll.u32 %v2959, 16
          %v3120 = vrot.slane %v3118, 1
          %v3121 = vsel %vm1200, %v3116, %v3120
          %v3123 = vshrl.u32 %v2960, 16
          %v3125 = vshll.u32 %v2960, 16
          %v3127 = vrot.slane %v3125, 1
          %v3128 = vor.u32 %v3123, %v3127
          %v3130 = vshll.u32 %v2961, 16
          %v3132 = vrot.slane %v3130, 1
          %v3133 = vsel %vm1200, %v3128, %v3132
          %v3135 = vshrl.u32 %v2962, 16
          %v3137 = vshll.u32 %v2962, 16
          %v3139 = vrot.slane %v3137, 1
          %v3140 = vor.u32 %v3135, %v3139
          %v3142 = vshll.u32 %v2963, 16
          %v3144 = vrot.slane %v3142, 1
          %v3145 = vsel %vm1200, %v3140, %v3144
          %v3147 = vshrl.u32 %v2964, 16
          %v3149 = vshll.u32 %v2964, 16
          %v3151 = vrot.slane %v3149, 1
          %v3152 = vor.u32 %v3147, %v3151
          %v3154 = vshll.u32 %v2965, 16
          %v3156 = vrot.slane %v3154, 1
          %v3157 = vsel %vm1200, %v3152, %v3156
          %3158 = vrot.lane.b32.xlu0 %v2977, 96
          %v3159 = vpop.permute.xlu0 %3158
          %3160 = vrot.lane.b32.xlu0 %v2989, 96
          %v3161 = vpop.permute.xlu0 %3160
          %3162 = vrot.lane.b32.xlu0 %v3001, 96
          %v3163 = vpop.permute.xlu0 %3162
          %3164 = vrot.lane.b32.xlu0 %v3013, 96
          %v3165 = vpop.permute.xlu0 %3164
          %3166 = vrot.lane.b32.xlu0 %v3025, 96
          %v3167 = vpop.permute.xlu0 %3166
          %3168 = vrot.lane.b32.xlu0 %v3037, 96
          %v3169 = vpop.permute.xlu0 %3168
          %3170 = vrot.lane.b32.xlu0 %v3049, 96
          %v3171 = vpop.permute.xlu0 %3170
          %3172 = vrot.lane.b32.xlu0 %v3061, 96
          %v3173 = vpop.permute.xlu0 %3172
          %3174 = vrot.lane.b32.xlu0 %v3073, 96
          %v3175 = vpop.permute.xlu0 %3174
          %3176 = vrot.lane.b32.xlu0 %v3085, 96
          %v3177 = vpop.permute.xlu0 %3176
          %3178 = vrot.lane.b32.xlu0 %v3097, 96
          %v3179 = vpop.permute.xlu0 %3178
          %3180 = vrot.lane.b32.xlu0 %v3109, 96
          %v3181 = vpop.permute.xlu0 %3180
          %3182 = vrot.lane.b32.xlu0 %v3121, 96
          %v3183 = vpop.permute.xlu0 %3182
          %3184 = vrot.lane.b32.xlu0 %v3133, 96
          %v3185 = vpop.permute.xlu0 %3184
          %3186 = vrot.lane.b32.xlu0 %v3145, 96
          %v3187 = vpop.permute.xlu0 %3186
          %3188 = vrot.lane.b32.xlu0 %v3157, 96
          %v3189 = vpop.permute.xlu0 %3188
          %3206 = vst.msk [vmem:[#allocation3 + $0x8] sm:$0xff] %vm1908, %v3159
          %3207 = vst.msk [vmem:[#allocation3 + $0x20] sm:$0xff] %vm1908, %v3161
          %3208 = vst.msk [vmem:[#allocation3 + $0x38] sm:$0xff] %vm1908, %v3163
          %3209 = vst.msk [vmem:[#allocation3 + $0x50] sm:$0xff] %vm1908, %v3165
          %3210 = vst.msk [vmem:[#allocation3 + $0x68] sm:$0xff] %vm1908, %v3167
          %3211 = vst.msk [vmem:[#allocation3 + $0x80] sm:$0xff] %vm1908, %v3169
          %3212 = vst.msk [vmem:[#allocation3 + $0x98] sm:$0xff] %vm1908, %v3171
          %3213 = vst.msk [vmem:[#allocation3 + $0xb0] sm:$0xff] %vm1908, %v3173
          %3214 = vst.msk [vmem:[#allocation3 + $0xc8] sm:$0xff] %vm1908, %v3175
          %3215 = vst.msk [vmem:[#allocation3 + $0xe0] sm:$0xff] %vm1908, %v3177
          %3216 = vst.msk [vmem:[#allocation3 + $0xf8] sm:$0xff] %vm1908, %v3179
          %3217 = vst.msk [vmem:[#allocation3 + $0x110] sm:$0xff] %vm1908, %v3181
          %3218 = vst.msk [vmem:[#allocation3 + $0x128] sm:$0xff] %vm1908, %v3183
          %3219 = vst.msk [vmem:[#allocation3 + $0x140] sm:$0xff] %vm1908, %v3185
          %3220 = vst.msk [vmem:[#allocation3 + $0x158] sm:$0xff] %vm1908, %v3187
          %3221 = vst.msk [vmem:[#allocation3 + $0x170] sm:$0xff] %vm1908, %v3189
          %v3222 = vld [vmem:[%s2613] sm:$0xe]
          %v3223 = vld [vmem:[%s2613 + $0x4] sm:$0xf]
          %v3224 = vld [vmem:[%s2613 + $0x8] sm:$0x1]
          %v3225 = vld [vmem:[%s2613 + $0xc] sm:$0xe]
          %v3226 = vld [vmem:[%s2613 + $0x10] sm:$0xf]
          %v3227 = vld [vmem:[%s2613 + $0x14] sm:$0x1]
          %v3228 = vld [vmem:[%s2613 + $0x18] sm:$0xe]
          %v3229 = vld [vmem:[%s2613 + $0x1c] sm:$0xf]
          %v3230 = vld [vmem:[%s2613 + $0x20] sm:$0x1]
          %v3231 = vld [vmem:[%s2613 + $0x24] sm:$0xe]
          %v3232 = vld [vmem:[%s2613 + $0x28] sm:$0xf]
          %v3233 = vld [vmem:[%s2613 + $0x2c] sm:$0x1]
          %v3234 = vld [vmem:[%s2613 + $0x30] sm:$0xe]
          %v3235 = vld [vmem:[%s2613 + $0x34] sm:$0xf]
          %v3236 = vld [vmem:[%s2613 + $0x38] sm:$0x1]
          %v3237 = vld [vmem:[%s2613 + $0x3c] sm:$0xe]
          %v3238 = vld [vmem:[%s2613 + $0x40] sm:$0xf]
          %v3239 = vld [vmem:[%s2613 + $0x44] sm:$0x1]
          %v3240 = vld [vmem:[%s2613 + $0x48] sm:$0xe]
          %v3241 = vld [vmem:[%s2613 + $0x4c] sm:$0xf]
          %v3242 = vld [vmem:[%s2613 + $0x50] sm:$0x1]
          %v3243 = vld [vmem:[%s2613 + $0x54] sm:$0xe]
          %v3244 = vld [vmem:[%s2613 + $0x58] sm:$0xf]
          %v3245 = vld [vmem:[%s2613 + $0x5c] sm:$0x1]
          %v3246 = vld [vmem:[%s2613 + $0x60] sm:$0xe]
          %v3247 = vld [vmem:[%s2613 + $0x64] sm:$0xf]
          %v3248 = vld [vmem:[%s2613 + $0x68] sm:$0x1]
          %v3249 = vld [vmem:[%s2613 + $0x6c] sm:$0xe]
          %v3250 = vld [vmem:[%s2613 + $0x70] sm:$0xf]
          %v3251 = vld [vmem:[%s2613 + $0x74] sm:$0x1]
          %v3252 = vld [vmem:[%s2613 + $0x78] sm:$0xe]
          %v3253 = vld [vmem:[%s2613 + $0x7c] sm:$0xf]
          %v3254 = vld [vmem:[%s2613 + $0x80] sm:$0x1]
          %v3255 = vld [vmem:[%s2613 + $0x84] sm:$0xe]
          %v3256 = vld [vmem:[%s2613 + $0x88] sm:$0xf]
          %v3257 = vld [vmem:[%s2613 + $0x8c] sm:$0x1]
          %v3258 = vld [vmem:[%s2613 + $0x90] sm:$0xe]
          %v3259 = vld [vmem:[%s2613 + $0x94] sm:$0xf]
          %v3260 = vld [vmem:[%s2613 + $0x98] sm:$0x1]
          %v3261 = vld [vmem:[%s2613 + $0x9c] sm:$0xe]
          %v3262 = vld [vmem:[%s2613 + $0xa0] sm:$0xf]
          %v3263 = vld [vmem:[%s2613 + $0xa4] sm:$0x1]
          %v3264 = vld [vmem:[%s2613 + $0xa8] sm:$0xe]
          %v3265 = vld [vmem:[%s2613 + $0xac] sm:$0xf]
          %v3266 = vld [vmem:[%s2613 + $0xb0] sm:$0x1]
          %v3267 = vld [vmem:[%s2613 + $0xb4] sm:$0xe]
          %v3268 = vld [vmem:[%s2613 + $0xb8] sm:$0xf]
          %v3269 = vld [vmem:[%s2613 + $0xbc] sm:$0x1]
          %v3318 = vunpack.c.l.b16 %v3222
          %v3319 = vunpack.c.l.b16 %v3223
          %v3320 = vunpack.c.l.b16 %v3224
          %v3321 = vunpack.c.l.b16 %v3225
          %v3322 = vunpack.c.l.b16 %v3226
          %v3323 = vunpack.c.l.b16 %v3227
          %v3324 = vunpack.c.l.b16 %v3228
          %v3325 = vunpack.c.l.b16 %v3229
          %v3326 = vunpack.c.l.b16 %v3230
          %v3327 = vunpack.c.l.b16 %v3231
          %v3328 = vunpack.c.l.b16 %v3232
          %v3329 = vunpack.c.l.b16 %v3233
          %v3330 = vunpack.c.l.b16 %v3234
          %v3331 = vunpack.c.l.b16 %v3235
          %v3332 = vunpack.c.l.b16 %v3236
          %v3333 = vunpack.c.l.b16 %v3237
          %v3334 = vunpack.c.l.b16 %v3238
          %v3335 = vunpack.c.l.b16 %v3239
          %v3336 = vunpack.c.l.b16 %v3240
          %v3337 = vunpack.c.l.b16 %v3241
          %v3338 = vunpack.c.l.b16 %v3242
          %v3339 = vunpack.c.l.b16 %v3243
          %v3340 = vunpack.c.l.b16 %v3244
          %v3341 = vunpack.c.l.b16 %v3245
          %v3342 = vunpack.c.l.b16 %v3246
          %v3343 = vunpack.c.l.b16 %v3247
          %v3344 = vunpack.c.l.b16 %v3248
          %v3345 = vunpack.c.l.b16 %v3249
          %v3346 = vunpack.c.l.b16 %v3250
          %v3347 = vunpack.c.l.b16 %v3251
          %v3348 = vunpack.c.l.b16 %v3252
          %v3349 = vunpack.c.l.b16 %v3253
          %v3350 = vunpack.c.l.b16 %v3254
          %v3351 = vunpack.c.l.b16 %v3255
          %v3352 = vunpack.c.l.b16 %v3256
          %v3353 = vunpack.c.l.b16 %v3257
          %v3354 = vunpack.c.l.b16 %v3258
          %v3355 = vunpack.c.l.b16 %v3259
          %v3356 = vunpack.c.l.b16 %v3260
          %v3357 = vunpack.c.l.b16 %v3261
          %v3358 = vunpack.c.l.b16 %v3262
          %v3359 = vunpack.c.l.b16 %v3263
          %v3360 = vunpack.c.l.b16 %v3264
          %v3361 = vunpack.c.l.b16 %v3265
          %v3362 = vunpack.c.l.b16 %v3266
          %v3363 = vunpack.c.l.b16 %v3267
          %v3364 = vunpack.c.l.b16 %v3268
          %v3365 = vunpack.c.l.b16 %v3269
          %v3366 = vpack.c.b16 %v3319, %v3318
          %v3367 = vpack.c.b16 %v3320, %v3320
          %v3368 = vpack.c.b16 %v3322, %v3321
          %v3369 = vpack.c.b16 %v3323, %v3323
          %v3370 = vpack.c.b16 %v3325, %v3324
          %v3371 = vpack.c.b16 %v3326, %v3326
          %v3372 = vpack.c.b16 %v3328, %v3327
          %v3373 = vpack.c.b16 %v3329, %v3329
          %v3374 = vpack.c.b16 %v3331, %v3330
          %v3375 = vpack.c.b16 %v3332, %v3332
          %v3376 = vpack.c.b16 %v3334, %v3333
          %v3377 = vpack.c.b16 %v3335, %v3335
          %v3378 = vpack.c.b16 %v3337, %v3336
          %v3379 = vpack.c.b16 %v3338, %v3338
          %v3380 = vpack.c.b16 %v3340, %v3339
          %v3381 = vpack.c.b16 %v3341, %v3341
          %v3382 = vpack.c.b16 %v3343, %v3342
          %v3383 = vpack.c.b16 %v3344, %v3344
          %v3384 = vpack.c.b16 %v3346, %v3345
          %v3385 = vpack.c.b16 %v3347, %v3347
          %v3386 = vpack.c.b16 %v3349, %v3348
          %v3387 = vpack.c.b16 %v3350, %v3350
          %v3388 = vpack.c.b16 %v3352, %v3351
          %v3389 = vpack.c.b16 %v3353, %v3353
          %v3390 = vpack.c.b16 %v3355, %v3354
          %v3391 = vpack.c.b16 %v3356, %v3356
          %v3392 = vpack.c.b16 %v3358, %v3357
          %v3393 = vpack.c.b16 %v3359, %v3359
          %v3394 = vpack.c.b16 %v3361, %v3360
          %v3395 = vpack.c.b16 %v3362, %v3362
          %v3396 = vpack.c.b16 %v3364, %v3363
          %v3397 = vpack.c.b16 %v3365, %v3365
          %v3398 = vrot.slane %v3366, 1
          %v3399 = vrot.slane %v3367, 1
          %v3400 = vsel %vm1634, %v3398, %v3399
          %v3401 = vrot.slane %v3368, 1
          %v3402 = vrot.slane %v3369, 1
          %v3403 = vsel %vm1634, %v3401, %v3402
          %v3404 = vrot.slane %v3370, 1
          %v3405 = vrot.slane %v3371, 1
          %v3406 = vsel %vm1634, %v3404, %v3405
          %v3407 = vrot.slane %v3372, 1
          %v3408 = vrot.slane %v3373, 1
          %v3409 = vsel %vm1634, %v3407, %v3408
          %v3410 = vrot.slane %v3374, 1
          %v3411 = vrot.slane %v3375, 1
          %v3412 = vsel %vm1634, %v3410, %v3411
          %v3413 = vrot.slane %v3376, 1
          %v3414 = vrot.slane %v3377, 1
          %v3415 = vsel %vm1634, %v3413, %v3414
          %v3416 = vrot.slane %v3378, 1
          %v3417 = vrot.slane %v3379, 1
          %v3418 = vsel %vm1634, %v3416, %v3417
          %v3419 = vrot.slane %v3380, 1
          %v3420 = vrot.slane %v3381, 1
          %v3421 = vsel %vm1634, %v3419, %v3420
          %v3422 = vrot.slane %v3382, 1
          %v3423 = vrot.slane %v3383, 1
          %v3424 = vsel %vm1634, %v3422, %v3423
          %v3425 = vrot.slane %v3384, 1
          %v3426 = vrot.slane %v3385, 1
          %v3427 = vsel %vm1634, %v3425, %v3426
          %v3428 = vrot.slane %v3386, 1
          %v3429 = vrot.slane %v3387, 1
          %v3430 = vsel %vm1634, %v3428, %v3429
          %v3431 = vrot.slane %v3388, 1
          %v3432 = vrot.slane %v3389, 1
          %v3433 = vsel %vm1634, %v3431, %v3432
          %v3434 = vrot.slane %v3390, 1
          %v3435 = vrot.slane %v3391, 1
          %v3436 = vsel %vm1634, %v3434, %v3435
          %v3437 = vrot.slane %v3392, 1
          %v3438 = vrot.slane %v3393, 1
          %v3439 = vsel %vm1634, %v3437, %v3438
          %v3440 = vrot.slane %v3394, 1
          %v3441 = vrot.slane %v3395, 1
          %v3442 = vsel %vm1634, %v3440, %v3441
          %v3443 = vrot.slane %v3396, 1
          %v3444 = vrot.slane %v3397, 1
          %v3445 = vsel %vm1634, %v3443, %v3444
          %3462 = vst.msk [vmem:[#allocation3 + $0x10] sm:$0xff] %vm1007, %v3400
          %3463 = vst.msk [vmem:[#allocation3 + $0x28] sm:$0xff] %vm1007, %v3403
          %3464 = vst.msk [vmem:[#allocation3 + $0x40] sm:$0xff] %vm1007, %v3406
          %3465 = vst.msk [vmem:[#allocation3 + $0x58] sm:$0xff] %vm1007, %v3409
          %3466 = vst.msk [vmem:[#allocation3 + $0x70] sm:$0xff] %vm1007, %v3412
          %3467 = vst.msk [vmem:[#allocation3 + $0x88] sm:$0xff] %vm1007, %v3415
          %3468 = vst.msk [vmem:[#allocation3 + $0xa0] sm:$0xff] %vm1007, %v3418
          %3469 = vst.msk [vmem:[#allocation3 + $0xb8] sm:$0xff] %vm1007, %v3421
          %3470 = vst.msk [vmem:[#allocation3 + $0xd0] sm:$0xff] %vm1007, %v3424
          %3471 = vst.msk [vmem:[#allocation3 + $0xe8] sm:$0xff] %vm1007, %v3427
          %3472 = vst.msk [vmem:[#allocation3 + $0x100] sm:$0xff] %vm1007, %v3430
          %3473 = vst.msk [vmem:[#allocation3 + $0x118] sm:$0xff] %vm1007, %v3433
          %3474 = vst.msk [vmem:[#allocation3 + $0x130] sm:$0xff] %vm1007, %v3436
          %3475 = vst.msk [vmem:[#allocation3 + $0x148] sm:$0xff] %vm1007, %v3439
          %3476 = vst.msk [vmem:[#allocation3 + $0x160] sm:$0xff] %vm1007, %v3442
          %3477 = vst.msk [vmem:[#allocation3 + $0x178] sm:$0xff] %vm1007, %v3445
        $region40: #{conv_block_forward_nhwc.1} parent=27 // pred_fallthru
          _
        %v3478 = vld [vmem:[#allocation3] sm:$0xff]
        %v3479 = vld [vmem:[#allocation3 + $0x8] sm:$0xff]
        %v3480 = vld [vmem:[#allocation3 + $0x10] sm:$0xff]
        %v3481 = vld [vmem:[#allocation3 + $0x18] sm:$0xff]
        %v3482 = vld [vmem:[#allocation3 + $0x20] sm:$0xff]
        %v3483 = vld [vmem:[#allocation3 + $0x28] sm:$0xff]
        %v3484 = vld [vmem:[#allocation3 + $0x30] sm:$0xff]
        %v3485 = vld [vmem:[#allocation3 + $0x38] sm:$0xff]
        %v3486 = vld [vmem:[#allocation3 + $0x40] sm:$0xff]
        %v3487 = vld [vmem:[#allocation3 + $0x48] sm:$0xff]
        %v3488 = vld [vmem:[#allocation3 + $0x50] sm:$0xff]
        %v3489 = vld [vmem:[#allocation3 + $0x58] sm:$0xff]
        %v3490 = vld [vmem:[#allocation3 + $0x60] sm:$0xff]
        %v3491 = vld [vmem:[#allocation3 + $0x68] sm:$0xff]
        %v3492 = vld [vmem:[#allocation3 + $0x70] sm:$0xff]
        %v3493 = vld [vmem:[#allocation3 + $0x78] sm:$0xff]
        %v3494 = vld [vmem:[#allocation3 + $0x80] sm:$0xff]
        %v3495 = vld [vmem:[#allocation3 + $0x88] sm:$0xff]
        %v3496 = vld [vmem:[#allocation3 + $0x90] sm:$0xff]
        %v3497 = vld [vmem:[#allocation3 + $0x98] sm:$0xff]
        %v3498 = vld [vmem:[#allocation3 + $0xa0] sm:$0xff]
        %v3499 = vld [vmem:[#allocation3 + $0xa8] sm:$0xff]
        %v3500 = vld [vmem:[#allocation3 + $0xb0] sm:$0xff]
        %v3501 = vld [vmem:[#allocation3 + $0xb8] sm:$0xff]
        %v3502 = vld [vmem:[#allocation3 + $0xc0] sm:$0xff]
        %v3503 = vld [vmem:[#allocation3 + $0xc8] sm:$0xff]
        %v3504 = vld [vmem:[#allocation3 + $0xd0] sm:$0xff]
        %v3505 = vld [vmem:[#allocation3 + $0xd8] sm:$0xff]
        %v3506 = vld [vmem:[#allocation3 + $0xe0] sm:$0xff]
        %v3507 = vld [vmem:[#allocation3 + $0xe8] sm:$0xff]
        %v3508 = vld [vmem:[#allocation3 + $0xf0] sm:$0xff]
        %v3509 = vld [vmem:[#allocation3 + $0xf8] sm:$0xff]
        %v3510 = vld [vmem:[#allocation3 + $0x100] sm:$0xff]
        %v3511 = vld [vmem:[#allocation3 + $0x108] sm:$0xff]
        %v3512 = vld [vmem:[#allocation3 + $0x110] sm:$0xff]
        %v3513 = vld [vmem:[#allocation3 + $0x118] sm:$0xff]
        %v3514 = vld [vmem:[#allocation3 + $0x120] sm:$0xff]
        %v3515 = vld [vmem:[#allocation3 + $0x128] sm:$0xff]
        %v3516 = vld [vmem:[#allocation3 + $0x130] sm:$0xff]
        %v3517 = vld [vmem:[#allocation3 + $0x138] sm:$0xff]
        %v3518 = vld [vmem:[#allocation3 + $0x140] sm:$0xff]
        %v3519 = vld [vmem:[#allocation3 + $0x148] sm:$0xff]
        %v3520 = vld [vmem:[#allocation3 + $0x150] sm:$0xff]
        %v3521 = vld [vmem:[#allocation3 + $0x158] sm:$0xff]
        %v3522 = vld [vmem:[#allocation3 + $0x160] sm:$0xff]
        %v3523 = vld [vmem:[#allocation3 + $0x168] sm:$0xff]
        %v3524 = vld [vmem:[#allocation3 + $0x170] sm:$0xff]
        %v3525 = vld [vmem:[#allocation3 + $0x178] sm:$0xff]
        %v3526 = vld [vmem:[#allocation7] sm:$0xff]
        %v3527 = vld [vmem:[#allocation7 + $0x8] sm:$0xff]
        %v3528 = vld [vmem:[#allocation7 + $0x10] sm:$0xff]
        %v3529 = vld [vmem:[#allocation7 + $0x18] sm:$0xff]
        %v3530 = vld [vmem:[#allocation7 + $0x20] sm:$0xff]
        %v3531 = vld [vmem:[#allocation7 + $0x28] sm:$0xff]
        %v3532 = vld [vmem:[#allocation7 + $0x30] sm:$0xff]
        %v3533 = vld [vmem:[#allocation7 + $0x38] sm:$0xff]
        %v3534 = vld [vmem:[#allocation7 + $0x40] sm:$0xff]
        %v3535 = vld [vmem:[#allocation7 + $0x48] sm:$0xff]
        %v3536 = vld [vmem:[#allocation7 + $0x50] sm:$0xff]
        %v3537 = vld [vmem:[#allocation7 + $0x58] sm:$0xff]
        %v3538 = vld [vmem:[#allocation7 + $0x60] sm:$0xff]
        %v3539 = vld [vmem:[#allocation7 + $0x68] sm:$0xff]
        %v3540 = vld [vmem:[#allocation7 + $0x70] sm:$0xff]
        %v3541 = vld [vmem:[#allocation7 + $0x78] sm:$0xff]
        %v3542 = vld [vmem:[#allocation7 + $0x80] sm:$0xff]
        %v3543 = vld [vmem:[#allocation7 + $0x88] sm:$0xff]
        %v3544 = vld [vmem:[#allocation7 + $0x90] sm:$0xff]
        %v3545 = vld [vmem:[#allocation7 + $0x98] sm:$0xff]
        %v3546 = vld [vmem:[#allocation7 + $0xa0] sm:$0xff]
        %v3547 = vld [vmem:[#allocation7 + $0xa8] sm:$0xff]
        %v3548 = vld [vmem:[#allocation7 + $0xb0] sm:$0xff]
        %v3549 = vld [vmem:[#allocation7 + $0xb8] sm:$0xff]
        %v3550 = vld [vmem:[#allocation7 + $0xc0] sm:$0xff]
        %v3551 = vld [vmem:[#allocation7 + $0xc8] sm:$0xff]
        %v3552 = vld [vmem:[#allocation7 + $0xd0] sm:$0xff]
        %v3553 = vld [vmem:[#allocation7 + $0xd8] sm:$0xff]
        %v3554 = vld [vmem:[#allocation7 + $0xe0] sm:$0xff]
        %v3555 = vld [vmem:[#allocation7 + $0xe8] sm:$0xff]
        %v3556 = vld [vmem:[#allocation7 + $0xf0] sm:$0xff]
        %v3557 = vld [vmem:[#allocation7 + $0xf8] sm:$0xff]
        %v3558 = vld [vmem:[#allocation7 + $0x100] sm:$0xff]
        %v3559 = vld [vmem:[#allocation7 + $0x108] sm:$0xff]
        %v3560 = vld [vmem:[#allocation7 + $0x110] sm:$0xff]
        %v3561 = vld [vmem:[#allocation7 + $0x118] sm:$0xff]
        %v3562 = vld [vmem:[#allocation7 + $0x120] sm:$0xff]
        %v3563 = vld [vmem:[#allocation7 + $0x128] sm:$0xff]
        %v3564 = vld [vmem:[#allocation7 + $0x130] sm:$0xff]
        %v3565 = vld [vmem:[#allocation7 + $0x138] sm:$0xff]
        %v3566 = vld [vmem:[#allocation7 + $0x140] sm:$0xff]
        %v3567 = vld [vmem:[#allocation7 + $0x148] sm:$0xff]
        %v3568 = vld [vmem:[#allocation7 + $0x150] sm:$0xff]
        %v3569 = vld [vmem:[#allocation7 + $0x158] sm:$0xff]
        %v3570 = vld [vmem:[#allocation7 + $0x160] sm:$0xff]
        %v3571 = vld [vmem:[#allocation7 + $0x168] sm:$0xff]
        %v3572 = vld [vmem:[#allocation7 + $0x170] sm:$0xff]
        %v3573 = vld [vmem:[#allocation7 + $0x178] sm:$0xff]
        %v3622 = vunpack.c.l.b16 %v3526
        %v3623 = vunpack.c.h.b16 %v3526
        %v3624 = vunpack.c.l.b16 %v3527
        %v3625 = vunpack.c.h.b16 %v3527
        %v3626 = vunpack.c.l.b16 %v3528
        %v3627 = vunpack.c.h.b16 %v3528
        %v3628 = vunpack.c.l.b16 %v3529
        %v3629 = vunpack.c.h.b16 %v3529
        %v3630 = vunpack.c.l.b16 %v3530
        %v3631 = vunpack.c.h.b16 %v3530
        %v3632 = vunpack.c.l.b16 %v3531
        %v3633 = vunpack.c.h.b16 %v3531
        %v3634 = vunpack.c.l.b16 %v3532
        %v3635 = vunpack.c.h.b16 %v3532
        %v3636 = vunpack.c.l.b16 %v3533
        %v3637 = vunpack.c.h.b16 %v3533
        %v3638 = vunpack.c.l.b16 %v3534
        %v3639 = vunpack.c.h.b16 %v3534
        %v3640 = vunpack.c.l.b16 %v3535
        %v3641 = vunpack.c.h.b16 %v3535
        %v3642 = vunpack.c.l.b16 %v3536
        %v3643 = vunpack.c.h.b16 %v3536
        %v3644 = vunpack.c.l.b16 %v3537
        %v3645 = vunpack.c.h.b16 %v3537
        %v3646 = vunpack.c.l.b16 %v3538
        %v3647 = vunpack.c.h.b16 %v3538
        %v3648 = vunpack.c.l.b16 %v3539
        %v3649 = vunpack.c.h.b16 %v3539
        %v3650 = vunpack.c.l.b16 %v3540
        %v3651 = vunpack.c.h.b16 %v3540
        %v3652 = vunpack.c.l.b16 %v3541
        %v3653 = vunpack.c.h.b16 %v3541
        %v3654 = vunpack.c.l.b16 %v3542
        %v3655 = vunpack.c.h.b16 %v3542
        %v3656 = vunpack.c.l.b16 %v3543
        %v3657 = vunpack.c.h.b16 %v3543
        %v3658 = vunpack.c.l.b16 %v3544
        %v3659 = vunpack.c.h.b16 %v3544
        %v3660 = vunpack.c.l.b16 %v3545
        %v3661 = vunpack.c.h.b16 %v3545
        %v3662 = vunpack.c.l.b16 %v3546
        %v3663 = vunpack.c.h.b16 %v3546
        %v3664 = vunpack.c.l.b16 %v3547
        %v3665 = vunpack.c.h.b16 %v3547
        %v3666 = vunpack.c.l.b16 %v3548
        %v3667 = vunpack.c.h.b16 %v3548
        %v3668 = vunpack.c.l.b16 %v3549
        %v3669 = vunpack.c.h.b16 %v3549
        %v3670 = vunpack.c.l.b16 %v3550
        %v3671 = vunpack.c.h.b16 %v3550
        %v3672 = vunpack.c.l.b16 %v3551
        %v3673 = vunpack.c.h.b16 %v3551
        %v3674 = vunpack.c.l.b16 %v3552
        %v3675 = vunpack.c.h.b16 %v3552
        %v3676 = vunpack.c.l.b16 %v3553
        %v3677 = vunpack.c.h.b16 %v3553
        %v3678 = vunpack.c.l.b16 %v3554
        %v3679 = vunpack.c.h.b16 %v3554
        %v3680 = vunpack.c.l.b16 %v3555
        %v3681 = vunpack.c.h.b16 %v3555
        %v3682 = vunpack.c.l.b16 %v3556
        %v3683 = vunpack.c.h.b16 %v3556
        %v3684 = vunpack.c.l.b16 %v3557
        %v3685 = vunpack.c.h.b16 %v3557
        %v3686 = vunpack.c.l.b16 %v3558
        %v3687 = vunpack.c.h.b16 %v3558
        %v3688 = vunpack.c.l.b16 %v3559
        %v3689 = vunpack.c.h.b16 %v3559
        %v3690 = vunpack.c.l.b16 %v3560
        %v3691 = vunpack.c.h.b16 %v3560
        %v3692 = vunpack.c.l.b16 %v3561
        %v3693 = vunpack.c.h.b16 %v3561
        %v3694 = vunpack.c.l.b16 %v3562
        %v3695 = vunpack.c.h.b16 %v3562
        %v3696 = vunpack.c.l.b16 %v3563
        %v3697 = vunpack.c.h.b16 %v3563
        %v3698 = vunpack.c.l.b16 %v3564
        %v3699 = vunpack.c.h.b16 %v3564
        %v3700 = vunpack.c.l.b16 %v3565
        %v3701 = vunpack.c.h.b16 %v3565
        %v3702 = vunpack.c.l.b16 %v3566
        %v3703 = vunpack.c.h.b16 %v3566
        %v3704 = vunpack.c.l.b16 %v3567
        %v3705 = vunpack.c.h.b16 %v3567
        %v3706 = vunpack.c.l.b16 %v3568
        %v3707 = vunpack.c.h.b16 %v3568
        %v3708 = vunpack.c.l.b16 %v3569
        %v3709 = vunpack.c.h.b16 %v3569
        %v3710 = vunpack.c.l.b16 %v3570
        %v3711 = vunpack.c.h.b16 %v3570
        %v3712 = vunpack.c.l.b16 %v3571
        %v3713 = vunpack.c.h.b16 %v3571
        %v3714 = vunpack.c.l.b16 %v3572
        %v3715 = vunpack.c.h.b16 %v3572
        %v3716 = vunpack.c.l.b16 %v3573
        %v3717 = vunpack.c.h.b16 %v3573
        %v3718 = vpack.c.b16 %v3624, %v3622
        %v3719 = vpack.c.b16 %v3625, %v3623
        %v3720 = vpack.c.b16 %v3628, %v3626
        %v3721 = vpack.c.b16 %v3629, %v3627
        %v3722 = vpack.c.b16 %v3632, %v3630
        %v3723 = vpack.c.b16 %v3633, %v3631
        %v3724 = vpack.c.b16 %v3636, %v3634
        %v3725 = vpack.c.b16 %v3637, %v3635
        %v3726 = vpack.c.b16 %v3640, %v3638
        %v3727 = vpack.c.b16 %v3641, %v3639
        %v3728 = vpack.c.b16 %v3644, %v3642
        %v3729 = vpack.c.b16 %v3645, %v3643
        %v3730 = vpack.c.b16 %v3648, %v3646
        %v3731 = vpack.c.b16 %v3649, %v3647
        %v3732 = vpack.c.b16 %v3652, %v3650
        %v3733 = vpack.c.b16 %v3653, %v3651
        %v3734 = vpack.c.b16 %v3656, %v3654
        %v3735 = vpack.c.b16 %v3657, %v3655
        %v3736 = vpack.c.b16 %v3660, %v3658
        %v3737 = vpack.c.b16 %v3661, %v3659
        %v3738 = vpack.c.b16 %v3664, %v3662
        %v3739 = vpack.c.b16 %v3665, %v3663
        %v3740 = vpack.c.b16 %v3668, %v3666
        %v3741 = vpack.c.b16 %v3669, %v3667
        %v3742 = vpack.c.b16 %v3672, %v3670
        %v3743 = vpack.c.b16 %v3673, %v3671
        %v3744 = vpack.c.b16 %v3676, %v3674
        %v3745 = vpack.c.b16 %v3677, %v3675
        %v3746 = vpack.c.b16 %v3680, %v3678
        %v3747 = vpack.c.b16 %v3681, %v3679
        %v3748 = vpack.c.b16 %v3684, %v3682
        %v3749 = vpack.c.b16 %v3685, %v3683
        %v3750 = vpack.c.b16 %v3688, %v3686
        %v3751 = vpack.c.b16 %v3689, %v3687
        %v3752 = vpack.c.b16 %v3692, %v3690
        %v3753 = vpack.c.b16 %v3693, %v3691
        %v3754 = vpack.c.b16 %v3696, %v3694
        %v3755 = vpack.c.b16 %v3697, %v3695
        %v3756 = vpack.c.b16 %v3700, %v3698
        %v3757 = vpack.c.b16 %v3701, %v3699
        %v3758 = vpack.c.b16 %v3704, %v3702
        %v3759 = vpack.c.b16 %v3705, %v3703
        %v3760 = vpack.c.b16 %v3708, %v3706
        %v3761 = vpack.c.b16 %v3709, %v3707
        %v3762 = vpack.c.b16 %v3712, %v3710
        %v3763 = vpack.c.b16 %v3713, %v3711
        %v3764 = vpack.c.b16 %v3716, %v3714
        %v3765 = vpack.c.b16 %v3717, %v3715
        %3814 = vmatprep.subr.bf16.mxu0 %v3719
        %3815 = vmatpush1.bf16.msra.mxu0 %v3718
        %3816 = vmatprep.subr.bf16.mxu0 %v3721
        %3817 = vmatpush1.bf16.msra.mxu0 %v3720
        %3818 = vmatprep.subr.bf16.mxu0 %v3723
        %3819 = vmatpush1.bf16.msra.mxu0 %v3722
        %3820 = vmatprep.subr.bf16.mxu0 %v3725
        %3821 = vmatpush1.bf16.msra.mxu0 %v3724
        %3822 = vmatprep.subr.bf16.mxu0 %v3727
        %3823 = vmatpush1.bf16.msra.mxu0 %v3726
        %3824 = vmatprep.subr.bf16.mxu0 %v3729
        %3825 = vmatpush1.bf16.msra.mxu0 %v3728
        %3826 = vmatprep.subr.bf16.mxu0 %v3731
        %3827 = vmatpush1.bf16.msra.mxu0 %v3730
        %3828 = vmatprep.subr.bf16.mxu0 %v3733
        %3829 = vmatpush1.bf16.msra.mxu0 %v3732
        %3830 = vmatprep.subr.bf16.mxu0 %v3735
        %3831 = vmatpush1.bf16.msra.mxu0 %v3734
        %3832 = vmatprep.subr.bf16.mxu0 %v3737
        %3833 = vmatpush1.bf16.msra.mxu0 %v3736
        %3834 = vmatprep.subr.bf16.mxu0 %v3739
        %3835 = vmatpush1.bf16.msra.mxu0 %v3738
        %3836 = vmatprep.subr.bf16.mxu0 %v3741
        %3837 = vmatpush1.bf16.msra.mxu0 %v3740
        %3838 = vmatprep.subr.bf16.mxu0 %v3743
        %3839 = vmatpush1.bf16.msra.mxu0 %v3742
        %3840 = vmatprep.subr.bf16.mxu0 %v3745
        %3841 = vmatpush1.bf16.msra.mxu0 %v3744
        %3842 = vmatprep.subr.bf16.mxu0 %v3747
        %3843 = vmatpush1.bf16.msra.mxu0 %v3746
        %3844 = vmatprep.subr.bf16.mxu0 %v3749
        %3845 = vmatpush1.bf16.msra.mxu0 %v3748
        %3846 = vmatprep.mubr.bf16.mxu0 %v3479
        %3847 = vmatmul.mubr.bf16.gmra.mrb[0].mxu0 %v3478
        %v3848 = vpop.f32.mrb[0].mxu0
        %v3849 = vadd.f32 0.0, %v3848
        %v3850 = vpop.f32.mrb[0].mxu0
        %v3851 = vadd.f32 0.0, %v3850
        %v3852 = vpop.f32.mrb[0].mxu0
        %v3853 = vadd.f32 0.0, %v3852
        %v3854 = vpop.f32.mrb[0].mxu0
        %v3855 = vadd.f32 0.0, %v3854
        %3856 = vmatprep.mubr.bf16.mxu0 %v3482
        %3857 = vmatmul.mubr.bf16.gmra.mrb[0].mxu0 %v3481
        %v3858 = vpop.f32.mrb[0].mxu0
        %v3859 = vadd.f32 0.0, %v3858
        %v3860 = vpop.f32.mrb[0].mxu0
        %v3861 = vadd.f32 0.0, %v3860
        %v3862 = vpop.f32.mrb[0].mxu0
        %v3863 = vadd.f32 0.0, %v3862
        %v3864 = vpop.f32.mrb[0].mxu0
        %v3865 = vadd.f32 0.0, %v3864
        %3866 = vmatprep.mubr.bf16.mxu0 %v3485
        %3867 = vmatmul.mubr.bf16.gmra.mrb[0].mxu0 %v3484
        %v3868 = vpop.f32.mrb[0].mxu0
        %v3869 = vadd.f32 0.0, %v3868
        %v3870 = vpop.f32.mrb[0].mxu0
        %v3871 = vadd.f32 0.0, %v3870
        %v3872 = vpop.f32.mrb[0].mxu0
        %v3873 = vadd.f32 0.0, %v3872
        %v3874 = vpop.f32.mrb[0].mxu0
        %v3875 = vadd.f32 0.0, %v3874
        %3876 = vmatprep.mubr.bf16.mxu0 %v3488
        %3877 = vmatmul.mubr.bf16.gmra.mrb[0].mxu0 %v3487
        %v3878 = vpop.f32.mrb[0].mxu0
        %v3879 = vadd.f32 0.0, %v3878
        %v3880 = vpop.f32.mrb[0].mxu0
        %v3881 = vadd.f32 0.0, %v3880
        %v3882 = vpop.f32.mrb[0].mxu0
        %v3883 = vadd.f32 0.0, %v3882
        %v3884 = vpop.f32.mrb[0].mxu0
        %v3885 = vadd.f32 0.0, %v3884
        %3886 = vmatprep.mubr.bf16.mxu0 %v3491
        %3887 = vmatmul.mubr.bf16.gmra.mrb[0].mxu0 %v3490
        %v3888 = vpop.f32.mrb[0].mxu0
        %v3889 = vadd.f32 0.0, %v3888
        %v3890 = vpop.f32.mrb[0].mxu0
        %v3891 = vadd.f32 0.0, %v3890
        %v3892 = vpop.f32.mrb[0].mxu0
        %v3893 = vadd.f32 0.0, %v3892
        %v3894 = vpop.f32.mrb[0].mxu0
        %v3895 = vadd.f32 0.0, %v3894
        %3896 = vmatprep.mubr.bf16.mxu0 %v3494
        %3897 = vmatmul.mubr.bf16.gmra.mrb[0].mxu0 %v3493
        %v3898 = vpop.f32.mrb[0].mxu0
        %v3899 = vadd.f32 0.0, %v3898
        %v3900 = vpop.f32.mrb[0].mxu0
        %v3901 = vadd.f32 0.0, %v3900
        %v3902 = vpop.f32.mrb[0].mxu0
        %v3903 = vadd.f32 0.0, %v3902
        %v3904 = vpop.f32.mrb[0].mxu0
        %v3905 = vadd.f32 0.0, %v3904
        %3906 = vmatprep.mubr.bf16.mxu0 %v3497
        %3907 = vmatmul.mubr.bf16.gmra.mrb[0].mxu0 %v3496
        %v3908 = vpop.f32.mrb[0].mxu0
        %v3909 = vadd.f32 0.0, %v3908
        %v3910 = vpop.f32.mrb[0].mxu0
        %v3911 = vadd.f32 0.0, %v3910
        %v3912 = vpop.f32.mrb[0].mxu0
        %v3913 = vadd.f32 0.0, %v3912
        %v3914 = vpop.f32.mrb[0].mxu0
        %v3915 = vadd.f32 0.0, %v3914
        %3916 = vmatprep.mubr.bf16.mxu0 %v3500
        %3917 = vmatmul.mubr.bf16.gmra.mrb[0].mxu0 %v3499
        %v3918 = vpop.f32.mrb[0].mxu0
        %v3919 = vadd.f32 0.0, %v3918
        %v3920 = vpop.f32.mrb[0].mxu0
        %v3921 = vadd.f32 0.0, %v3920
        %v3922 = vpop.f32.mrb[0].mxu0
        %v3923 = vadd.f32 0.0, %v3922
        %v3924 = vpop.f32.mrb[0].mxu0
        %v3925 = vadd.f32 0.0, %v3924
        %3926 = vmatprep.mubr.bf16.mxu0 %v3503
        %3927 = vmatmul.mubr.bf16.gmra.mrb[0].mxu0 %v3502
        %v3928 = vpop.f32.mrb[0].mxu0
        %v3929 = vadd.f32 0.0, %v3928
        %v3930 = vpop.f32.mrb[0].mxu0
        %v3931 = vadd.f32 0.0, %v3930
        %v3932 = vpop.f32.mrb[0].mxu0
        %v3933 = vadd.f32 0.0, %v3932
        %v3934 = vpop.f32.mrb[0].mxu0
        %v3935 = vadd.f32 0.0, %v3934
        %3936 = vmatprep.mubr.bf16.mxu0 %v3506
        %3937 = vmatmul.mubr.bf16.gmra.mrb[0].mxu0 %v3505
        %v3938 = vpop.f32.mrb[0].mxu0
        %v3939 = vadd.f32 0.0, %v3938
        %v3940 = vpop.f32.mrb[0].mxu0
        %v3941 = vadd.f32 0.0, %v3940
        %v3942 = vpop.f32.mrb[0].mxu0
        %v3943 = vadd.f32 0.0, %v3942
        %v3944 = vpop.f32.mrb[0].mxu0
        %v3945 = vadd.f32 0.0, %v3944
        %3946 = vmatprep.mubr.bf16.mxu0 %v3509
        %3947 = vmatmul.mubr.bf16.gmra.mrb[0].mxu0 %v3508
        %v3948 = vpop.f32.mrb[0].mxu0
        %v3949 = vadd.f32 0.0, %v3948
        %v3950 = vpop.f32.mrb[0].mxu0
        %v3951 = vadd.f32 0.0, %v3950
        %v3952 = vpop.f32.mrb[0].mxu0
        %v3953 = vadd.f32 0.0, %v3952
        %v3954 = vpop.f32.mrb[0].mxu0
        %v3955 = vadd.f32 0.0, %v3954
        %3956 = vmatprep.mubr.bf16.mxu0 %v3512
        %3957 = vmatmul.mubr.bf16.gmra.mrb[0].mxu0 %v3511
        %v3958 = vpop.f32.mrb[0].mxu0
        %v3959 = vadd.f32 0.0, %v3958
        %v3960 = vpop.f32.mrb[0].mxu0
        %v3961 = vadd.f32 0.0, %v3960
        %v3962 = vpop.f32.mrb[0].mxu0
        %v3963 = vadd.f32 0.0, %v3962
        %v3964 = vpop.f32.mrb[0].mxu0
        %v3965 = vadd.f32 0.0, %v3964
        %3966 = vmatprep.mubr.bf16.mxu0 %v3515
        %3967 = vmatmul.mubr.bf16.gmra.mrb[0].mxu0 %v3514
        %v3968 = vpop.f32.mrb[0].mxu0
        %v3969 = vadd.f32 0.0, %v3968
        %v3970 = vpop.f32.mrb[0].mxu0
        %v3971 = vadd.f32 0.0, %v3970
        %v3972 = vpop.f32.mrb[0].mxu0
        %v3973 = vadd.f32 0.0, %v3972
        %v3974 = vpop.f32.mrb[0].mxu0
        %v3975 = vadd.f32 0.0, %v3974
        %3976 = vmatprep.mubr.bf16.mxu0 %v3518
        %3977 = vmatmul.mubr.bf16.gmra.mrb[0].mxu0 %v3517
        %v3978 = vpop.f32.mrb[0].mxu0
        %v3979 = vadd.f32 0.0, %v3978
        %v3980 = vpop.f32.mrb[0].mxu0
        %v3981 = vadd.f32 0.0, %v3980
        %v3982 = vpop.f32.mrb[0].mxu0
        %v3983 = vadd.f32 0.0, %v3982
        %v3984 = vpop.f32.mrb[0].mxu0
        %v3985 = vadd.f32 0.0, %v3984
        %3986 = vmatprep.mubr.bf16.mxu0 %v3521
        %3987 = vmatmul.mubr.bf16.gmra.mrb[0].mxu0 %v3520
        %v3988 = vpop.f32.mrb[0].mxu0
        %v3989 = vadd.f32 0.0, %v3988
        %v3990 = vpop.f32.mrb[0].mxu0
        %v3991 = vadd.f32 0.0, %v3990
        %v3992 = vpop.f32.mrb[0].mxu0
        %v3993 = vadd.f32 0.0, %v3992
        %v3994 = vpop.f32.mrb[0].mxu0
        %v3995 = vadd.f32 0.0, %v3994
        %3996 = vmatprep.mubr.bf16.mxu0 %v3524
        %3997 = vmatmul.mubr.bf16.gmra.mrb[0].mxu0 %v3523
        %v3998 = vpop.f32.mrb[0].mxu0
        %v3999 = vadd.f32 0.0, %v3998
        %v4000 = vpop.f32.mrb[0].mxu0
        %v4001 = vadd.f32 0.0, %v4000
        %v4002 = vpop.f32.mrb[0].mxu0
        %v4003 = vadd.f32 0.0, %v4002
        %v4004 = vpop.f32.mrb[0].mxu0
        %v4005 = vadd.f32 0.0, %v4004
        %4006 = vdwg.mxu0
        %4007 = vmatprep.subr.bf16.mxu0 %v3751
        %4008 = vmatpush1.bf16.msra.mxu0 %v3750
        %4009 = vmatprep.subr.bf16.mxu0 %v3753
        %4010 = vmatpush1.bf16.msra.mxu0 %v3752
        %4011 = vmatprep.subr.bf16.mxu0 %v3755
        %4012 = vmatpush1.bf16.msra.mxu0 %v3754
        %4013 = vmatprep.subr.bf16.mxu0 %v3757
        %4014 = vmatpush1.bf16.msra.mxu0 %v3756
        %4015 = vmatprep.subr.bf16.mxu0 %v3759
        %4016 = vmatpush1.bf16.msra.mxu0 %v3758
        %4017 = vmatprep.subr.bf16.mxu0 %v3761
        %4018 = vmatpush1.bf16.msra.mxu0 %v3760
        %4019 = vmatprep.subr.bf16.mxu0 %v3763
        %4020 = vmatpush1.bf16.msra.mxu0 %v3762
        %4021 = vmatprep.subr.bf16.mxu0 %v3765
        %4022 = vmatpush1.bf16.msra.mxu0 %v3764
        %4023 = vmatprep.subr.bf16.mxu0 0
        %4024 = vmatpush1.bf16.msra.mxu0 0
        %4025 = vmatprep.subr.bf16.mxu0 0
        %4026 = vmatpush1.bf16.msra.mxu0 0
        %4027 = vmatprep.subr.bf16.mxu0 0
        %4028 = vmatpush1.bf16.msra.mxu0 0
        %4029 = vmatprep.subr.bf16.mxu0 0
        %4030 = vmatpush1.bf16.msra.mxu0 0
        %4031 = vmatprep.subr.bf16.mxu0 0
        %4032 = vmatpush1.bf16.msra.mxu0 0
        %4033 = vmatprep.subr.bf16.mxu0 0
        %4034 = vmatpush1.bf16.msra.mxu0 0
        %4035 = vmatprep.subr.bf16.mxu0 0
        %4036 = vmatpush1.bf16.msra.mxu0 0
        %4037 = vmatprep.subr.bf16.mxu0 0
        %4038 = vmatpush1.bf16.msra.mxu0 0
        %4039 = vmatprep.mubr.bf16.mxu0 0
        %4040 = vmatmul.mubr.bf16.gmra.mrb[0].mxu0 %v3480
        %v4041 = vpop.f32.mrb[0].mxu0
        %v4042 = vadd.f32 %v3849, %v4041
        %v4043 = vpop.f32.mrb[0].mxu0
        %v4044 = vadd.f32 %v3851, %v4043
        %v4045 = vpop.f32.mrb[0].mxu0
        %v4046 = vadd.f32 %v3853, %v4045
        %v4047 = vpop.f32.mrb[0].mxu0
        %v4048 = vadd.f32 %v3855, %v4047
        %4049 = vmatprep.mubr.bf16.mxu0 0
        %4050 = vmatmul.mubr.bf16.gmra.mrb[0].mxu0 %v3483
        %v4051 = vpop.f32.mrb[0].mxu0
        %v4052 = vadd.f32 %v3859, %v4051
        %v4053 = vpop.f32.mrb[0].mxu0
        %v4054 = vadd.f32 %v3861, %v4053
        %v4055 = vpop.f32.mrb[0].mxu0
        %v4056 = vadd.f32 %v3863, %v4055
        %v4057 = vpop.f32.mrb[0].mxu0
        %v4058 = vadd.f32 %v3865, %v4057
        %4059 = vmatprep.mubr.bf16.mxu0 0
        %4060 = vmatmul.mubr.bf16.gmra.mrb[0].mxu0 %v3486
        %v4061 = vpop.f32.mrb[0].mxu0
        %v4062 = vadd.f32 %v3869, %v4061
        %v4063 = vpop.f32.mrb[0].mxu0
        %v4064 = vadd.f32 %v3871, %v4063
        %v4065 = vpop.f32.mrb[0].mxu0
        %v4066 = vadd.f32 %v3873, %v4065
        %v4067 = vpop.f32.mrb[0].mxu0
        %v4068 = vadd.f32 %v3875, %v4067
        %4069 = vmatprep.mubr.bf16.mxu0 0
        %4070 = vmatmul.mubr.bf16.gmra.mrb[0].mxu0 %v3489
        %v4071 = vpop.f32.mrb[0].mxu0
        %v4072 = vadd.f32 %v3879, %v4071
        %v4073 = vpop.f32.mrb[0].mxu0
        %v4074 = vadd.f32 %v3881, %v4073
        %v4075 = vpop.f32.mrb[0].mxu0
        %v4076 = vadd.f32 %v3883, %v4075
        %v4077 = vpop.f32.mrb[0].mxu0
        %v4078 = vadd.f32 %v3885, %v4077
        %4079 = vmatprep.mubr.bf16.mxu0 0
        %4080 = vmatmul.mubr.bf16.gmra.mrb[0].mxu0 %v3492
        %v4081 = vpop.f32.mrb[0].mxu0
        %v4082 = vadd.f32 %v3889, %v4081
        %v4083 = vpop.f32.mrb[0].mxu0
        %v4084 = vadd.f32 %v3891, %v4083
        %v4085 = vpop.f32.mrb[0].mxu0
        %v4086 = vadd.f32 %v3893, %v4085
        %v4087 = vpop.f32.mrb[0].mxu0
        %v4088 = vadd.f32 %v3895, %v4087
        %4089 = vmatprep.mubr.bf16.mxu0 0
        %4090 = vmatmul.mubr.bf16.gmra.mrb[0].mxu0 %v3495
        %v4091 = vpop.f32.mrb[0].mxu0
        %v4092 = vadd.f32 %v3899, %v4091
        %v4093 = vpop.f32.mrb[0].mxu0
        %v4094 = vadd.f32 %v3901, %v4093
        %v4095 = vpop.f32.mrb[0].mxu0
        %v4096 = vadd.f32 %v3903, %v4095
        %v4097 = vpop.f32.mrb[0].mxu0
        %v4098 = vadd.f32 %v3905, %v4097
        %4099 = vmatprep.mubr.bf16.mxu0 0
        %4100 = vmatmul.mubr.bf16.gmra.mrb[0].mxu0 %v3498
        %v4101 = vpop.f32.mrb[0].mxu0
        %v4102 = vadd.f32 %v3909, %v4101
        %v4103 = vpop.f32.mrb[0].mxu0
        %v4104 = vadd.f32 %v3911, %v4103
        %v4105 = vpop.f32.mrb[0].mxu0
        %v4106 = vadd.f32 %v3913, %v4105
        %v4107 = vpop.f32.mrb[0].mxu0
        %v4108 = vadd.f32 %v3915, %v4107
        %4109 = vmatprep.mubr.bf16.mxu0 0
        %4110 = vmatmul.mubr.bf16.gmra.mrb[0].mxu0 %v3501
        %v4111 = vpop.f32.mrb[0].mxu0
        %v4112 = vadd.f32 %v3919, %v4111
        %v4113 = vpop.f32.mrb[0].mxu0
        %v4114 = vadd.f32 %v3921, %v4113
        %v4115 = vpop.f32.mrb[0].mxu0
        %v4116 = vadd.f32 %v3923, %v4115
        %v4117 = vpop.f32.mrb[0].mxu0
        %v4118 = vadd.f32 %v3925, %v4117
        %4119 = vmatprep.mubr.bf16.mxu0 0
        %4120 = vmatmul.mubr.bf16.gmra.mrb[0].mxu0 %v3504
        %v4121 = vpop.f32.mrb[0].mxu0
        %v4122 = vadd.f32 %v3929, %v4121
        %v4123 = vpop.f32.mrb[0].mxu0
        %v4124 = vadd.f32 %v3931, %v4123
        %v4125 = vpop.f32.mrb[0].mxu0
        %v4126 = vadd.f32 %v3933, %v4125
        %v4127 = vpop.f32.mrb[0].mxu0
        %v4128 = vadd.f32 %v3935, %v4127
        %4129 = vmatprep.mubr.bf16.mxu0 0
        %4130 = vmatmul.mubr.bf16.gmra.mrb[0].mxu0 %v3507
        %v4131 = vpop.f32.mrb[0].mxu0
        %v4132 = vadd.f32 %v3939, %v4131
        %v4133 = vpop.f32.mrb[0].mxu0
        %v4134 = vadd.f32 %v3941, %v4133
        %v4135 = vpop.f32.mrb[0].mxu0
        %v4136 = vadd.f32 %v3943, %v4135
        %v4137 = vpop.f32.mrb[0].mxu0
        %v4138 = vadd.f32 %v3945, %v4137
        %4139 = vmatprep.mubr.bf16.mxu0 0
        %4140 = vmatmul.mubr.bf16.gmra.mrb[0].mxu0 %v3510
        %v4141 = vpop.f32.mrb[0].mxu0
        %v4142 = vadd.f32 %v3949, %v4141
        %v4143 = vpop.f32.mrb[0].mxu0
        %v4144 = vadd.f32 %v3951, %v4143
        %v4145 = vpop.f32.mrb[0].mxu0
        %v4146 = vadd.f32 %v3953, %v4145
        %v4147 = vpop.f32.mrb[0].mxu0
        %v4148 = vadd.f32 %v3955, %v4147
        %4149 = vmatprep.mubr.bf16.mxu0 0
        %4150 = vmatmul.mubr.bf16.gmra.mrb[0].mxu0 %v3513
        %v4151 = vpop.f32.mrb[0].mxu0
        %v4152 = vadd.f32 %v3959, %v4151
        %v4153 = vpop.f32.mrb[0].mxu0
        %v4154 = vadd.f32 %v3961, %v4153
        %v4155 = vpop.f32.mrb[0].mxu0
        %v4156 = vadd.f32 %v3963, %v4155
        %v4157 = vpop.f32.mrb[0].mxu0
        %v4158 = vadd.f32 %v3965, %v4157
        %4159 = vmatprep.mubr.bf16.mxu0 0
        %4160 = vmatmul.mubr.bf16.gmra.mrb[0].mxu0 %v3516
        %v4161 = vpop.f32.mrb[0].mxu0
        %v4162 = vadd.f32 %v3969, %v4161
        %v4163 = vpop.f32.mrb[0].mxu0
        %v4164 = vadd.f32 %v3971, %v4163
        %v4165 = vpop.f32.mrb[0].mxu0
        %v4166 = vadd.f32 %v3973, %v4165
        %v4167 = vpop.f32.mrb[0].mxu0
        %v4168 = vadd.f32 %v3975, %v4167
        %4169 = vmatprep.mubr.bf16.mxu0 0
        %4170 = vmatmul.mubr.bf16.gmra.mrb[0].mxu0 %v3519
        %v4171 = vpop.f32.mrb[0].mxu0
        %v4172 = vadd.f32 %v3979, %v4171
        %v4173 = vpop.f32.mrb[0].mxu0
        %v4174 = vadd.f32 %v3981, %v4173
        %v4175 = vpop.f32.mrb[0].mxu0
        %v4176 = vadd.f32 %v3983, %v4175
        %v4177 = vpop.f32.mrb[0].mxu0
        %v4178 = vadd.f32 %v3985, %v4177
        %4179 = vmatprep.mubr.bf16.mxu0 0
        %4180 = vmatmul.mubr.bf16.gmra.mrb[0].mxu0 %v3522
        %v4181 = vpop.f32.mrb[0].mxu0
        %v4182 = vadd.f32 %v3989, %v4181
        %v4183 = vpop.f32.mrb[0].mxu0
        %v4184 = vadd.f32 %v3991, %v4183
        %v4185 = vpop.f32.mrb[0].mxu0
        %v4186 = vadd.f32 %v3993, %v4185
        %v4187 = vpop.f32.mrb[0].mxu0
        %v4188 = vadd.f32 %v3995, %v4187
        %4189 = vmatprep.mubr.bf16.mxu0 0
        %4190 = vmatmul.mubr.bf16.gmra.mrb[0].mxu0 %v3525
        %v4191 = vpop.f32.mrb[0].mxu0
        %v4192 = vadd.f32 %v3999, %v4191
        %v4193 = vpop.f32.mrb[0].mxu0
        %v4194 = vadd.f32 %v4001, %v4193
        %v4195 = vpop.f32.mrb[0].mxu0
        %v4196 = vadd.f32 %v4003, %v4195
        %v4197 = vpop.f32.mrb[0].mxu0
        %v4198 = vadd.f32 %v4005, %v4197
        %4199 = vdwg.mxu0
        %v4200 = vmul.f32 %v4042, 0.2
        %v4201 = vmul.f32 %v4044, 0.2
        %v4202 = vmul.f32 %v4046, 0.2
        %v4203 = vmul.f32 %v4048, 0.2
        %v4204 = vmul.f32 %v4052, 0.2
        %v4205 = vmul.f32 %v4054, 0.2
        %v4206 = vmul.f32 %v4056, 0.2
        %v4207 = vmul.f32 %v4058, 0.2
        %v4208 = vmul.f32 %v4062, 0.2
        %v4209 = vmul.f32 %v4064, 0.2
        %v4210 = vmul.f32 %v4066, 0.2
        %v4211 = vmul.f32 %v4068, 0.2
        %v4212 = vmul.f32 %v4072, 0.2
        %v4213 = vmul.f32 %v4074, 0.2
        %v4214 = vmul.f32 %v4076, 0.2
        %v4215 = vmul.f32 %v4078, 0.2
        %v4216 = vmul.f32 %v4082, 0.2
        %v4217 = vmul.f32 %v4084, 0.2
        %v4218 = vmul.f32 %v4086, 0.2
        %v4219 = vmul.f32 %v4088, 0.2
        %v4220 = vmul.f32 %v4092, 0.2
        %v4221 = vmul.f32 %v4094, 0.2
        %v4222 = vmul.f32 %v4096, 0.2
        %v4223 = vmul.f32 %v4098, 0.2
        %v4224 = vmul.f32 %v4102, 0.2
        %v4225 = vmul.f32 %v4104, 0.2
        %v4226 = vmul.f32 %v4106, 0.2
        %v4227 = vmul.f32 %v4108, 0.2
        %v4228 = vmul.f32 %v4112, 0.2
        %v4229 = vmul.f32 %v4114, 0.2
        %v4230 = vmul.f32 %v4116, 0.2
        %v4231 = vmul.f32 %v4118, 0.2
        %v4232 = vmul.f32 %v4122, 0.2
        %v4233 = vmul.f32 %v4124, 0.2
        %v4234 = vmul.f32 %v4126, 0.2
        %v4235 = vmul.f32 %v4128, 0.2
        %v4236 = vmul.f32 %v4132, 0.2
        %v4237 = vmul.f32 %v4134, 0.2
        %v4238 = vmul.f32 %v4136, 0.2
        %v4239 = vmul.f32 %v4138, 0.2
        %v4240 = vmul.f32 %v4142, 0.2
        %v4241 = vmul.f32 %v4144, 0.2
        %v4242 = vmul.f32 %v4146, 0.2
        %v4243 = vmul.f32 %v4148, 0.2
        %v4244 = vmul.f32 %v4152, 0.2
        %v4245 = vmul.f32 %v4154, 0.2
        %v4246 = vmul.f32 %v4156, 0.2
        %v4247 = vmul.f32 %v4158, 0.2
        %v4248 = vmul.f32 %v4162, 0.2
        %v4249 = vmul.f32 %v4164, 0.2
        %v4250 = vmul.f32 %v4166, 0.2
        %v4251 = vmul.f32 %v4168, 0.2
        %v4252 = vmul.f32 %v4172, 0.2
        %v4253 = vmul.f32 %v4174, 0.2
        %v4254 = vmul.f32 %v4176, 0.2
        %v4255 = vmul.f32 %v4178, 0.2
        %v4256 = vmul.f32 %v4182, 0.2
        %v4257 = vmul.f32 %v4184, 0.2
        %v4258 = vmul.f32 %v4186, 0.2
        %v4259 = vmul.f32 %v4188, 0.2
        %v4260 = vmul.f32 %v4192, 0.2
        %v4261 = vmul.f32 %v4194, 0.2
        %v4262 = vmul.f32 %v4196, 0.2
        %v4263 = vmul.f32 %v4198, 0.2
        %v4264 = vmax.f32 %v4042, %v4200
        %v4265 = vmax.f32 %v4044, %v4201
        %v4266 = vmax.f32 %v4046, %v4202
        %v4267 = vmax.f32 %v4048, %v4203
        %v4268 = vmax.f32 %v4052, %v4204
        %v4269 = vmax.f32 %v4054, %v4205
        %v4270 = vmax.f32 %v4056, %v4206
        %v4271 = vmax.f32 %v4058, %v4207
        %v4272 = vmax.f32 %v4062, %v4208
        %v4273 = vmax.f32 %v4064, %v4209
        %v4274 = vmax.f32 %v4066, %v4210
        %v4275 = vmax.f32 %v4068, %v4211
        %v4276 = vmax.f32 %v4072, %v4212
        %v4277 = vmax.f32 %v4074, %v4213
        %v4278 = vmax.f32 %v4076, %v4214
        %v4279 = vmax.f32 %v4078, %v4215
        %v4280 = vmax.f32 %v4082, %v4216
        %v4281 = vmax.f32 %v4084, %v4217
        %v4282 = vmax.f32 %v4086, %v4218
        %v4283 = vmax.f32 %v4088, %v4219
        %v4284 = vmax.f32 %v4092, %v4220
        %v4285 = vmax.f32 %v4094, %v4221
        %v4286 = vmax.f32 %v4096, %v4222
        %v4287 = vmax.f32 %v4098, %v4223
        %v4288 = vmax.f32 %v4102, %v4224
        %v4289 = vmax.f32 %v4104, %v4225
        %v4290 = vmax.f32 %v4106, %v4226
        %v4291 = vmax.f32 %v4108, %v4227
        %v4292 = vmax.f32 %v4112, %v4228
        %v4293 = vmax.f32 %v4114, %v4229
        %v4294 = vmax.f32 %v4116, %v4230
        %v4295 = vmax.f32 %v4118, %v4231
        %v4296 = vmax.f32 %v4122, %v4232
        %v4297 = vmax.f32 %v4124, %v4233
        %v4298 = vmax.f32 %v4126, %v4234
        %v4299 = vmax.f32 %v4128, %v4235
        %v4300 = vmax.f32 %v4132, %v4236
        %v4301 = vmax.f32 %v4134, %v4237
        %v4302 = vmax.f32 %v4136, %v4238
        %v4303 = vmax.f32 %v4138, %v4239
        %v4304 = vmax.f32 %v4142, %v4240
        %v4305 = vmax.f32 %v4144, %v4241
        %v4306 = vmax.f32 %v4146, %v4242
        %v4307 = vmax.f32 %v4148, %v4243
        %v4308 = vmax.f32 %v4152, %v4244
        %v4309 = vmax.f32 %v4154, %v4245
        %v4310 = vmax.f32 %v4156, %v4246
        %v4311 = vmax.f32 %v4158, %v4247
        %v4312 = vmax.f32 %v4162, %v4248
        %v4313 = vmax.f32 %v4164, %v4249
        %v4314 = vmax.f32 %v4166, %v4250
        %v4315 = vmax.f32 %v4168, %v4251
        %v4316 = vmax.f32 %v4172, %v4252
        %v4317 = vmax.f32 %v4174, %v4253
        %v4318 = vmax.f32 %v4176, %v4254
        %v4319 = vmax.f32 %v4178, %v4255
        %v4320 = vmax.f32 %v4182, %v4256
        %v4321 = vmax.f32 %v4184, %v4257
        %v4322 = vmax.f32 %v4186, %v4258
        %v4323 = vmax.f32 %v4188, %v4259
        %v4324 = vmax.f32 %v4192, %v4260
        %v4325 = vmax.f32 %v4194, %v4261
        %v4326 = vmax.f32 %v4196, %v4262
        %v4327 = vmax.f32 %v4198, %v4263
        %4328 = vst [vmem:[%s198] sm:$0xff] %v4264
        %4329 = vst [vmem:[%s198 + $0x8] sm:$0xff] %v4265
        %4330 = vst [vmem:[%s198 + $0x10] sm:$0xff] %v4266
        %4331 = vst [vmem:[%s198 + $0x18] sm:$0xff] %v4267
        %4332 = vst [vmem:[%s198 + $0x20] sm:$0xff] %v4268
        %4333 = vst [vmem:[%s198 + $0x28] sm:$0xff] %v4269
        %4334 = vst [vmem:[%s198 + $0x30] sm:$0xff] %v4270
        %4335 = vst [vmem:[%s198 + $0x38] sm:$0xff] %v4271
        %4336 = vst [vmem:[%s198 + $0x40] sm:$0xff] %v4272
        %4337 = vst [vmem:[%s198 + $0x48] sm:$0xff] %v4273
        %4338 = vst [vmem:[%s198 + $0x50] sm:$0xff] %v4274
        %4339 = vst [vmem:[%s198 + $0x58] sm:$0xff] %v4275
        %4340 = vst [vmem:[%s198 + $0x60] sm:$0xff] %v4276
        %4341 = vst [vmem:[%s198 + $0x68] sm:$0xff] %v4277
        %4342 = vst [vmem:[%s198 + $0x70] sm:$0xff] %v4278
        %4343 = vst [vmem:[%s198 + $0x78] sm:$0xff] %v4279
        %4344 = vst [vmem:[%s198 + $0x80] sm:$0xff] %v4280
        %4345 = vst [vmem:[%s198 + $0x88] sm:$0xff] %v4281
        %4346 = vst [vmem:[%s198 + $0x90] sm:$0xff] %v4282
        %4347 = vst [vmem:[%s198 + $0x98] sm:$0xff] %v4283
        %4348 = vst [vmem:[%s198 + $0xa0] sm:$0xff] %v4284
        %4349 = vst [vmem:[%s198 + $0xa8] sm:$0xff] %v4285
        %4350 = vst [vmem:[%s198 + $0xb0] sm:$0xff] %v4286
        %4351 = vst [vmem:[%s198 + $0xb8] sm:$0xff] %v4287
        %4352 = vst [vmem:[%s198 + $0xc0] sm:$0xff] %v4288
        %4353 = vst [vmem:[%s198 + $0xc8] sm:$0xff] %v4289
        %4354 = vst [vmem:[%s198 + $0xd0] sm:$0xff] %v4290
        %4355 = vst [vmem:[%s198 + $0xd8] sm:$0xff] %v4291
        %4356 = vst [vmem:[%s198 + $0xe0] sm:$0xff] %v4292
        %4357 = vst [vmem:[%s198 + $0xe8] sm:$0xff] %v4293
        %4358 = vst [vmem:[%s198 + $0xf0] sm:$0xff] %v4294
        %4359 = vst [vmem:[%s198 + $0xf8] sm:$0xff] %v4295
        %4360 = vst [vmem:[%s198 + $0x100] sm:$0xff] %v4296
        %4361 = vst [vmem:[%s198 + $0x108] sm:$0xff] %v4297
        %4362 = vst [vmem:[%s198 + $0x110] sm:$0xff] %v4298
        %4363 = vst [vmem:[%s198 + $0x118] sm:$0xff] %v4299
        %4364 = vst [vmem:[%s198 + $0x120] sm:$0xff] %v4300
        %4365 = vst [vmem:[%s198 + $0x128] sm:$0xff] %v4301
        %4366 = vst [vmem:[%s198 + $0x130] sm:$0xff] %v4302
        %4367 = vst [vmem:[%s198 + $0x138] sm:$0xff] %v4303
        %4368 = vst [vmem:[%s198 + $0x140] sm:$0xff] %v4304
        %4369 = vst [vmem:[%s198 + $0x148] sm:$0xff] %v4305
        %4370 = vst [vmem:[%s198 + $0x150] sm:$0xff] %v4306
        %4371 = vst [vmem:[%s198 + $0x158] sm:$0xff] %v4307
        %4372 = vst [vmem:[%s198 + $0x160] sm:$0xff] %v4308
        %4373 = vst [vmem:[%s198 + $0x168] sm:$0xff] %v4309
        %4374 = vst [vmem:[%s198 + $0x170] sm:$0xff] %v4310
        %4375 = vst [vmem:[%s198 + $0x178] sm:$0xff] %v4311
        %4376 = vst [vmem:[%s198 + $0x180] sm:$0xff] %v4312
        %4377 = vst [vmem:[%s198 + $0x188] sm:$0xff] %v4313
        %4378 = vst [vmem:[%s198 + $0x190] sm:$0xff] %v4314
        %4379 = vst [vmem:[%s198 + $0x198] sm:$0xff] %v4315
        %4380 = vst [vmem:[%s198 + $0x1a0] sm:$0xff] %v4316
        %4381 = vst [vmem:[%s198 + $0x1a8] sm:$0xff] %v4317
        %4382 = vst [vmem:[%s198 + $0x1b0] sm:$0xff] %v4318
        %4383 = vst [vmem:[%s198 + $0x1b8] sm:$0xff] %v4319
        %4384 = vst [vmem:[%s198 + $0x1c0] sm:$0xff] %v4320
        %4385 = vst [vmem:[%s198 + $0x1c8] sm:$0xff] %v4321
        %4386 = vst [vmem:[%s198 + $0x1d0] sm:$0xff] %v4322
        %4387 = vst [vmem:[%s198 + $0x1d8] sm:$0xff] %v4323
        %4388 = vst [vmem:[%s198 + $0x1e0] sm:$0xff] %v4324
        %4389 = vst [vmem:[%s198 + $0x1e8] sm:$0xff] %v4325
        %4390 = vst [vmem:[%s198 + $0x1f0] sm:$0xff] %v4326
        %4391 = vst [vmem:[%s198 + $0x1f8] sm:$0xff] %v4327
        %s4392 = sand.u32 %s94, 1
        %s4393 = scalar_lea.sflag [#allocation6], %s4392
        %s4394 = sand.u32 %s94, 1
        %s4395 = smul.addr %s4394, 512
        %s4396 = scalar_lea.vmem [#allocation9], %s4395
        // Predicated region
        $region41: #{conv_block_forward_nhwc.1} parent=27 // pred_check
          %p4397 = pneg %p104
        $region42: #{conv_block_forward_nhwc.1} parent=27 // pred_check_branch
          %4399 = sbr.rel (%p4397) target = $region44
        $region43: #{conv_block_forward_nhwc.1} parent=27 // pred_region
          %s4400 = smul.u32 2, %s25
          %s4402 = ssub.s32 8192, 8192
          %4403 = vsyncadd %s4393, %s4402
          %s4404 = smul.addr %s24, 64
          %s4405 = sadd.s32 %s4400, %s4404
          %s4406 = smul.addr %s4405, 128
          %s4407 = scalar_lea.hbm %s2, %s4406
          %s4408 = sshll.u32 %s4396, 4
          %s4409 = int_to_ptr.vmem [resolvable:$true] %s4408
          %4414 = dma.vmem_to_hbm [thread:$0]  %s4409, 8192, %s4407, %s4393, 256, 256, 16
        $region44: #{conv_block_forward_nhwc.1} parent=27 // pred_fallthru
          _
      $region28: #{conv_block_forward_nhwc.1} parent=5 // pred_fallthru
        _
      %p4415 = scmp.le.s32.totalorder 2, %s15
      // Predicated region
      $region45: #{conv_block_forward_nhwc.1} parent=5 // pred_check
        %p4416 = pneg %p4415
      $region46: #{conv_block_forward_nhwc.1} parent=5 // pred_check_branch
        %4418 = sbr.rel (%p4416) target = $region48
      $region47: #{conv_block_forward_nhwc.1} parent=5 // pred_region
        %s4419 = ssub.s32 %s15, 2
        // Predicated region
        $region49: #{conv_block_forward_nhwc.1} parent=47 // pred_check
          %p4420 = pneg %p110
        $region50: #{conv_block_forward_nhwc.1} parent=47 // pred_check_branch
          %4422 = sbr.rel (%p4420) target = $region52
        $region51: #{conv_block_forward_nhwc.1} parent=47 // pred_region
          %s4423 = sand.u32 %s95, 1
          %s4424 = scalar_lea.sflag [#allocation6], %s4423
          %s4425 = sand.u32 %s95, 1
          %s4426 = smul.addr %s4425, 512
          %s4427 = scalar_lea.vmem [#allocation9], %s4426
          %4428 = dma.done %s4424, 8192
        $region52: #{conv_block_forward_nhwc.1} parent=47 // pred_fallthru
          _
      $region48: #{conv_block_forward_nhwc.1} parent=5 // pred_fallthru
        _
    $region6: #{conv_block_forward_nhwc.1} parent=1 // loop_footer
      %s19 = sadd.s32 1, %s15
    $region7: #{conv_block_forward_nhwc.1} parent=1 // loop_footer_branch
      %14 = sbr.rel target = $region3
    $region8: #{conv_block_forward_nhwc.1} parent=1 // loop_exit
      _
    %4429 = vsyncpa [#allocation5], 1
    %s4430 = scalar_lea.sflag [#allocation5], 1
    %4431 = vsyncpa %s4430, 1
    %4432 = vsyncpa [#allocation8], 1
    %4433 = vsyncpa [#allocation6], 1
    %s4434 = scalar_lea.sflag [#allocation6], 1
    %4435 = vsyncpa %s4434, 1

</llo_original>
